<compile_context>
chip_gen: v7x
topology: tpu7x:2x2x1
jax: 0.10.0
libtpu: 0.0.40
codegen_flags: <defaults>
</compile_context>

<pallas_src>
import functools

import jax
import jax.numpy as jnp
from jax.experimental import pallas as pl
from jax.experimental.pallas import tpu as pltpu

BN_EPS = 1e-5
LANE = 128                     # TPU lane width; channel dims are padded to this
COMPUTE_DTYPE = jnp.bfloat16   # MXU operand dtype (accumulation stays float32)


def _round_up(v, m):
    return ((v + m - 1) // m) * m


# ----------------------------- fused block kernel ----------------------------


def _fused_block_kernel(x_ref, wa_ref, a_s_ref, a_b_ref,
                        wb_ref, b_s_ref, b_b_ref, *rest,
                        Ho, Wo, stride, has_proj, clamp_min):
    """One BasicTransform ResBlock, fully fused in VMEM.

    conv3x3(stride)+BN+ReLU -> conv3x3+BN [-> 1x1 proj+BN] -> add -> clamp(min).
    The intermediate activation never leaves VMEM.
    """
    idx = 0
    if has_proj:
        wp_ref, p_s_ref, p_b_ref = rest[idx:idx + 3]
        idx += 3
    out_ref = rest[idx]
    idx += 1
    if stride == 1:
        xpad_ref = rest[idx]
        idx += 1
    hpad_ref = rest[idx]

    cin = wa_ref.shape[0] // 9
    cout = wa_ref.shape[1]
    M = Ho * Wo

    # ---- im2col taps of conv_a, directly at output resolution ---------------
    if stride == 1:
        x_val = x_ref[0]                                   # (H, W, Cin)
        xpad_ref[...] = jnp.zeros_like(xpad_ref)           # zero halo (in VMEM)
        xpad_ref[pl.ds(1, Ho), pl.ds(1, Wo), :] = x_val
        xp = xpad_ref[...]                                 # (Ho+2, Wo+2, Cin)
        taps_a = [xp[kh:kh + Ho, kw:kw + Wo, :].reshape(M, cin)
                  for kh in range(3) for kw in range(3)]
    else:
        # Space-to-depth input: plane p = (kh % 2) * 2 + (kw % 2) holds
        # padded_x[2r + kh % 2, 2c + kw % 2], so every tap of the stride-2 conv
        # is a contiguous shifted window of a phase plane (no strided access,
        # no redundant full-resolution compute).
        xs = x_ref[0]                                      # (4, Ho+1, Wo+1, Cin)
        taps_a = []
        for kh in range(3):
            ph, qh = kh % 2, kh // 2
            for kw in range(3):
                pw, qw = kw % 2, kw // 2
                plane = xs[ph * 2 + pw]
                taps_a.append(plane[qh:qh + Ho, qw:qw + Wo, :].reshape(M, cin))

    patches_a = jnp.concatenate(taps_a, axis=1).astype(COMPUTE_DTYPE)  # (M, 9*Cin)

    # ---- conv_a as one MXU dot + folded BN + ReLU (f32 epilogue) ------------
    h = jnp.dot(patches_a, wa_ref[...], preferred_element_type=jnp.float32)
    h = jnp.maximum(h * a_s_ref[...] + a_b_ref[...], 0.0)             # (M, Cout)

    # ---- conv_b taps from a zero-haloed VMEM copy of h ----------------------
    hpad_ref[...] = jnp.zeros_like(hpad_ref)
    hpad_ref[pl.ds(1, Ho), pl.ds(1, Wo), :] = h.reshape(Ho, Wo, cout)
    hp = hpad_ref[...]                                     # (Ho+2, Wo+2, Cout)
    taps_b = [hp[kh:kh + Ho, kw:kw + Wo, :].reshape(M, cout)
              for kh in range(3) for kw in range(3)]
    patches_b = jnp.concatenate(taps_b, axis=1).astype(COMPUTE_DTYPE)  # (M, 9*Cout)

    y = jnp.dot(patches_b, wb_ref[...], preferred_element_type=jnp.float32)
    y = y * b_s_ref[...] + b_b_ref[...]

    # ---- identity / fused 1x1 projection shortcut ---------------------------
    if has_proj:
        if stride == 1:
            xi = x_val.reshape(M, cin)
        else:
            xi = xs[3, 0:Ho, 0:Wo, :].reshape(M, cin)      # x[2i, 2j] samples
        ident = jnp.dot(xi.astype(COMPUTE_DTYPE), wp_ref[...],
                        preferred_element_type=jnp.float32)
        ident = ident * p_s_ref[...] + p_b_ref[...]
    else:
        ident = x_val.reshape(M, cout).astype(jnp.float32)  # Cin == Cout here

    y = jnp.maximum(y + ident, clamp_min)                   # relup(alpha) == clamp(min)
    out_ref[...] = y.reshape(1, Ho, Wo, cout).astype(out_ref.dtype)


# --------------------------------- wrappers ----------------------------------


def _bcast_spec(shape):
    return pl.BlockSpec(shape, lambda n: (0,) * len(shape))


def _space_to_depth2(x):
    """(N, H, W, C) -> (N, 4, Ho+1, Wo+1, C): zero halo + 2x2 phase split.

    One fused XLA pass over x; replaces the per-conv jnp.pad of the previous
    version and lets the kernel do the stride-2 conv with contiguous accesses.
    """
    N, H, W, C = x.shape
    Ho = (H - 1) // 2 + 1
    Wo = (W - 1) // 2 + 1
    hp2, wp2 = 2 * (Ho + 1), 2 * (Wo + 1)
    xp = jnp.pad(x, ((0, 0), (1, hp2 - H - 1), (1, wp2 - W - 1), (0, 0)))
    xp = xp.reshape(N, Ho + 1, 2, Wo + 1, 2, C)
    xp = jnp.transpose(xp, (0, 2, 4, 1, 3, 5))              # (N, 2, 2, Ho+1, Wo+1, C)
    return xp.reshape(N, 4, Ho + 1, Wo + 1, C)


def fused_basic_block(x, bp, stride, clamp_min=0.0):
    """x: (N, H, W, Cp) NHWC, channels lane-padded. Returns (N, Ho, Wo, Cout_p)."""
    N, H, W, cin_p = x.shape
    cout_p = bp['wa'].shape[1]
    Ho = (H - 1) // stride + 1
    Wo = (W - 1) // stride + 1
    has_proj = 'wp' in bp
    assert stride == 1 or has_proj, "stride > 1 always uses a projection shortcut"

    scratch = []
    if stride == 1:
        xin = x
        x_spec = pl.BlockSpec((1, H, W, cin_p), lambda n: (n, 0, 0, 0))
        scratch.append(pltpu.VMEM((H + 2, W + 2, cin_p), x.dtype))
    elif stride == 2:
        xin = _space_to_depth2(x)
        x_spec = pl.BlockSpec((1, 4, Ho + 1, Wo + 1, cin_p),
                              lambda n: (n, 0, 0, 0, 0))
    else:
        raise NotImplementedError("only stride 1 and 2 are supported")
    scratch.append(pltpu.VMEM((Ho + 2, Wo + 2, cout_p), jnp.float32))

    args = [xin, bp['wa'], bp['a_scale'], bp['a_bias'],
            bp['wb'], bp['b_scale'], bp['b_bias']]
    if has_proj:
        args += [bp['wp'], bp['p_scale'], bp['p_bias']]
    in_specs = [x_spec] + [_bcast_spec(a.shape) for a in args[1:]]

    kern = functools.partial(_fused_block_kernel, Ho=Ho, Wo=Wo, stride=stride,
                             has_proj=has_proj, clamp_min=clamp_min)
    return pl.pallas_call(
        kern,
        out_shape=jax.ShapeDtypeStruct((N, Ho, Wo, cout_p), x.dtype),
        grid=(N,),
        in_specs=in_specs,
        out_specs=pl.BlockSpec((1, Ho, Wo, cout_p), lambda n: (n, 0, 0, 0)),
        scratch_shapes=scratch,
        compiler_params=pltpu.CompilerParams(dimension_semantics=("parallel",)),
    )(*args)


# ------------------------- parameters & stage forward ------------------------


def _bn_fold(gamma, beta, mean, var):
    scale = gamma / jnp.sqrt(var + BN_EPS)
    return scale.astype(jnp.float32), (beta - mean * scale).astype(jnp.float32)


def init_res_stage_params(key, w_in, w_out, stride, d):
    """Deterministic synthetic parameters matching the module's shapes."""
    params = []
    for i in range(d):
        b_w_in = w_in if i == 0 else w_out
        b_stride = stride if i == 0 else 1
        ks = jax.random.split(jax.random.fold_in(key, i), 15)
        blk = {}
        # BasicTransform: conv a (3x3, stride), BN a, ReLU, conv b (3x3), BN b
        blk['a_w'] = 0.1 * jax.random.normal(ks[0], (3, 3, b_w_in, w_out), jnp.float32)
        blk['a_scale'], blk['a_bias'] = _bn_fold(
            1.0 + 0.1 * jax.random.normal(ks[1], (w_out,)),
            0.05 * jax.random.normal(ks[2], (w_out,)),
            0.05 * jax.random.normal(ks[3], (w_out,)),
            0.5 + jax.random.uniform(ks[4], (w_out,)))
        blk['b_w'] = 0.1 * jax.random.normal(ks[5], (3, 3, w_out, w_out), jnp.float32)
        blk['b_scale'], blk['b_bias'] = _bn_fold(
            1.0 + 0.1 * jax.random.normal(ks[6], (w_out,)),
            0.05 * jax.random.normal(ks[7], (w_out,)),
            0.05 * jax.random.normal(ks[8], (w_out,)),
            0.5 + jax.random.uniform(ks[9], (w_out,)))
        # projection shortcut (1x1 conv + BN) when shapes change
        if b_w_in != w_out or b_stride != 1:
            blk['proj_w'] = 0.1 * jax.random.normal(ks[10], (b_w_in, w_out), jnp.float32)
            blk['proj_scale'], blk['proj_bias'] = _bn_fold(
                1.0 + 0.1 * jax.random.normal(ks[11], (w_out,)),
                0.05 * jax.random.normal(ks[12], (w_out,)),
                0.05 * jax.random.normal(ks[13], (w_out,)),
                0.5 + jax.random.uniform(ks[14], (w_out,)))
        params.append(blk)
    return params


def _pad_flatten_w3(w, cin_p, cout_p):
    """(3, 3, ci, co) -> lane-padded im2col weight (9*cin_p, cout_p) in bf16."""
    _, _, ci, co = w.shape
    w = jnp.pad(w, ((0, 0), (0, 0), (0, cin_p - ci), (0, cout_p - co)))
    return w.reshape(9 * cin_p, cout_p).astype(COMPUTE_DTYPE)


def _pad_vec(v, cp):
    return jnp.pad(v, (0, cp - v.shape[0])).reshape(1, cp).astype(jnp.float32)


def prepare_stage_params(params, w_in, w_out):
    """Lane-pad channels, flatten 3x3 weights for im2col, cast MXU operands."""
    cin_p = _round_up(w_in, LANE)
    cout_p = _round_up(w_out, LANE)
    prepped = []
    for i, blk in enumerate(params):
        b_cin_p = cin_p if i == 0 else cout_p
        p = {'wa': _pad_flatten_w3(blk['a_w'], b_cin_p, cout_p),
             'a_scale': _pad_vec(blk['a_scale'], cout_p),
             'a_bias': _pad_vec(blk['a_bias'], cout_p),
             'wb': _pad_flatten_w3(blk['b_w'], cout_p, cout_p),
             'b_scale': _pad_vec(blk['b_scale'], cout_p),
             'b_bias': _pad_vec(blk['b_bias'], cout_p)}
        if 'proj_w' in blk:
            pw = blk['proj_w']
            p['wp'] = jnp.pad(pw, ((0, b_cin_p - pw.shape[0]),
                                   (0, cout_p - pw.shape[1]))).astype(COMPUTE_DTYPE)
            p['p_scale'] = _pad_vec(blk['proj_scale'], cout_p)
            p['p_bias'] = _pad_vec(blk['proj_bias'], cout_p)
        prepped.append(p)
    return prepped, cin_p, cout_p


def res_stage_basetransform_forward(x_nchw, params, stride):
    """ResStage of BasicTransform blocks; NCHW in / out (PyTorch convention)."""
    N, w_in, H, W = x_nchw.shape
    w_out = params[0]['a_w'].shape[-1]
    prepped, cin_p, cout_p = prepare_stage_params(params, w_in, w_out)

    x = jnp.transpose(x_nchw, (0, 2, 3, 1))                       # NCHW -> NHWC
    x = jnp.pad(x, ((0, 0), (0, 0), (0, 0), (0, cin_p - w_in)))   # lane-pad channels once
    for i, bp in enumerate(prepped):
        s = stride if i == 0 else 1
        # ResBlock epilogue: relup(alpha).clamp(min=alpha); alpha = 0.0 here
        # (relup_ defaults to False; the w_out == 2048 path is also clamp(0)).
        x = fused_basic_block(x, bp, s, clamp_min=0.0)
    x = x[..., :w_out]                                            # drop channel padding
    return jnp.transpose(x, (0, 3, 1, 2))                         # NHWC -> NCHW


# ------------------------------ pure-JAX reference ----------------------------


def _ref_forward(x_nchw, params, stride):
    def conv(inp, w_hwio, s, pad):
        return jax.lax.conv_general_dilated(
            inp, w_hwio, (s, s), [(pad, pad), (pad, pad)],
            dimension_numbers=('NCHW', 'HWIO', 'NCHW'))

    x = x_nchw.astype(jnp.float32)
    for i, blk in enumerate(params):
        s = stride if i == 0 else 1
        a = conv(x, blk['a_w'], s, 1)
        a = a * blk['a_scale'][None, :, None, None] + blk['a_bias'][None, :, None, None]
        a = jnp.maximum(a, 0.0)
        b = conv(a, blk['b_w'], 1, 1)
        b = b * blk['b_scale'][None, :, None, None] + blk['b_bias'][None, :, None, None]
        if 'proj_w' in blk:
            ident = conv(x, blk['proj_w'][None, None], s, 0)
            ident = (ident * blk['proj_scale'][None, :, None, None]
                     + blk['proj_bias'][None, :, None, None])
        else:
            ident = x
        x = jnp.maximum(ident + b, 0.0)
    return x


# ------------------------------------ main ------------------------------------


if __name__ == "__main__":
    key = jax.random.PRNGKey(0)
    N, w_in, w_out, H, W = 2, 4, 8, 16, 16
    stride, d = 2, 2

    kx, kp = jax.random.split(key)
    x = jax.random.normal(kx, (N, w_in, H, W), jnp.float32)        # NCHW like PyTorch
    params = init_res_stage_params(kp, w_in, w_out, stride, d)

    fwd = jax.jit(res_stage_basetransform_forward, static_argnums=2)
    out = jax.block_until_ready(fwd(x, params, stride))

    assert out.shape == (N, w_out, H // stride, W // stride), out.shape
    ref = _ref_forward(x, params, stride)
    # bf16 MXU operands (f32 accumulate) vs. a pure f32 reference -> loose tol.
    assert jnp.allclose(out, ref, rtol=5e-2, atol=5e-2), \
        float(jnp.max(jnp.abs(out - ref)))

    print("KERNEL_OK")
</pallas_src>

<mosaic_0001>
module attributes {stable_mosaic.version = 11 : i64} {
  func.func @_fused_block_kernel(%arg0: i32, %arg1: memref<1x4x9x9x128xf32, #tpu.memory_space<vmem>>, %arg2: memref<1152x128xbf16, #tpu.memory_space<vmem>>, %arg3: memref<1x128xf32, #tpu.memory_space<vmem>>, %arg4: memref<1x128xf32, #tpu.memory_space<vmem>>, %arg5: memref<1152x128xbf16, #tpu.memory_space<vmem>>, %arg6: memref<1x128xf32, #tpu.memory_space<vmem>>, %arg7: memref<1x128xf32, #tpu.memory_space<vmem>>, %arg8: memref<128x128xbf16, #tpu.memory_space<vmem>>, %arg9: memref<1x128xf32, #tpu.memory_space<vmem>>, %arg10: memref<1x128xf32, #tpu.memory_space<vmem>>, %arg11: memref<1x8x8x128xf32, #tpu.memory_space<vmem>>, %arg12: memref<10x10x128xf32, #tpu.memory_space<vmem>>) attributes {dimension_semantics = [#tpu.dimension_semantics<parallel>], iteration_bounds = array<i64: 2>, scalar_prefetch = 0 : i64, scratch_operands = 1 : i64, tpu.core_type = #tpu.core_type<tc>, window_params = [{transform_indices = @transform_0, window_bounds = array<i64: 1, 4, 9, 9, 128>}, {pipeline_mode = #tpu.pipeline_mode<synchronous>, transform_indices = @transform_1, window_bounds = array<i64: 1152, 128>}, {pipeline_mode = #tpu.pipeline_mode<synchronous>, transform_indices = @transform_2, window_bounds = array<i64: 1, 128>}, {pipeline_mode = #tpu.pipeline_mode<synchronous>, transform_indices = @transform_3, window_bounds = array<i64: 1, 128>}, {pipeline_mode = #tpu.pipeline_mode<synchronous>, transform_indices = @transform_4, window_bounds = array<i64: 1152, 128>}, {pipeline_mode = #tpu.pipeline_mode<synchronous>, transform_indices = @transform_5, window_bounds = array<i64: 1, 128>}, {pipeline_mode = #tpu.pipeline_mode<synchronous>, transform_indices = @transform_6, window_bounds = array<i64: 1, 128>}, {pipeline_mode = #tpu.pipeline_mode<synchronous>, transform_indices = @transform_7, window_bounds = array<i64: 128, 128>}, {pipeline_mode = #tpu.pipeline_mode<synchronous>, transform_indices = @transform_8, window_bounds = array<i64: 1, 128>}, {pipeline_mode = #tpu.pipeline_mode<synchronous>, transform_indices = @transform_9, window_bounds = array<i64: 1, 128>}, {transform_indices = @transform_10, window_bounds = array<i64: 1, 8, 8, 128>}]} {
    %c0 = arith.constant 0 : index
    %c0_0 = arith.constant 0 : index
    %c0_1 = arith.constant 0 : index
    %c0_2 = arith.constant 0 : index
    %c0_3 = arith.constant 0 : index
    %0 = vector.load %arg1[%c0, %c0_0, %c0_1, %c0_2, %c0_3] : memref<1x4x9x9x128xf32, #tpu.memory_space<vmem>>, vector<1x4x9x9x128xf32>
    %1 = vector.shape_cast %0 : vector<1x4x9x9x128xf32> to vector<4x9x9x128xf32>
    %2 = vector.extract_strided_slice %1 {offsets = [0, 0, 0, 0], sizes = [1, 9, 9, 128], strides = [1, 1, 1, 1]} : vector<4x9x9x128xf32> to vector<1x9x9x128xf32>
    %3 = vector.shape_cast %2 : vector<1x9x9x128xf32> to vector<9x9x128xf32>
    %4 = vector.extract_strided_slice %3 {offsets = [0, 0, 0], sizes = [8, 8, 128], strides = [1, 1, 1]} : vector<9x9x128xf32> to vector<8x8x128xf32>
    %5 = vector.shape_cast %4 : vector<8x8x128xf32> to vector<64x128xf32>
    %6 = vector.extract_strided_slice %1 {offsets = [1, 0, 0, 0], sizes = [1, 9, 9, 128], strides = [1, 1, 1, 1]} : vector<4x9x9x128xf32> to vector<1x9x9x128xf32>
    %7 = vector.shape_cast %6 : vector<1x9x9x128xf32> to vector<9x9x128xf32>
    %8 = vector.extract_strided_slice %7 {offsets = [0, 0, 0], sizes = [8, 8, 128], strides = [1, 1, 1]} : vector<9x9x128xf32> to vector<8x8x128xf32>
    %9 = vector.shape_cast %8 : vector<8x8x128xf32> to vector<64x128xf32>
    %10 = vector.extract_strided_slice %1 {offsets = [0, 0, 0, 0], sizes = [1, 9, 9, 128], strides = [1, 1, 1, 1]} : vector<4x9x9x128xf32> to vector<1x9x9x128xf32>
    %11 = vector.shape_cast %10 : vector<1x9x9x128xf32> to vector<9x9x128xf32>
    %12 = vector.extract_strided_slice %11 {offsets = [0, 1, 0], sizes = [8, 8, 128], strides = [1, 1, 1]} : vector<9x9x128xf32> to vector<8x8x128xf32>
    %13 = vector.shape_cast %12 : vector<8x8x128xf32> to vector<64x128xf32>
    %14 = vector.extract_strided_slice %1 {offsets = [2, 0, 0, 0], sizes = [1, 9, 9, 128], strides = [1, 1, 1, 1]} : vector<4x9x9x128xf32> to vector<1x9x9x128xf32>
    %15 = vector.shape_cast %14 : vector<1x9x9x128xf32> to vector<9x9x128xf32>
    %16 = vector.extract_strided_slice %15 {offsets = [0, 0, 0], sizes = [8, 8, 128], strides = [1, 1, 1]} : vector<9x9x128xf32> to vector<8x8x128xf32>
    %17 = vector.shape_cast %16 : vector<8x8x128xf32> to vector<64x128xf32>
    %18 = vector.extract_strided_slice %1 {offsets = [3, 0, 0, 0], sizes = [1, 9, 9, 128], strides = [1, 1, 1, 1]} : vector<4x9x9x128xf32> to vector<1x9x9x128xf32>
    %19 = vector.shape_cast %18 : vector<1x9x9x128xf32> to vector<9x9x128xf32>
    %20 = vector.extract_strided_slice %19 {offsets = [0, 0, 0], sizes = [8, 8, 128], strides = [1, 1, 1]} : vector<9x9x128xf32> to vector<8x8x128xf32>
    %21 = vector.shape_cast %20 : vector<8x8x128xf32> to vector<64x128xf32>
    %22 = vector.extract_strided_slice %1 {offsets = [2, 0, 0, 0], sizes = [1, 9, 9, 128], strides = [1, 1, 1, 1]} : vector<4x9x9x128xf32> to vector<1x9x9x128xf32>
    %23 = vector.shape_cast %22 : vector<1x9x9x128xf32> to vector<9x9x128xf32>
    %24 = vector.extract_strided_slice %23 {offsets = [0, 1, 0], sizes = [8, 8, 128], strides = [1, 1, 1]} : vector<9x9x128xf32> to vector<8x8x128xf32>
    %25 = vector.shape_cast %24 : vector<8x8x128xf32> to vector<64x128xf32>
    %26 = vector.extract_strided_slice %1 {offsets = [0, 0, 0, 0], sizes = [1, 9, 9, 128], strides = [1, 1, 1, 1]} : vector<4x9x9x128xf32> to vector<1x9x9x128xf32>
    %27 = vector.shape_cast %26 : vector<1x9x9x128xf32> to vector<9x9x128xf32>
    %28 = vector.extract_strided_slice %27 {offsets = [1, 0, 0], sizes = [8, 8, 128], strides = [1, 1, 1]} : vector<9x9x128xf32> to vector<8x8x128xf32>
    %29 = vector.shape_cast %28 : vector<8x8x128xf32> to vector<64x128xf32>
    %30 = vector.extract_strided_slice %1 {offsets = [1, 0, 0, 0], sizes = [1, 9, 9, 128], strides = [1, 1, 1, 1]} : vector<4x9x9x128xf32> to vector<1x9x9x128xf32>
    %31 = vector.shape_cast %30 : vector<1x9x9x128xf32> to vector<9x9x128xf32>
    %32 = vector.extract_strided_slice %31 {offsets = [1, 0, 0], sizes = [8, 8, 128], strides = [1, 1, 1]} : vector<9x9x128xf32> to vector<8x8x128xf32>
    %33 = vector.shape_cast %32 : vector<8x8x128xf32> to vector<64x128xf32>
    %34 = vector.extract_strided_slice %1 {offsets = [0, 0, 0, 0], sizes = [1, 9, 9, 128], strides = [1, 1, 1, 1]} : vector<4x9x9x128xf32> to vector<1x9x9x128xf32>
    %35 = vector.shape_cast %34 : vector<1x9x9x128xf32> to vector<9x9x128xf32>
    %36 = vector.extract_strided_slice %35 {offsets = [1, 1, 0], sizes = [8, 8, 128], strides = [1, 1, 1]} : vector<9x9x128xf32> to vector<8x8x128xf32>
    %37 = vector.shape_cast %36 : vector<8x8x128xf32> to vector<64x128xf32>
    %38 = tpu.concatenate %5, %9, %13, %17, %21, %25, %29, %33, %37 in 1 : vector<64x128xf32>, vector<64x128xf32>, vector<64x128xf32>, vector<64x128xf32>, vector<64x128xf32>, vector<64x128xf32>, vector<64x128xf32>, vector<64x128xf32>, vector<64x128xf32> -> vector<64x1152xf32>
    %39 = arith.truncf %38 : vector<64x1152xf32> to vector<64x1152xbf16>
    %c0_4 = arith.constant 0 : index
    %c0_5 = arith.constant 0 : index
    %40 = vector.load %arg2[%c0_4, %c0_5] : memref<1152x128xbf16, #tpu.memory_space<vmem>>, vector<1152x128xbf16>
    %cst = arith.constant dense<0.000000e+00> : vector<64x128xf32>
    %41 = tpu.matmul %39, %40, %cst {dimension_numbers = #tpu.dot_dimension_numbers<[1], [0], [0], [1], [0, 0, 1, 1], [], []>} : vector<64x1152xbf16>, vector<1152x128xbf16>, vector<64x128xf32> -> vector<64x128xf32>
    %c0_6 = arith.constant 0 : index
    %c0_7 = arith.constant 0 : index
    %42 = vector.load %arg3[%c0_6, %c0_7] : memref<1x128xf32, #tpu.memory_space<vmem>>, vector<1x128xf32>
    %43 = vector.broadcast %42 : vector<1x128xf32> to vector<64x128xf32>
    %44 = arith.mulf %41, %43 : vector<64x128xf32>
    %c0_8 = arith.constant 0 : index
    %c0_9 = arith.constant 0 : index
    %45 = vector.load %arg4[%c0_8, %c0_9] : memref<1x128xf32, #tpu.memory_space<vmem>>, vector<1x128xf32>
    %46 = vector.broadcast %45 : vector<1x128xf32> to vector<64x128xf32>
    %47 = arith.addf %44, %46 : vector<64x128xf32>
    %cst_10 = arith.constant 0.000000e+00 : f32
    %48 = vector.broadcast %cst_10 : f32 to vector<64x128xf32>
    %49 = arith.maximumf %47, %48 : vector<64x128xf32>
    %cst_11 = arith.constant 0.000000e+00 : f32
    %50 = vector.broadcast %cst_11 : f32 to vector<10x10x128xf32>
    %c0_12 = arith.constant 0 : index
    %c0_13 = arith.constant 0 : index
    %c0_14 = arith.constant 0 : index
    %51 = vector.load %arg12[%c0_12, %c0_13, %c0_14] : memref<10x10x128xf32, #tpu.memory_space<vmem>>, vector<10x10x128xf32>
    tpu.vector_store %arg12[%c0_12, %c0_13, %c0_14], %50 {strides = array<i32>} : memref<10x10x128xf32, #tpu.memory_space<vmem>>, vector<10x10x128xf32>,
    %52 = vector.shape_cast %49 : vector<64x128xf32> to vector<8x8x128xf32>
    %c1 = arith.constant 1 : index
    %c1_15 = arith.constant 1 : index
    %c0_16 = arith.constant 0 : index
    %53 = vector.load %arg12[%c1, %c1_15, %c0_16] : memref<10x10x128xf32, #tpu.memory_space<vmem>>, vector<8x8x128xf32>
    tpu.vector_store %arg12[%c1, %c1_15, %c0_16], %52 {strides = array<i32>} : memref<10x10x128xf32, #tpu.memory_space<vmem>>, vector<8x8x128xf32>,
    %c0_17 = arith.constant 0 : index
    %c0_18 = arith.constant 0 : index
    %c0_19 = arith.constant 0 : index
    %54 = vector.load %arg12[%c0_17, %c0_18, %c0_19] : memref<10x10x128xf32, #tpu.memory_space<vmem>>, vector<10x10x128xf32>
    %55 = vector.extract_strided_slice %54 {offsets = [0, 0, 0], sizes = [8, 8, 128], strides = [1, 1, 1]} : vector<10x10x128xf32> to vector<8x8x128xf32>
    %56 = vector.shape_cast %55 : vector<8x8x128xf32> to vector<64x128xf32>
    %57 = vector.extract_strided_slice %54 {offsets = [0, 1, 0], sizes = [8, 8, 128], strides = [1, 1, 1]} : vector<10x10x128xf32> to vector<8x8x128xf32>
    %58 = vector.shape_cast %57 : vector<8x8x128xf32> to vector<64x128xf32>
    %59 = vector.extract_strided_slice %54 {offsets = [0, 2, 0], sizes = [8, 8, 128], strides = [1, 1, 1]} : vector<10x10x128xf32> to vector<8x8x128xf32>
    %60 = vector.shape_cast %59 : vector<8x8x128xf32> to vector<64x128xf32>
    %61 = vector.extract_strided_slice %54 {offsets = [1, 0, 0], sizes = [8, 8, 128], strides = [1, 1, 1]} : vector<10x10x128xf32> to vector<8x8x128xf32>
    %62 = vector.shape_cast %61 : vector<8x8x128xf32> to vector<64x128xf32>
    %63 = vector.extract_strided_slice %54 {offsets = [1, 1, 0], sizes = [8, 8, 128], strides = [1, 1, 1]} : vector<10x10x128xf32> to vector<8x8x128xf32>
    %64 = vector.shape_cast %63 : vector<8x8x128xf32> to vector<64x128xf32>
    %65 = vector.extract_strided_slice %54 {offsets = [1, 2, 0], sizes = [8, 8, 128], strides = [1, 1, 1]} : vector<10x10x128xf32> to vector<8x8x128xf32>
    %66 = vector.shape_cast %65 : vector<8x8x128xf32> to vector<64x128xf32>
    %67 = vector.extract_strided_slice %54 {offsets = [2, 0, 0], sizes = [8, 8, 128], strides = [1, 1, 1]} : vector<10x10x128xf32> to vector<8x8x128xf32>
    %68 = vector.shape_cast %67 : vector<8x8x128xf32> to vector<64x128xf32>
    %69 = vector.extract_strided_slice %54 {offsets = [2, 1, 0], sizes = [8, 8, 128], strides = [1, 1, 1]} : vector<10x10x128xf32> to vector<8x8x128xf32>
    %70 = vector.shape_cast %69 : vector<8x8x128xf32> to vector<64x128xf32>
    %71 = vector.extract_strided_slice %54 {offsets = [2, 2, 0], sizes = [8, 8, 128], strides = [1, 1, 1]} : vector<10x10x128xf32> to vector<8x8x128xf32>
    %72 = vector.shape_cast %71 : vector<8x8x128xf32> to vector<64x128xf32>
    %73 = tpu.concatenate %56, %58, %60, %62, %64, %66, %68, %70, %72 in 1 : vector<64x128xf32>, vector<64x128xf32>, vector<64x128xf32>, vector<64x128xf32>, vector<64x128xf32>, vector<64x128xf32>, vector<64x128xf32>, vector<64x128xf32>, vector<64x128xf32> -> vector<64x1152xf32>
    %74 = arith.truncf %73 : vector<64x1152xf32> to vector<64x1152xbf16>
    %c0_20 = arith.constant 0 : index
    %c0_21 = arith.constant 0 : index
    %75 = vector.load %arg5[%c0_20, %c0_21] : memref<1152x128xbf16, #tpu.memory_space<vmem>>, vector<1152x128xbf16>
    %cst_22 = arith.constant dense<0.000000e+00> : vector<64x128xf32>
    %76 = tpu.matmul %74, %75, %cst_22 {dimension_numbers = #tpu.dot_dimension_numbers<[1], [0], [0], [1], [0, 0, 1, 1], [], []>} : vector<64x1152xbf16>, vector<1152x128xbf16>, vector<64x128xf32> -> vector<64x128xf32>
    %c0_23 = arith.constant 0 : index
    %c0_24 = arith.constant 0 : index
    %77 = vector.load %arg6[%c0_23, %c0_24] : memref<1x128xf32, #tpu.memory_space<vmem>>, vector<1x128xf32>
    %78 = vector.broadcast %77 : vector<1x128xf32> to vector<64x128xf32>
    %79 = arith.mulf %76, %78 : vector<64x128xf32>
    %c0_25 = arith.constant 0 : index
    %c0_26 = arith.constant 0 : index
    %80 = vector.load %arg7[%c0_25, %c0_26] : memref<1x128xf32, #tpu.memory_space<vmem>>, vector<1x128xf32>
    %81 = vector.broadcast %80 : vector<1x128xf32> to vector<64x128xf32>
    %82 = arith.addf %79, %81 : vector<64x128xf32>
    %83 = vector.extract_strided_slice %1 {offsets = [3, 0, 0, 0], sizes = [1, 8, 8, 128], strides = [1, 1, 1, 1]} : vector<4x9x9x128xf32> to vector<1x8x8x128xf32>
    %84 = vector.shape_cast %83 : vector<1x8x8x128xf32> to vector<8x8x128xf32>
    %85 = vector.shape_cast %84 : vector<8x8x128xf32> to vector<64x128xf32>
    %86 = arith.truncf %85 : vector<64x128xf32> to vector<64x128xbf16>
    %c0_27 = arith.constant 0 : index
    %c0_28 = arith.constant 0 : index
    %87 = vector.load %arg8[%c0_27, %c0_28] : memref<128x128xbf16, #tpu.memory_space<vmem>>, vector<128x128xbf16>
    %cst_29 = arith.constant dense<0.000000e+00> : vector<64x128xf32>
    %88 = tpu.matmul %86, %87, %cst_29 {dimension_numbers = #tpu.dot_dimension_numbers<[1], [0], [0], [1], [0, 0, 1, 1], [], []>} : vector<64x128xbf16>, vector<128x128xbf16>, vector<64x128xf32> -> vector<64x128xf32>
    %c0_30 = arith.constant 0 : index
    %c0_31 = arith.constant 0 : index
    %89 = vector.load %arg9[%c0_30, %c0_31] : memref<1x128xf32, #tpu.memory_space<vmem>>, vector<1x128xf32>
    %90 = vector.broadcast %89 : vector<1x128xf32> to vector<64x128xf32>
    %91 = arith.mulf %88, %90 : vector<64x128xf32>
    %c0_32 = arith.constant 0 : index
    %c0_33 = arith.constant 0 : index
    %92 = vector.load %arg10[%c0_32, %c0_33] : memref<1x128xf32, #tpu.memory_space<vmem>>, vector<1x128xf32>
    %93 = vector.broadcast %92 : vector<1x128xf32> to vector<64x128xf32>
    %94 = arith.addf %91, %93 : vector<64x128xf32>
    %95 = arith.addf %82, %94 : vector<64x128xf32>
    %cst_34 = arith.constant 0.000000e+00 : f32
    %96 = vector.broadcast %cst_34 : f32 to vector<64x128xf32>
    %97 = arith.maximumf %95, %96 : vector<64x128xf32>
    %98 = vector.shape_cast %97 : vector<64x128xf32> to vector<1x8x8x128xf32>
    %c0_35 = arith.constant 0 : index
    %c0_36 = arith.constant 0 : index
    %c0_37 = arith.constant 0 : index
    %c0_38 = arith.constant 0 : index
    %99 = vector.load %arg11[%c0_35, %c0_36, %c0_37, %c0_38] : memref<1x8x8x128xf32, #tpu.memory_space<vmem>>, vector<1x8x8x128xf32>
    tpu.vector_store %arg11[%c0_35, %c0_36, %c0_37, %c0_38], %98 {strides = array<i32>} : memref<1x8x8x128xf32, #tpu.memory_space<vmem>>, vector<1x8x8x128xf32>,
    return
  }
  func.func @transform_0(%arg0: i32) -> (i32, i32, i32, i32, i32) {
    %c0_i32 = arith.constant 0 : i32
    %c0_i32_0 = arith.constant 0 : i32
    %c0_i32_1 = arith.constant 0 : i32
    %c0_i32_2 = arith.constant 0 : i32
    %c0_i32_3 = arith.constant 0 : i32
    return %arg0, %c0_i32, %c0_i32_0, %c0_i32_1, %c0_i32_2 : i32, i32, i32, i32, i32
  }
  func.func @transform_1(%arg0: i32) -> (i32, i32) {
    %c0_i32 = arith.constant 0 : i32
    %c0_i32_0 = arith.constant 0 : i32
    %c0_i32_1 = arith.constant 0 : i32
    return %c0_i32, %c0_i32_0 : i32, i32
  }
  func.func @transform_2(%arg0: i32) -> (i32, i32) {
    %c0_i32 = arith.constant 0 : i32
    %c0_i32_0 = arith.constant 0 : i32
    %c0_i32_1 = arith.constant 0 : i32
    return %c0_i32, %c0_i32_0 : i32, i32
  }
  func.func @transform_3(%arg0: i32) -> (i32, i32) {
    %c0_i32 = arith.constant 0 : i32
    %c0_i32_0 = arith.constant 0 : i32
    %c0_i32_1 = arith.constant 0 : i32
    return %c0_i32, %c0_i32_0 : i32, i32
  }
  func.func @transform_4(%arg0: i32) -> (i32, i32) {
    %c0_i32 = arith.constant 0 : i32
    %c0_i32_0 = arith.constant 0 : i32
    %c0_i32_1 = arith.constant 0 : i32
    return %c0_i32, %c0_i32_0 : i32, i32
  }
  func.func @transform_5(%arg0: i32) -> (i32, i32) {
    %c0_i32 = arith.constant 0 : i32
    %c0_i32_0 = arith.constant 0 : i32
    %c0_i32_1 = arith.constant 0 : i32
    return %c0_i32, %c0_i32_0 : i32, i32
  }
  func.func @transform_6(%arg0: i32) -> (i32, i32) {
    %c0_i32 = arith.constant 0 : i32
    %c0_i32_0 = arith.constant 0 : i32
    %c0_i32_1 = arith.constant 0 : i32
    return %c0_i32, %c0_i32_0 : i32, i32
  }
  func.func @transform_7(%arg0: i32) -> (i32, i32) {
    %c0_i32 = arith.constant 0 : i32
    %c0_i32_0 = arith.constant 0 : i32
    %c0_i32_1 = arith.constant 0 : i32
    return %c0_i32, %c0_i32_0 : i32, i32
  }
  func.func @transform_8(%arg0: i32) -> (i32, i32) {
    %c0_i32 = arith.constant 0 : i32
    %c0_i32_0 = arith.constant 0 : i32
    %c0_i32_1 = arith.constant 0 : i32
    return %c0_i32, %c0_i32_0 : i32, i32
  }
  func.func @transform_9(%arg0: i32) -> (i32, i32) {
    %c0_i32 = arith.constant 0 : i32
    %c0_i32_0 = arith.constant 0 : i32
    %c0_i32_1 = arith.constant 0 : i32
    return %c0_i32, %c0_i32_0 : i32, i32
  }
  func.func @transform_10(%arg0: i32) -> (i32, i32, i32, i32) {
    %c0_i32 = arith.constant 0 : i32
    %c0_i32_0 = arith.constant 0 : i32
    %c0_i32_1 = arith.constant 0 : i32
    %c0_i32_2 = arith.constant 0 : i32
    return %arg0, %c0_i32, %c0_i32_0, %c0_i32_1 : i32, i32, i32, i32
  }
}

module attributes {stable_mosaic.version = 11 : i64} {
  func.func @_fused_block_kernel(%arg0: i32, %arg1: memref<1x8x8x128xf32, #tpu.memory_space<vmem>>, %arg2: memref<1152x128xbf16, #tpu.memory_space<vmem>>, %arg3: memref<1x128xf32, #tpu.memory_space<vmem>>, %arg4: memref<1x128xf32, #tpu.memory_space<vmem>>, %arg5: memref<1152x128xbf16, #tpu.memory_space<vmem>>, %arg6: memref<1x128xf32, #tpu.memory_space<vmem>>, %arg7: memref<1x128xf32, #tpu.memory_space<vmem>>, %arg8: memref<1x8x8x128xf32, #tpu.memory_space<vmem>>, %arg9: memref<10x10x128xf32, #tpu.memory_space<vmem>>, %arg10: memref<10x10x128xf32, #tpu.memory_space<vmem>>) attributes {dimension_semantics = [#tpu.dimension_semantics<parallel>], iteration_bounds = array<i64: 2>, scalar_prefetch = 0 : i64, scratch_operands = 2 : i64, tpu.core_type = #tpu.core_type<tc>, window_params = [{transform_indices = @transform_0, window_bounds = array<i64: 1, 8, 8, 128>}, {pipeline_mode = #tpu.pipeline_mode<synchronous>, transform_indices = @transform_1, window_bounds = array<i64: 1152, 128>}, {pipeline_mode = #tpu.pipeline_mode<synchronous>, transform_indices = @transform_2, window_bounds = array<i64: 1, 128>}, {pipeline_mode = #tpu.pipeline_mode<synchronous>, transform_indices = @transform_3, window_bounds = array<i64: 1, 128>}, {pipeline_mode = #tpu.pipeline_mode<synchronous>, transform_indices = @transform_4, window_bounds = array<i64: 1152, 128>}, {pipeline_mode = #tpu.pipeline_mode<synchronous>, transform_indices = @transform_5, window_bounds = array<i64: 1, 128>}, {pipeline_mode = #tpu.pipeline_mode<synchronous>, transform_indices = @transform_6, window_bounds = array<i64: 1, 128>}, {transform_indices = @transform_7, window_bounds = array<i64: 1, 8, 8, 128>}]} {
    %c0 = arith.constant 0 : index
    %c0_0 = arith.constant 0 : index
    %c0_1 = arith.constant 0 : index
    %c0_2 = arith.constant 0 : index
    %0 = vector.load %arg1[%c0, %c0_0, %c0_1, %c0_2] : memref<1x8x8x128xf32, #tpu.memory_space<vmem>>, vector<1x8x8x128xf32>
    %1 = vector.shape_cast %0 : vector<1x8x8x128xf32> to vector<8x8x128xf32>
    %cst = arith.constant 0.000000e+00 : f32
    %2 = vector.broadcast %cst : f32 to vector<10x10x128xf32>
    %c0_3 = arith.constant 0 : index
    %c0_4 = arith.constant 0 : index
    %c0_5 = arith.constant 0 : index
    %3 = vector.load %arg9[%c0_3, %c0_4, %c0_5] : memref<10x10x128xf32, #tpu.memory_space<vmem>>, vector<10x10x128xf32>
    tpu.vector_store %arg9[%c0_3, %c0_4, %c0_5], %2 {strides = array<i32>} : memref<10x10x128xf32, #tpu.memory_space<vmem>>, vector<10x10x128xf32>,
    %c1 = arith.constant 1 : index
    %c1_6 = arith.constant 1 : index
    %c0_7 = arith.constant 0 : index
    %4 = vector.load %arg9[%c1, %c1_6, %c0_7] : memref<10x10x128xf32, #tpu.memory_space<vmem>>, vector<8x8x128xf32>
    tpu.vector_store %arg9[%c1, %c1_6, %c0_7], %1 {strides = array<i32>} : memref<10x10x128xf32, #tpu.memory_space<vmem>>, vector<8x8x128xf32>,
    %c0_8 = arith.constant 0 : index
    %c0_9 = arith.constant 0 : index
    %c0_10 = arith.constant 0 : index
    %5 = vector.load %arg9[%c0_8, %c0_9, %c0_10] : memref<10x10x128xf32, #tpu.memory_space<vmem>>, vector<10x10x128xf32>
    %6 = vector.extract_strided_slice %5 {offsets = [0, 0, 0], sizes = [8, 8, 128], strides = [1, 1, 1]} : vector<10x10x128xf32> to vector<8x8x128xf32>
    %7 = vector.shape_cast %6 : vector<8x8x128xf32> to vector<64x128xf32>
    %8 = vector.extract_strided_slice %5 {offsets = [0, 1, 0], sizes = [8, 8, 128], strides = [1, 1, 1]} : vector<10x10x128xf32> to vector<8x8x128xf32>
    %9 = vector.shape_cast %8 : vector<8x8x128xf32> to vector<64x128xf32>
    %10 = vector.extract_strided_slice %5 {offsets = [0, 2, 0], sizes = [8, 8, 128], strides = [1, 1, 1]} : vector<10x10x128xf32> to vector<8x8x128xf32>
    %11 = vector.shape_cast %10 : vector<8x8x128xf32> to vector<64x128xf32>
    %12 = vector.extract_strided_slice %5 {offsets = [1, 0, 0], sizes = [8, 8, 128], strides = [1, 1, 1]} : vector<10x10x128xf32> to vector<8x8x128xf32>
    %13 = vector.shape_cast %12 : vector<8x8x128xf32> to vector<64x128xf32>
    %14 = vector.extract_strided_slice %5 {offsets = [1, 1, 0], sizes = [8, 8, 128], strides = [1, 1, 1]} : vector<10x10x128xf32> to vector<8x8x128xf32>
    %15 = vector.shape_cast %14 : vector<8x8x128xf32> to vector<64x128xf32>
    %16 = vector.extract_strided_slice %5 {offsets = [1, 2, 0], sizes = [8, 8, 128], strides = [1, 1, 1]} : vector<10x10x128xf32> to vector<8x8x128xf32>
    %17 = vector.shape_cast %16 : vector<8x8x128xf32> to vector<64x128xf32>
    %18 = vector.extract_strided_slice %5 {offsets = [2, 0, 0], sizes = [8, 8, 128], strides = [1, 1, 1]} : vector<10x10x128xf32> to vector<8x8x128xf32>
    %19 = vector.shape_cast %18 : vector<8x8x128xf32> to vector<64x128xf32>
    %20 = vector.extract_strided_slice %5 {offsets = [2, 1, 0], sizes = [8, 8, 128], strides = [1, 1, 1]} : vector<10x10x128xf32> to vector<8x8x128xf32>
    %21 = vector.shape_cast %20 : vector<8x8x128xf32> to vector<64x128xf32>
    %22 = vector.extract_strided_slice %5 {offsets = [2, 2, 0], sizes = [8, 8, 128], strides = [1, 1, 1]} : vector<10x10x128xf32> to vector<8x8x128xf32>
    %23 = vector.shape_cast %22 : vector<8x8x128xf32> to vector<64x128xf32>
    %24 = tpu.concatenate %7, %9, %11, %13, %15, %17, %19, %21, %23 in 1 : vector<64x128xf32>, vector<64x128xf32>, vector<64x128xf32>, vector<64x128xf32>, vector<64x128xf32>, vector<64x128xf32>, vector<64x128xf32>, vector<64x128xf32>, vector<64x128xf32> -> vector<64x1152xf32>
    %25 = arith.truncf %24 : vector<64x1152xf32> to vector<64x1152xbf16>
    %c0_11 = arith.constant 0 : index
    %c0_12 = arith.constant 0 : index
    %26 = vector.load %arg2[%c0_11, %c0_12] : memref<1152x128xbf16, #tpu.memory_space<vmem>>, vector<1152x128xbf16>
    %cst_13 = arith.constant dense<0.000000e+00> : vector<64x128xf32>
    %27 = tpu.matmul %25, %26, %cst_13 {dimension_numbers = #tpu.dot_dimension_numbers<[1], [0], [0], [1], [0, 0, 1, 1], [], []>} : vector<64x1152xbf16>, vector<1152x128xbf16>, vector<64x128xf32> -> vector<64x128xf32>
    %c0_14 = arith.constant 0 : index
    %c0_15 = arith.constant 0 : index
    %28 = vector.load %arg3[%c0_14, %c0_15] : memref<1x128xf32, #tpu.memory_space<vmem>>, vector<1x128xf32>
    %29 = vector.broadcast %28 : vector<1x128xf32> to vector<64x128xf32>
    %30 = arith.mulf %27, %29 : vector<64x128xf32>
    %c0_16 = arith.constant 0 : index
    %c0_17 = arith.constant 0 : index
    %31 = vector.load %arg4[%c0_16, %c0_17] : memref<1x128xf32, #tpu.memory_space<vmem>>, vector<1x128xf32>
    %32 = vector.broadcast %31 : vector<1x128xf32> to vector<64x128xf32>
    %33 = arith.addf %30, %32 : vector<64x128xf32>
    %cst_18 = arith.constant 0.000000e+00 : f32
    %34 = vector.broadcast %cst_18 : f32 to vector<64x128xf32>
    %35 = arith.maximumf %33, %34 : vector<64x128xf32>
    %cst_19 = arith.constant 0.000000e+00 : f32
    %36 = vector.broadcast %cst_19 : f32 to vector<10x10x128xf32>
    %c0_20 = arith.constant 0 : index
    %c0_21 = arith.constant 0 : index
    %c0_22 = arith.constant 0 : index
    %37 = vector.load %arg10[%c0_20, %c0_21, %c0_22] : memref<10x10x128xf32, #tpu.memory_space<vmem>>, vector<10x10x128xf32>
    tpu.vector_store %arg10[%c0_20, %c0_21, %c0_22], %36 {strides = array<i32>} : memref<10x10x128xf32, #tpu.memory_space<vmem>>, vector<10x10x128xf32>,
    %38 = vector.shape_cast %35 : vector<64x128xf32> to vector<8x8x128xf32>
    %c1_23 = arith.constant 1 : index
    %c1_24 = arith.constant 1 : index
    %c0_25 = arith.constant 0 : index
    %39 = vector.load %arg10[%c1_23, %c1_24, %c0_25] : memref<10x10x128xf32, #tpu.memory_space<vmem>>, vector<8x8x128xf32>
    tpu.vector_store %arg10[%c1_23, %c1_24, %c0_25], %38 {strides = array<i32>} : memref<10x10x128xf32, #tpu.memory_space<vmem>>, vector<8x8x128xf32>,
    %c0_26 = arith.constant 0 : index
    %c0_27 = arith.constant 0 : index
    %c0_28 = arith.constant 0 : index
    %40 = vector.load %arg10[%c0_26, %c0_27, %c0_28] : memref<10x10x128xf32, #tpu.memory_space<vmem>>, vector<10x10x128xf32>
    %41 = vector.extract_strided_slice %40 {offsets = [0, 0, 0], sizes = [8, 8, 128], strides = [1, 1, 1]} : vector<10x10x128xf32> to vector<8x8x128xf32>
    %42 = vector.shape_cast %41 : vector<8x8x128xf32> to vector<64x128xf32>
    %43 = vector.extract_strided_slice %40 {offsets = [0, 1, 0], sizes = [8, 8, 128], strides = [1, 1, 1]} : vector<10x10x128xf32> to vector<8x8x128xf32>
    %44 = vector.shape_cast %43 : vector<8x8x128xf32> to vector<64x128xf32>
    %45 = vector.extract_strided_slice %40 {offsets = [0, 2, 0], sizes = [8, 8, 128], strides = [1, 1, 1]} : vector<10x10x128xf32> to vector<8x8x128xf32>
    %46 = vector.shape_cast %45 : vector<8x8x128xf32> to vector<64x128xf32>
    %47 = vector.extract_strided_slice %40 {offsets = [1, 0, 0], sizes = [8, 8, 128], strides = [1, 1, 1]} : vector<10x10x128xf32> to vector<8x8x128xf32>
    %48 = vector.shape_cast %47 : vector<8x8x128xf32> to vector<64x128xf32>
    %49 = vector.extract_strided_slice %40 {offsets = [1, 1, 0], sizes = [8, 8, 128], strides = [1, 1, 1]} : vector<10x10x128xf32> to vector<8x8x128xf32>
    %50 = vector.shape_cast %49 : vector<8x8x128xf32> to vector<64x128xf32>
    %51 = vector.extract_strided_slice %40 {offsets = [1, 2, 0], sizes = [8, 8, 128], strides = [1, 1, 1]} : vector<10x10x128xf32> to vector<8x8x128xf32>
    %52 = vector.shape_cast %51 : vector<8x8x128xf32> to vector<64x128xf32>
    %53 = vector.extract_strided_slice %40 {offsets = [2, 0, 0], sizes = [8, 8, 128], strides = [1, 1, 1]} : vector<10x10x128xf32> to vector<8x8x128xf32>
    %54 = vector.shape_cast %53 : vector<8x8x128xf32> to vector<64x128xf32>
    %55 = vector.extract_strided_slice %40 {offsets = [2, 1, 0], sizes = [8, 8, 128], strides = [1, 1, 1]} : vector<10x10x128xf32> to vector<8x8x128xf32>
    %56 = vector.shape_cast %55 : vector<8x8x128xf32> to vector<64x128xf32>
    %57 = vector.extract_strided_slice %40 {offsets = [2, 2, 0], sizes = [8, 8, 128], strides = [1, 1, 1]} : vector<10x10x128xf32> to vector<8x8x128xf32>
    %58 = vector.shape_cast %57 : vector<8x8x128xf32> to vector<64x128xf32>
    %59 = tpu.concatenate %42, %44, %46, %48, %50, %52, %54, %56, %58 in 1 : vector<64x128xf32>, vector<64x128xf32>, vector<64x128xf32>, vector<64x128xf32>, vector<64x128xf32>, vector<64x128xf32>, vector<64x128xf32>, vector<64x128xf32>, vector<64x128xf32> -> vector<64x1152xf32>
    %60 = arith.truncf %59 : vector<64x1152xf32> to vector<64x1152xbf16>
    %c0_29 = arith.constant 0 : index
    %c0_30 = arith.constant 0 : index
    %61 = vector.load %arg5[%c0_29, %c0_30] : memref<1152x128xbf16, #tpu.memory_space<vmem>>, vector<1152x128xbf16>
    %cst_31 = arith.constant dense<0.000000e+00> : vector<64x128xf32>
    %62 = tpu.matmul %60, %61, %cst_31 {dimension_numbers = #tpu.dot_dimension_numbers<[1], [0], [0], [1], [0, 0, 1, 1], [], []>} : vector<64x1152xbf16>, vector<1152x128xbf16>, vector<64x128xf32> -> vector<64x128xf32>
    %c0_32 = arith.constant 0 : index
    %c0_33 = arith.constant 0 : index
    %63 = vector.load %arg6[%c0_32, %c0_33] : memref<1x128xf32, #tpu.memory_space<vmem>>, vector<1x128xf32>
    %64 = vector.broadcast %63 : vector<1x128xf32> to vector<64x128xf32>
    %65 = arith.mulf %62, %64 : vector<64x128xf32>
    %c0_34 = arith.constant 0 : index
    %c0_35 = arith.constant 0 : index
    %66 = vector.load %arg7[%c0_34, %c0_35] : memref<1x128xf32, #tpu.memory_space<vmem>>, vector<1x128xf32>
    %67 = vector.broadcast %66 : vector<1x128xf32> to vector<64x128xf32>
    %68 = arith.addf %65, %67 : vector<64x128xf32>
    %69 = vector.shape_cast %1 : vector<8x8x128xf32> to vector<64x128xf32>
    %70 = arith.addf %68, %69 : vector<64x128xf32>
    %cst_36 = arith.constant 0.000000e+00 : f32
    %71 = vector.broadcast %cst_36 : f32 to vector<64x128xf32>
    %72 = arith.maximumf %70, %71 : vector<64x128xf32>
    %73 = vector.shape_cast %72 : vector<64x128xf32> to vector<1x8x8x128xf32>
    %c0_37 = arith.constant 0 : index
    %c0_38 = arith.constant 0 : index
    %c0_39 = arith.constant 0 : index
    %c0_40 = arith.constant 0 : index
    %74 = vector.load %arg8[%c0_37, %c0_38, %c0_39, %c0_40] : memref<1x8x8x128xf32, #tpu.memory_space<vmem>>, vector<1x8x8x128xf32>
    tpu.vector_store %arg8[%c0_37, %c0_38, %c0_39, %c0_40], %73 {strides = array<i32>} : memref<1x8x8x128xf32, #tpu.memory_space<vmem>>, vector<1x8x8x128xf32>,
    return
  }
  func.func @transform_0(%arg0: i32) -> (i32, i32, i32, i32) {
    %c0_i32 = arith.constant 0 : i32
    %c0_i32_0 = arith.constant 0 : i32
    %c0_i32_1 = arith.constant 0 : i32
    %c0_i32_2 = arith.constant 0 : i32
    return %arg0, %c0_i32, %c0_i32_0, %c0_i32_1 : i32, i32, i32, i32
  }
  func.func @transform_1(%arg0: i32) -> (i32, i32) {
    %c0_i32 = arith.constant 0 : i32
    %c0_i32_0 = arith.constant 0 : i32
    %c0_i32_1 = arith.constant 0 : i32
    return %c0_i32, %c0_i32_0 : i32, i32
  }
  func.func @transform_2(%arg0: i32) -> (i32, i32) {
    %c0_i32 = arith.constant 0 : i32
    %c0_i32_0 = arith.constant 0 : i32
    %c0_i32_1 = arith.constant 0 : i32
    return %c0_i32, %c0_i32_0 : i32, i32
  }
  func.func @transform_3(%arg0: i32) -> (i32, i32) {
    %c0_i32 = arith.constant 0 : i32
    %c0_i32_0 = arith.constant 0 : i32
    %c0_i32_1 = arith.constant 0 : i32
    return %c0_i32, %c0_i32_0 : i32, i32
  }
  func.func @transform_4(%arg0: i32) -> (i32, i32) {
    %c0_i32 = arith.constant 0 : i32
    %c0_i32_0 = arith.constant 0 : i32
    %c0_i32_1 = arith.constant 0 : i32
    return %c0_i32, %c0_i32_0 : i32, i32
  }
  func.func @transform_5(%arg0: i32) -> (i32, i32) {
    %c0_i32 = arith.constant 0 : i32
    %c0_i32_0 = arith.constant 0 : i32
    %c0_i32_1 = arith.constant 0 : i32
    return %c0_i32, %c0_i32_0 : i32, i32
  }
  func.func @transform_6(%arg0: i32) -> (i32, i32) {
    %c0_i32 = arith.constant 0 : i32
    %c0_i32_0 = arith.constant 0 : i32
    %c0_i32_1 = arith.constant 0 : i32
    return %c0_i32, %c0_i32_0 : i32, i32
  }
  func.func @transform_7(%arg0: i32) -> (i32, i32, i32, i32) {
    %c0_i32 = arith.constant 0 : i32
    %c0_i32_0 = arith.constant 0 : i32
    %c0_i32_1 = arith.constant 0 : i32
    %c0_i32_2 = arith.constant 0 : i32
    return %arg0, %c0_i32, %c0_i32_0, %c0_i32_1 : i32, i32, i32, i32
  }
}

</mosaic_0001>

<llo_original>
// kernel: res_stage_basetransform_forward.3
$region0: #{res_stage_basetransform_forward.3}
  #allocation0 [shape = 'u32[]', space=smem, size = 0x4, offset = 0x4, fixed_abs, tag = 'smem constant byte address 0x4 - core index']
  #allocation1 [shape = 'u32[144,128]{1,0:T(1,128)}', space=vmem, size = 0x12000, scoped, tag = 'internal scratch']
  #allocation2 [shape = 'f32[10,10,128]{2,1,0:T(8,128)}', space=vmem, size = 0x14000, scoped, tag = 'scratch operand']
  #allocation3 [shape = 'f32[10,10,128]{2,1,0:T(8,128)}', space=vmem, size = 0x14000, scoped, tag = 'scratch operand']
  %s0 = inlined_call_operand.vmem [shape: f32[2,8,8,128], index: 0, kind: input, shape index: {}]
  %s1 = inlined_call_operand.vmem [shape: bf16[1152,128], index: 1, kind: input, shape index: {}]
  %s2 = inlined_call_operand.vmem [shape: f32[1,128], index: 2, kind: input, shape index: {}]
  %s3 = inlined_call_operand.vmem [shape: f32[1,128], index: 3, kind: input, shape index: {}]
  %s4 = inlined_call_operand.vmem [shape: bf16[1152,128], index: 4, kind: input, shape index: {}]
  %s5 = inlined_call_operand.vmem [shape: f32[1,128], index: 5, kind: input, shape index: {}]
  %s6 = inlined_call_operand.vmem [shape: f32[1,128], index: 6, kind: input, shape index: {}]
  %s7 = inlined_call_operand.vmem [shape: f32[2,8,8,128], index: 7, kind: output, shape index: {}]
  %s8 = sld [smem:[#allocation0]]
  $region61: #{res_stage_basetransform_forward.3} parent=0
    _
  %s10 = ssub.s32 1, %s8
  %s11 = scalar_select 0, %s10, %s8
  loop: start=0, step=1, limit=4
  $region2: #{res_stage_basetransform_forward.3} parent=0 // loop_pre_header
    _
  $region3: #{res_stage_basetransform_forward.3} parent=0 // loop_header
    %s13 = sphi 0, %s17
    %p14 = scmp.ge.s32.totalorder %s13, 4
    %s23 = sphi 0, %s25
    %s26 = sphi 0, %s23
    %s27 = sphi 0, %s26
    %s43 = sphi 0, %s27
    %s47 = sphi 0, %s47
    %s49 = sphi 0, %s47
    %s50 = sphi 0, %s49
    %s64 = sphi 0, %s50
    %s68 = sphi 0, %s68
    %s70 = sphi 0, %s68
    %s71 = sphi 0, %s70
    %s85 = sphi 0, %s71
    %s89 = sphi 0, %s89
    %s91 = sphi 0, %s89
    %s92 = sphi 0, %s91
    %s106 = sphi 0, %s92
    %s110 = sphi 0, %s110
    %s112 = sphi 0, %s110
    %s113 = sphi 0, %s112
    %s127 = sphi 0, %s113
    %s131 = sphi 0, %s131
    %s133 = sphi 0, %s131
    %s134 = sphi 0, %s133
    %s148 = sphi 0, %s134
    %s152 = sphi 0, %s152
    %s154 = sphi 0, %s152
    %s155 = sphi 0, %s154
    %s169 = sphi 0, %s155
    %s175 = sphi 0, %s177
    %s178 = sphi 0, %s175
    %s179 = sphi 0, %s178
    %s195 = sphi 0, %s179
  $region4: #{res_stage_basetransform_forward.3} parent=0 // loop_header_branch
    %16 = sbr.rel (%p14) target = $region8
  $region5: #{res_stage_basetransform_forward.3} parent=0 // loop_body
    %s18 = ssub.s32 %s13, 1
    %s19 = ssub.s32 %s13, 2
    %s20 = sadd.s32 %s13, 1
    %s21 = ssub.s32 %s13, %s20
    %p22 = scmp.eq.s32.totalorder %s21, 0
    %s24 = sadd.s32 %s23, 1
    %s25 = scalar_select %p22, %s23, %s24
    %p28 = pneg %p22
    %p29 = scmp.eq.s32.totalorder %s13, 1
    %p30 = por %p28, %p29
    %p31 = scmp.ne.s32.totalorder %s23, %s26
    %p32 = scmp.eq.s32.totalorder %s13, 0
    %p33 = por %p31, %p32
    %p34 = scmp.ne.s32.totalorder %s23, %s26
    %p35 = scmp.eq.s32.totalorder %s18, 1
    %p36 = por %p34, %p35
    %p37 = scmp.ne.s32.totalorder %s26, %s27
    %p38 = scmp.eq.s32.totalorder %s18, 0
    %p39 = por %p37, %p38
    %p40 = scmp.ne.s32.totalorder %s26, %s27
    %p41 = scmp.eq.s32.totalorder %s19, 1
    %p42 = por %p40, %p41
    %p44 = scmp.ne.s32.totalorder %s27, %s43
    %p45 = scmp.eq.s32.totalorder %s19, 0
    %p46 = por %p44, %p45
    %s48 = sadd.s32 %s47, 1
    %p51 = scmp.eq.s32.totalorder %s13, 1
    %p52 = scmp.ne.s32.totalorder %s47, %s49
    %p53 = scmp.eq.s32.totalorder %s13, 0
    %p54 = por %p52, %p53
    %p55 = scmp.ne.s32.totalorder %s47, %s49
    %p56 = scmp.eq.s32.totalorder %s18, 1
    %p57 = por %p55, %p56
    %p58 = scmp.ne.s32.totalorder %s49, %s50
    %p59 = scmp.eq.s32.totalorder %s18, 0
    %p60 = por %p58, %p59
    %p61 = scmp.ne.s32.totalorder %s49, %s50
    %p62 = scmp.eq.s32.totalorder %s19, 1
    %p63 = por %p61, %p62
    %p65 = scmp.ne.s32.totalorder %s50, %s64
    %p66 = scmp.eq.s32.totalorder %s19, 0
    %p67 = por %p65, %p66
    %s69 = sadd.s32 %s68, 1
    %p72 = scmp.eq.s32.totalorder %s13, 1
    %p73 = scmp.ne.s32.totalorder %s68, %s70
    %p74 = scmp.eq.s32.totalorder %s13, 0
    %p75 = por %p73, %p74
    %p76 = scmp.ne.s32.totalorder %s68, %s70
    %p77 = scmp.eq.s32.totalorder %s18, 1
    %p78 = por %p76, %p77
    %p79 = scmp.ne.s32.totalorder %s70, %s71
    %p80 = scmp.eq.s32.totalorder %s18, 0
    %p81 = por %p79, %p80
    %p82 = scmp.ne.s32.totalorder %s70, %s71
    %p83 = scmp.eq.s32.totalorder %s19, 1
    %p84 = por %p82, %p83
    %p86 = scmp.ne.s32.totalorder %s71, %s85
    %p87 = scmp.eq.s32.totalorder %s19, 0
    %p88 = por %p86, %p87
    %s90 = sadd.s32 %s89, 1
    %p93 = scmp.eq.s32.totalorder %s13, 1
    %p94 = scmp.ne.s32.totalorder %s89, %s91
    %p95 = scmp.eq.s32.totalorder %s13, 0
    %p96 = por %p94, %p95
    %p97 = scmp.ne.s32.totalorder %s89, %s91
    %p98 = scmp.eq.s32.totalorder %s18, 1
    %p99 = por %p97, %p98
    %p100 = scmp.ne.s32.totalorder %s91, %s92
    %p101 = scmp.eq.s32.totalorder %s18, 0
    %p102 = por %p100, %p101
    %p103 = scmp.ne.s32.totalorder %s91, %s92
    %p104 = scmp.eq.s32.totalorder %s19, 1
    %p105 = por %p103, %p104
    %p107 = scmp.ne.s32.totalorder %s92, %s106
    %p108 = scmp.eq.s32.totalorder %s19, 0
    %p109 = por %p107, %p108
    %s111 = sadd.s32 %s110, 1
    %p114 = scmp.eq.s32.totalorder %s13, 1
    %p115 = scmp.ne.s32.totalorder %s110, %s112
    %p116 = scmp.eq.s32.totalorder %s13, 0
    %p117 = por %p115, %p116
    %p118 = scmp.ne.s32.totalorder %s110, %s112
    %p119 = scmp.eq.s32.totalorder %s18, 1
    %p120 = por %p118, %p119
    %p121 = scmp.ne.s32.totalorder %s112, %s113
    %p122 = scmp.eq.s32.totalorder %s18, 0
    %p123 = por %p121, %p122
    %p124 = scmp.ne.s32.totalorder %s112, %s113
    %p125 = scmp.eq.s32.totalorder %s19, 1
    %p126 = por %p124, %p125
    %p128 = scmp.ne.s32.totalorder %s113, %s127
    %p129 = scmp.eq.s32.totalorder %s19, 0
    %p130 = por %p128, %p129
    %s132 = sadd.s32 %s131, 1
    %p135 = scmp.eq.s32.totalorder %s13, 1
    %p136 = scmp.ne.s32.totalorder %s131, %s133
    %p137 = scmp.eq.s32.totalorder %s13, 0
    %p138 = por %p136, %p137
    %p139 = scmp.ne.s32.totalorder %s131, %s133
    %p140 = scmp.eq.s32.totalorder %s18, 1
    %p141 = por %p139, %p140
    %p142 = scmp.ne.s32.totalorder %s133, %s134
    %p143 = scmp.eq.s32.totalorder %s18, 0
    %p144 = por %p142, %p143
    %p145 = scmp.ne.s32.totalorder %s133, %s134
    %p146 = scmp.eq.s32.totalorder %s19, 1
    %p147 = por %p145, %p146
    %p149 = scmp.ne.s32.totalorder %s134, %s148
    %p150 = scmp.eq.s32.totalorder %s19, 0
    %p151 = por %p149, %p150
    %s153 = sadd.s32 %s152, 1
    %p156 = scmp.eq.s32.totalorder %s13, 1
    %p157 = scmp.ne.s32.totalorder %s152, %s154
    %p158 = scmp.eq.s32.totalorder %s13, 0
    %p159 = por %p157, %p158
    %p160 = scmp.ne.s32.totalorder %s152, %s154
    %p161 = scmp.eq.s32.totalorder %s18, 1
    %p162 = por %p160, %p161
    %p163 = scmp.ne.s32.totalorder %s154, %s155
    %p164 = scmp.eq.s32.totalorder %s18, 0
    %p165 = por %p163, %p164
    %p166 = scmp.ne.s32.totalorder %s154, %s155
    %p167 = scmp.eq.s32.totalorder %s19, 1
    %p168 = por %p166, %p167
    %p170 = scmp.ne.s32.totalorder %s155, %s169
    %p171 = scmp.eq.s32.totalorder %s19, 0
    %p172 = por %p170, %p171
    %s173 = ssub.s32 %s13, %s20
    %p174 = scmp.eq.s32.totalorder %s173, 0
    %s176 = sadd.s32 %s175, 1
    %s177 = scalar_select %p174, %s175, %s176
    %p180 = pneg %p174
    %p181 = scmp.eq.s32.totalorder %s13, 1
    %p182 = por %p180, %p181
    %p183 = scmp.ne.s32.totalorder %s175, %s178
    %p184 = scmp.eq.s32.totalorder %s13, 0
    %p185 = por %p183, %p184
    %p186 = scmp.ne.s32.totalorder %s175, %s178
    %p187 = scmp.eq.s32.totalorder %s18, 1
    %p188 = por %p186, %p187
    %p189 = scmp.ne.s32.totalorder %s178, %s179
    %p190 = scmp.eq.s32.totalorder %s18, 0
    %p191 = por %p189, %p190
    %p192 = scmp.ne.s32.totalorder %s178, %s179
    %p193 = scmp.eq.s32.totalorder %s19, 1
    %p194 = por %p192, %p193
    %p196 = scmp.ne.s32.totalorder %s179, %s195
    %p197 = scmp.eq.s32.totalorder %s19, 0
    %p198 = por %p196, %p197
    %p199 = scmp.le.s32.totalorder 1, %s13
    %p200 = scmp.lt.s32.totalorder %s13, 3
    %p201 = pnand %p199, %p200
    %p202 = pneg %p201
    // Predicated region
    $region9: #{res_stage_basetransform_forward.3} parent=5 // pred_check
      _
    $region10: #{res_stage_basetransform_forward.3} parent=5 // pred_check_branch
      %204 = sbr.rel (%p201) target = $region12
    $region11: #{res_stage_basetransform_forward.3} parent=5 // pred_region
      %s205 = ssub.s32 %s13, 1
      // Predicated region
      $region13: #{res_stage_basetransform_forward.3} parent=11 // pred_check
        %p206 = pneg %p60
      $region14: #{res_stage_basetransform_forward.3} parent=11 // pred_check_branch
        %208 = sbr.rel (%p206) target = $region16
      $region15: #{res_stage_basetransform_forward.3} parent=11 // pred_region
        _
      $region16: #{res_stage_basetransform_forward.3} parent=11 // pred_fallthru
        _
      // Predicated region
      $region17: #{res_stage_basetransform_forward.3} parent=11 // pred_check
        %p209 = pneg %p81
      $region18: #{res_stage_basetransform_forward.3} parent=11 // pred_check_branch
        %211 = sbr.rel (%p209) target = $region20
      $region19: #{res_stage_basetransform_forward.3} parent=11 // pred_region
        _
      $region20: #{res_stage_basetransform_forward.3} parent=11 // pred_fallthru
        _
      // Predicated region
      $region21: #{res_stage_basetransform_forward.3} parent=11 // pred_check
        %p212 = pneg %p102
      $region22: #{res_stage_basetransform_forward.3} parent=11 // pred_check_branch
        %214 = sbr.rel (%p212) target = $region24
      $region23: #{res_stage_basetransform_forward.3} parent=11 // pred_region
        _
      $region24: #{res_stage_basetransform_forward.3} parent=11 // pred_fallthru
        _
      // Predicated region
      $region25: #{res_stage_basetransform_forward.3} parent=11 // pred_check
        %p215 = pneg %p123
      $region26: #{res_stage_basetransform_forward.3} parent=11 // pred_check_branch
        %217 = sbr.rel (%p215) target = $region28
      $region27: #{res_stage_basetransform_forward.3} parent=11 // pred_region
        _
      $region28: #{res_stage_basetransform_forward.3} parent=11 // pred_fallthru
        _
      // Predicated region
      $region29: #{res_stage_basetransform_forward.3} parent=11 // pred_check
        %p218 = pneg %p144
      $region30: #{res_stage_basetransform_forward.3} parent=11 // pred_check_branch
        %220 = sbr.rel (%p218) target = $region32
      $region31: #{res_stage_basetransform_forward.3} parent=11 // pred_region
        _
      $region32: #{res_stage_basetransform_forward.3} parent=11 // pred_fallthru
        _
      // Predicated region
      $region33: #{res_stage_basetransform_forward.3} parent=11 // pred_check
        %p221 = pneg %p165
      $region34: #{res_stage_basetransform_forward.3} parent=11 // pred_check_branch
        %223 = sbr.rel (%p221) target = $region36
      $region35: #{res_stage_basetransform_forward.3} parent=11 // pred_region
        _
      $region36: #{res_stage_basetransform_forward.3} parent=11 // pred_fallthru
        _
    $region12: #{res_stage_basetransform_forward.3} parent=5 // pred_fallthru
      _
    %p224 = scmp.lt.s32.totalorder %s13, 2
    // Predicated region
    $region37: #{res_stage_basetransform_forward.3} parent=5 // pred_check
      %p225 = pneg %p224
    $region38: #{res_stage_basetransform_forward.3} parent=5 // pred_check_branch
      %227 = sbr.rel (%p225) target = $region40
    $region39: #{res_stage_basetransform_forward.3} parent=5 // pred_region
      // Predicated region
      $region41: #{res_stage_basetransform_forward.3} parent=39 // pred_check
        %p228 = pneg %p33
      $region42: #{res_stage_basetransform_forward.3} parent=39 // pred_check_branch
        %230 = sbr.rel (%p228) target = $region44
      $region43: #{res_stage_basetransform_forward.3} parent=39 // pred_region
        %p231 = scmp.lt.s32.totalorder %s13, 1
        %s232 = scalar_select %p231, %s13, 1
        %s233 = smul.addr %s232, 8
        %s234 = smul.addr %s233, 8
        %s235 = scalar_lea.vmem %s0, %s234
      $region44: #{res_stage_basetransform_forward.3} parent=39 // pred_fallthru
        _
    $region40: #{res_stage_basetransform_forward.3} parent=5 // pred_fallthru
      _
    %p236 = scmp.le.s32.totalorder 1, %s13
    %p237 = scmp.lt.s32.totalorder %s13, 3
    %p238 = pnand %p236, %p237
    %p239 = pneg %p238
    // Predicated region
    $region45: #{res_stage_basetransform_forward.3} parent=5 // pred_check
      _
    $region46: #{res_stage_basetransform_forward.3} parent=5 // pred_check_branch
      %241 = sbr.rel (%p238) target = $region48
    $region47: #{res_stage_basetransform_forward.3} parent=5 // pred_region
      %s242 = ssub.s32 %s13, 1
      %p243 = scmp.lt.s32.totalorder %s18, 1
      %s244 = scalar_select %p243, %s18, 1
      %s245 = smul.addr %s244, 8
      %s246 = smul.addr %s245, 8
      %s247 = scalar_lea.vmem %s0, %s246
      %p248 = pneg %p39
      %p249 = pneg %p36
      %p250 = pneg %p60
      %p251 = pneg %p57
      %p252 = pneg %p81
      %p253 = pneg %p78
      %p254 = pneg %p102
      %p255 = pneg %p99
      %p256 = pneg %p123
      %p257 = pneg %p120
      %p258 = pneg %p144
      %p259 = pneg %p141
      %p260 = pneg %p165
      %p261 = pneg %p162
      %p262 = pneg %p191
      %p263 = pneg %p188
      %p264 = scmp.lt.s32.totalorder %s18, 1
      %s265 = scalar_select %p264, %s18, 1
      %s266 = smul.addr %s265, 8
      %s267 = smul.addr %s266, 8
      %s268 = scalar_lea.vmem %s7, %s267
      %p269 = scmp.lt.s32.totalorder %s18, 1
      %s270 = scalar_select %p269, %s18, 1
      %s271 = smul.addr %s270, 8
      %s272 = smul.addr %s271, 8
      %s273 = scalar_lea.vmem %s0, %s272
      %p274 = scmp.lt.s32.totalorder %s18, 1
      %s275 = scalar_select %p274, %s18, 1
      %s276 = smul.addr %s275, 8
      %s277 = smul.addr %s276, 8
      %s278 = scalar_lea.vmem %s7, %s277
      %v280 = vld [vmem:[%s273] sm:$0xff]
      %v281 = vld [vmem:[%s273 + $0x8] sm:$0xff]
      %v282 = vld [vmem:[%s273 + $0x10] sm:$0xff]
      %v283 = vld [vmem:[%s273 + $0x18] sm:$0xff]
      %v284 = vld [vmem:[%s273 + $0x20] sm:$0xff]
      %v285 = vld [vmem:[%s273 + $0x28] sm:$0xff]
      %v286 = vld [vmem:[%s273 + $0x30] sm:$0xff]
      %v287 = vld [vmem:[%s273 + $0x38] sm:$0xff]
      %288 = vst [vmem:[#allocation2] sm:$0xff] 0.0
      %289 = vst [vmem:[#allocation2 + $0x8] sm:$0x3] 0.0
      %290 = vst [vmem:[#allocation2 + $0x10] sm:$0xff] 0.0
      %291 = vst [vmem:[#allocation2 + $0x18] sm:$0x3] 0.0
      %292 = vst [vmem:[#allocation2 + $0x20] sm:$0xff] 0.0
      %293 = vst [vmem:[#allocation2 + $0x28] sm:$0x3] 0.0
      %294 = vst [vmem:[#allocation2 + $0x30] sm:$0xff] 0.0
      %295 = vst [vmem:[#allocation2 + $0x38] sm:$0x3] 0.0
      %296 = vst [vmem:[#allocation2 + $0x40] sm:$0xff] 0.0
      %297 = vst [vmem:[#allocation2 + $0x48] sm:$0x3] 0.0
      %298 = vst [vmem:[#allocation2 + $0x50] sm:$0xff] 0.0
      %299 = vst [vmem:[#allocation2 + $0x58] sm:$0x3] 0.0
      %300 = vst [vmem:[#allocation2 + $0x60] sm:$0xff] 0.0
      %301 = vst [vmem:[#allocation2 + $0x68] sm:$0x3] 0.0
      %302 = vst [vmem:[#allocation2 + $0x70] sm:$0xff] 0.0
      %303 = vst [vmem:[#allocation2 + $0x78] sm:$0x3] 0.0
      %304 = vst [vmem:[#allocation2 + $0x80] sm:$0xff] 0.0
      %305 = vst [vmem:[#allocation2 + $0x88] sm:$0x3] 0.0
      %306 = vst [vmem:[#allocation2 + $0x90] sm:$0xff] 0.0
      %307 = vst [vmem:[#allocation2 + $0x98] sm:$0x3] 0.0
      %s308 = scalar_lea.vmem [#allocation2], 16
      %309 = vst [vmem:[%s308 + $0x1] sm:$0xff] %v280
      %310 = vst [vmem:[%s308 + $0x11] sm:$0xff] %v281
      %311 = vst [vmem:[%s308 + $0x21] sm:$0xff] %v282
      %312 = vst [vmem:[%s308 + $0x31] sm:$0xff] %v283
      %313 = vst [vmem:[%s308 + $0x41] sm:$0xff] %v284
      %314 = vst [vmem:[%s308 + $0x51] sm:$0xff] %v285
      %315 = vst [vmem:[%s308 + $0x61] sm:$0xff] %v286
      %316 = vst [vmem:[%s308 + $0x71] sm:$0xff] %v287
      %v317 = vld [vmem:[#allocation2] sm:$0xff]
      %v318 = vld [vmem:[#allocation2 + $0x8] sm:$0x3]
      %v319 = vld [vmem:[#allocation2 + $0x10] sm:$0xff]
      %v320 = vld [vmem:[#allocation2 + $0x18] sm:$0x3]
      %v321 = vld [vmem:[#allocation2 + $0x20] sm:$0xff]
      %v322 = vld [vmem:[#allocation2 + $0x28] sm:$0x3]
      %v323 = vld [vmem:[#allocation2 + $0x30] sm:$0xff]
      %v324 = vld [vmem:[#allocation2 + $0x38] sm:$0x3]
      %v325 = vld [vmem:[#allocation2 + $0x40] sm:$0xff]
      %v326 = vld [vmem:[#allocation2 + $0x48] sm:$0x3]
      %v327 = vld [vmem:[#allocation2 + $0x50] sm:$0xff]
      %v328 = vld [vmem:[#allocation2 + $0x58] sm:$0x3]
      %v329 = vld [vmem:[#allocation2 + $0x60] sm:$0xff]
      %v330 = vld [vmem:[#allocation2 + $0x68] sm:$0x3]
      %v331 = vld [vmem:[#allocation2 + $0x70] sm:$0xff]
      %v332 = vld [vmem:[#allocation2 + $0x78] sm:$0x3]
      %v333 = vld [vmem:[#allocation2 + $0x80] sm:$0xff]
      %v334 = vld [vmem:[#allocation2 + $0x88] sm:$0x3]
      %v335 = vld [vmem:[#allocation2 + $0x90] sm:$0xff]
      %v336 = vld [vmem:[#allocation2 + $0x98] sm:$0x3]
      %vm353 = vcmask 1046528
      %v354 = vrot.slane %v317, 1
      %v355 = vrot.slane %v318, 1
      %v356 = vsel %vm353, %v354, %v355
      %v357 = vrot.slane %v319, 1
      %v358 = vrot.slane %v320, 1
      %v359 = vsel %vm353, %v357, %v358
      %v360 = vrot.slane %v321, 1
      %v361 = vrot.slane %v322, 1
      %v362 = vsel %vm353, %v360, %v361
      %v363 = vrot.slane %v323, 1
      %v364 = vrot.slane %v324, 1
      %v365 = vsel %vm353, %v363, %v364
      %v366 = vrot.slane %v325, 1
      %v367 = vrot.slane %v326, 1
      %v368 = vsel %vm353, %v366, %v367
      %v369 = vrot.slane %v327, 1
      %v370 = vrot.slane %v328, 1
      %v371 = vsel %vm353, %v369, %v370
      %v372 = vrot.slane %v329, 1
      %v373 = vrot.slane %v330, 1
      %v374 = vsel %vm353, %v372, %v373
      %v375 = vrot.slane %v331, 1
      %v376 = vrot.slane %v332, 1
      %v377 = vsel %vm353, %v375, %v376
      %vm386 = vcmask 1045504
      %v387 = vrot.slane %v317, 2
      %v388 = vrot.slane %v318, 2
      %v389 = vsel %vm386, %v387, %v388
      %v390 = vrot.slane %v319, 2
      %v391 = vrot.slane %v320, 2
      %v392 = vsel %vm386, %v390, %v391
      %v393 = vrot.slane %v321, 2
      %v394 = vrot.slane %v322, 2
      %v395 = vsel %vm386, %v393, %v394
      %v396 = vrot.slane %v323, 2
      %v397 = vrot.slane %v324, 2
      %v398 = vsel %vm386, %v396, %v397
      %v399 = vrot.slane %v325, 2
      %v400 = vrot.slane %v326, 2
      %v401 = vsel %vm386, %v399, %v400
      %v402 = vrot.slane %v327, 2
      %v403 = vrot.slane %v328, 2
      %v404 = vsel %vm386, %v402, %v403
      %v405 = vrot.slane %v329, 2
      %v406 = vrot.slane %v330, 2
      %v407 = vsel %vm386, %v405, %v406
      %v408 = vrot.slane %v331, 2
      %v409 = vrot.slane %v332, 2
      %v410 = vsel %vm386, %v408, %v409
      %v421 = vrot.slane %v333, 1
      %v422 = vrot.slane %v334, 1
      %v423 = vsel %vm353, %v421, %v422
      %v425 = vrot.slane %v333, 2
      %v426 = vrot.slane %v334, 2
      %v427 = vsel %vm386, %v425, %v426
      %v431 = vrot.slane %v335, 1
      %v432 = vrot.slane %v336, 1
      %v433 = vsel %vm353, %v431, %v432
      %v435 = vrot.slane %v335, 2
      %v436 = vrot.slane %v336, 2
      %v437 = vsel %vm386, %v435, %v436
      %v439 = vpack.c.bf16 %v319, %v317
      %v440 = vpack.c.bf16 %v359, %v356
      %v441 = vpack.c.bf16 %v392, %v389
      %v442 = vpack.c.bf16 %v321, %v319
      %v443 = vpack.c.bf16 %v362, %v359
      %v444 = vpack.c.bf16 %v395, %v392
      %v445 = vpack.c.bf16 %v323, %v321
      %v446 = vpack.c.bf16 %v365, %v362
      %v447 = vpack.c.bf16 %v398, %v395
      %v448 = vpack.c.bf16 %v325, %v323
      %v449 = vpack.c.bf16 %v368, %v365
      %v450 = vpack.c.bf16 %v401, %v398
      %v451 = vpack.c.bf16 %v327, %v325
      %v452 = vpack.c.bf16 %v371, %v368
      %v453 = vpack.c.bf16 %v404, %v401
      %v454 = vpack.c.bf16 %v329, %v327
      %v455 = vpack.c.bf16 %v374, %v371
      %v456 = vpack.c.bf16 %v407, %v404
      %v457 = vpack.c.bf16 %v331, %v329
      %v458 = vpack.c.bf16 %v377, %v374
      %v459 = vpack.c.bf16 %v410, %v407
      %v460 = vpack.c.bf16 %v333, %v331
      %v461 = vpack.c.bf16 %v423, %v377
      %v462 = vpack.c.bf16 %v427, %v410
      %v463 = vpack.c.bf16 %v335, %v333
      %v464 = vpack.c.bf16 %v433, %v423
      %v465 = vpack.c.bf16 %v437, %v427
      %v466 = vld [vmem:[%s1] sm:$0xf]
      %v467 = vld [vmem:[%s1 + $0x4] sm:$0xf]
      %v468 = vld [vmem:[%s1 + $0x8] sm:$0xf]
      %v469 = vld [vmem:[%s1 + $0xc] sm:$0xf]
      %v470 = vld [vmem:[%s1 + $0x10] sm:$0xf]
      %v471 = vld [vmem:[%s1 + $0x14] sm:$0xf]
      %v472 = vld [vmem:[%s1 + $0x18] sm:$0xf]
      %v473 = vld [vmem:[%s1 + $0x1c] sm:$0xf]
      %v474 = vld [vmem:[%s1 + $0x20] sm:$0xf]
      %v475 = vld [vmem:[%s1 + $0x24] sm:$0xf]
      %v476 = vld [vmem:[%s1 + $0x28] sm:$0xf]
      %v477 = vld [vmem:[%s1 + $0x2c] sm:$0xf]
      %v478 = vld [vmem:[%s1 + $0x30] sm:$0xf]
      %v479 = vld [vmem:[%s1 + $0x34] sm:$0xf]
      %v480 = vld [vmem:[%s1 + $0x38] sm:$0xf]
      %v481 = vld [vmem:[%s1 + $0x3c] sm:$0xf]
      %v482 = vld [vmem:[%s1 + $0x40] sm:$0xf]
      %v483 = vld [vmem:[%s1 + $0x44] sm:$0xf]
      %v484 = vld [vmem:[%s1 + $0x48] sm:$0xf]
      %v485 = vld [vmem:[%s1 + $0x4c] sm:$0xf]
      %v486 = vld [vmem:[%s1 + $0x50] sm:$0xf]
      %v487 = vld [vmem:[%s1 + $0x54] sm:$0xf]
      %v488 = vld [vmem:[%s1 + $0x58] sm:$0xf]
      %v489 = vld [vmem:[%s1 + $0x5c] sm:$0xf]
      %v490 = vld [vmem:[%s1 + $0x60] sm:$0xf]
      %v491 = vld [vmem:[%s1 + $0x64] sm:$0xf]
      %v492 = vld [vmem:[%s1 + $0x68] sm:$0xf]
      %v493 = vld [vmem:[%s1 + $0x6c] sm:$0xf]
      %v494 = vld [vmem:[%s1 + $0x70] sm:$0xf]
      %v495 = vld [vmem:[%s1 + $0x74] sm:$0xf]
      %v496 = vld [vmem:[%s1 + $0x78] sm:$0xf]
      %v497 = vld [vmem:[%s1 + $0x7c] sm:$0xf]
      %v498 = vld [vmem:[%s1 + $0x80] sm:$0xf]
      %v499 = vld [vmem:[%s1 + $0x84] sm:$0xf]
      %v500 = vld [vmem:[%s1 + $0x88] sm:$0xf]
      %v501 = vld [vmem:[%s1 + $0x8c] sm:$0xf]
      %v502 = vld [vmem:[%s1 + $0x90] sm:$0xf]
      %v503 = vld [vmem:[%s1 + $0x94] sm:$0xf]
      %v504 = vld [vmem:[%s1 + $0x98] sm:$0xf]
      %v505 = vld [vmem:[%s1 + $0x9c] sm:$0xf]
      %v506 = vld [vmem:[%s1 + $0xa0] sm:$0xf]
      %v507 = vld [vmem:[%s1 + $0xa4] sm:$0xf]
      %v508 = vld [vmem:[%s1 + $0xa8] sm:$0xf]
      %v509 = vld [vmem:[%s1 + $0xac] sm:$0xf]
      %v510 = vld [vmem:[%s1 + $0xb0] sm:$0xf]
      %v511 = vld [vmem:[%s1 + $0xb4] sm:$0xf]
      %v512 = vld [vmem:[%s1 + $0xb8] sm:$0xf]
      %v513 = vld [vmem:[%s1 + $0xbc] sm:$0xf]
      %v514 = vld [vmem:[%s1 + $0xc0] sm:$0xf]
      %v515 = vld [vmem:[%s1 + $0xc4] sm:$0xf]
      %v516 = vld [vmem:[%s1 + $0xc8] sm:$0xf]
      %v517 = vld [vmem:[%s1 + $0xcc] sm:$0xf]
      %v518 = vld [vmem:[%s1 + $0xd0] sm:$0xf]
      %v519 = vld [vmem:[%s1 + $0xd4] sm:$0xf]
      %v520 = vld [vmem:[%s1 + $0xd8] sm:$0xf]
      %v521 = vld [vmem:[%s1 + $0xdc] sm:$0xf]
      %v522 = vld [vmem:[%s1 + $0xe0] sm:$0xf]
      %v523 = vld [vmem:[%s1 + $0xe4] sm:$0xf]
      %v524 = vld [vmem:[%s1 + $0xe8] sm:$0xf]
      %v525 = vld [vmem:[%s1 + $0xec] sm:$0xf]
      %v526 = vld [vmem:[%s1 + $0xf0] sm:$0xf]
      %v527 = vld [vmem:[%s1 + $0xf4] sm:$0xf]
      %v528 = vld [vmem:[%s1 + $0xf8] sm:$0xf]
      %v529 = vld [vmem:[%s1 + $0xfc] sm:$0xf]
      %v530 = vld [vmem:[%s1 + $0x100] sm:$0xf]
      %v531 = vld [vmem:[%s1 + $0x104] sm:$0xf]
      %v532 = vld [vmem:[%s1 + $0x108] sm:$0xf]
      %v533 = vld [vmem:[%s1 + $0x10c] sm:$0xf]
      %v534 = vld [vmem:[%s1 + $0x110] sm:$0xf]
      %v535 = vld [vmem:[%s1 + $0x114] sm:$0xf]
      %v536 = vld [vmem:[%s1 + $0x118] sm:$0xf]
      %v537 = vld [vmem:[%s1 + $0x11c] sm:$0xf]
      %v538 = vld [vmem:[%s1 + $0x120] sm:$0xf]
      %v539 = vld [vmem:[%s1 + $0x124] sm:$0xf]
      %v540 = vld [vmem:[%s1 + $0x128] sm:$0xf]
      %v541 = vld [vmem:[%s1 + $0x12c] sm:$0xf]
      %v542 = vld [vmem:[%s1 + $0x130] sm:$0xf]
      %v543 = vld [vmem:[%s1 + $0x134] sm:$0xf]
      %v544 = vld [vmem:[%s1 + $0x138] sm:$0xf]
      %v545 = vld [vmem:[%s1 + $0x13c] sm:$0xf]
      %v546 = vld [vmem:[%s1 + $0x140] sm:$0xf]
      %v547 = vld [vmem:[%s1 + $0x144] sm:$0xf]
      %v548 = vld [vmem:[%s1 + $0x148] sm:$0xf]
      %v549 = vld [vmem:[%s1 + $0x14c] sm:$0xf]
      %v550 = vld [vmem:[%s1 + $0x150] sm:$0xf]
      %v551 = vld [vmem:[%s1 + $0x154] sm:$0xf]
      %v552 = vld [vmem:[%s1 + $0x158] sm:$0xf]
      %v553 = vld [vmem:[%s1 + $0x15c] sm:$0xf]
      %v554 = vld [vmem:[%s1 + $0x160] sm:$0xf]
      %v555 = vld [vmem:[%s1 + $0x164] sm:$0xf]
      %v556 = vld [vmem:[%s1 + $0x168] sm:$0xf]
      %v557 = vld [vmem:[%s1 + $0x16c] sm:$0xf]
      %v558 = vld [vmem:[%s1 + $0x170] sm:$0xf]
      %v559 = vld [vmem:[%s1 + $0x174] sm:$0xf]
      %v560 = vld [vmem:[%s1 + $0x178] sm:$0xf]
      %v561 = vld [vmem:[%s1 + $0x17c] sm:$0xf]
      %v562 = vld [vmem:[%s1 + $0x180] sm:$0xf]
      %v563 = vld [vmem:[%s1 + $0x184] sm:$0xf]
      %v564 = vld [vmem:[%s1 + $0x188] sm:$0xf]
      %v565 = vld [vmem:[%s1 + $0x18c] sm:$0xf]
      %v566 = vld [vmem:[%s1 + $0x190] sm:$0xf]
      %v567 = vld [vmem:[%s1 + $0x194] sm:$0xf]
      %v568 = vld [vmem:[%s1 + $0x198] sm:$0xf]
      %v569 = vld [vmem:[%s1 + $0x19c] sm:$0xf]
      %v570 = vld [vmem:[%s1 + $0x1a0] sm:$0xf]
      %v571 = vld [vmem:[%s1 + $0x1a4] sm:$0xf]
      %v572 = vld [vmem:[%s1 + $0x1a8] sm:$0xf]
      %v573 = vld [vmem:[%s1 + $0x1ac] sm:$0xf]
      %v574 = vld [vmem:[%s1 + $0x1b0] sm:$0xf]
      %v575 = vld [vmem:[%s1 + $0x1b4] sm:$0xf]
      %v576 = vld [vmem:[%s1 + $0x1b8] sm:$0xf]
      %v577 = vld [vmem:[%s1 + $0x1bc] sm:$0xf]
      %v578 = vld [vmem:[%s1 + $0x1c0] sm:$0xf]
      %v579 = vld [vmem:[%s1 + $0x1c4] sm:$0xf]
      %v580 = vld [vmem:[%s1 + $0x1c8] sm:$0xf]
      %v581 = vld [vmem:[%s1 + $0x1cc] sm:$0xf]
      %v582 = vld [vmem:[%s1 + $0x1d0] sm:$0xf]
      %v583 = vld [vmem:[%s1 + $0x1d4] sm:$0xf]
      %v584 = vld [vmem:[%s1 + $0x1d8] sm:$0xf]
      %v585 = vld [vmem:[%s1 + $0x1dc] sm:$0xf]
      %v586 = vld [vmem:[%s1 + $0x1e0] sm:$0xf]
      %v587 = vld [vmem:[%s1 + $0x1e4] sm:$0xf]
      %v588 = vld [vmem:[%s1 + $0x1e8] sm:$0xf]
      %v589 = vld [vmem:[%s1 + $0x1ec] sm:$0xf]
      %v590 = vld [vmem:[%s1 + $0x1f0] sm:$0xf]
      %v591 = vld [vmem:[%s1 + $0x1f4] sm:$0xf]
      %v592 = vld [vmem:[%s1 + $0x1f8] sm:$0xf]
      %v593 = vld [vmem:[%s1 + $0x1fc] sm:$0xf]
      %v594 = vld [vmem:[%s1 + $0x200] sm:$0xf]
      %v595 = vld [vmem:[%s1 + $0x204] sm:$0xf]
      %v596 = vld [vmem:[%s1 + $0x208] sm:$0xf]
      %v597 = vld [vmem:[%s1 + $0x20c] sm:$0xf]
      %v598 = vld [vmem:[%s1 + $0x210] sm:$0xf]
      %v599 = vld [vmem:[%s1 + $0x214] sm:$0xf]
      %v600 = vld [vmem:[%s1 + $0x218] sm:$0xf]
      %v601 = vld [vmem:[%s1 + $0x21c] sm:$0xf]
      %v602 = vld [vmem:[%s1 + $0x220] sm:$0xf]
      %v603 = vld [vmem:[%s1 + $0x224] sm:$0xf]
      %v604 = vld [vmem:[%s1 + $0x228] sm:$0xf]
      %v605 = vld [vmem:[%s1 + $0x22c] sm:$0xf]
      %v606 = vld [vmem:[%s1 + $0x230] sm:$0xf]
      %v607 = vld [vmem:[%s1 + $0x234] sm:$0xf]
      %v608 = vld [vmem:[%s1 + $0x238] sm:$0xf]
      %v609 = vld [vmem:[%s1 + $0x23c] sm:$0xf]
      %v754 = vunpack.c.l.b16 %v466
      %v755 = vunpack.c.l.b16 %v467
      %v756 = vunpack.c.l.b16 %v468
      %v757 = vunpack.c.l.b16 %v469
      %v758 = vunpack.c.l.b16 %v470
      %v759 = vunpack.c.l.b16 %v471
      %v760 = vunpack.c.l.b16 %v472
      %v761 = vunpack.c.l.b16 %v473
      %v762 = vunpack.c.l.b16 %v474
      %v763 = vunpack.c.l.b16 %v475
      %v764 = vunpack.c.l.b16 %v476
      %v765 = vunpack.c.l.b16 %v477
      %v766 = vunpack.c.l.b16 %v478
      %v767 = vunpack.c.l.b16 %v479
      %v768 = vunpack.c.l.b16 %v480
      %v769 = vunpack.c.l.b16 %v481
      %v770 = vunpack.c.l.b16 %v482
      %v771 = vunpack.c.l.b16 %v483
      %v772 = vunpack.c.l.b16 %v484
      %v773 = vunpack.c.l.b16 %v485
      %v774 = vunpack.c.l.b16 %v486
      %v775 = vunpack.c.l.b16 %v487
      %v776 = vunpack.c.l.b16 %v488
      %v777 = vunpack.c.l.b16 %v489
      %v778 = vunpack.c.l.b16 %v490
      %v779 = vunpack.c.l.b16 %v491
      %v780 = vunpack.c.l.b16 %v492
      %v781 = vunpack.c.l.b16 %v493
      %v782 = vunpack.c.l.b16 %v494
      %v783 = vunpack.c.l.b16 %v495
      %v784 = vunpack.c.l.b16 %v496
      %v785 = vunpack.c.l.b16 %v497
      %v786 = vunpack.c.l.b16 %v498
      %v787 = vunpack.c.l.b16 %v499
      %v788 = vunpack.c.l.b16 %v500
      %v789 = vunpack.c.l.b16 %v501
      %v790 = vunpack.c.l.b16 %v502
      %v791 = vunpack.c.l.b16 %v503
      %v792 = vunpack.c.l.b16 %v504
      %v793 = vunpack.c.l.b16 %v505
      %v794 = vunpack.c.l.b16 %v506
      %v795 = vunpack.c.l.b16 %v507
      %v796 = vunpack.c.l.b16 %v508
      %v797 = vunpack.c.l.b16 %v509
      %v798 = vunpack.c.l.b16 %v510
      %v799 = vunpack.c.l.b16 %v511
      %v800 = vunpack.c.l.b16 %v512
      %v801 = vunpack.c.l.b16 %v513
      %v802 = vunpack.c.l.b16 %v514
      %v803 = vunpack.c.l.b16 %v515
      %v804 = vunpack.c.l.b16 %v516
      %v805 = vunpack.c.l.b16 %v517
      %v806 = vunpack.c.l.b16 %v518
      %v807 = vunpack.c.l.b16 %v519
      %v808 = vunpack.c.l.b16 %v520
      %v809 = vunpack.c.l.b16 %v521
      %v810 = vunpack.c.l.b16 %v522
      %v811 = vunpack.c.l.b16 %v523
      %v812 = vunpack.c.l.b16 %v524
      %v813 = vunpack.c.l.b16 %v525
      %v814 = vunpack.c.l.b16 %v526
      %v815 = vunpack.c.l.b16 %v527
      %v816 = vunpack.c.l.b16 %v528
      %v817 = vunpack.c.l.b16 %v529
      %v818 = vunpack.c.l.b16 %v530
      %v819 = vunpack.c.l.b16 %v531
      %v820 = vunpack.c.l.b16 %v532
      %v821 = vunpack.c.l.b16 %v533
      %v822 = vunpack.c.l.b16 %v534
      %v823 = vunpack.c.l.b16 %v535
      %v824 = vunpack.c.l.b16 %v536
      %v825 = vunpack.c.l.b16 %v537
      %v826 = vunpack.c.l.b16 %v538
      %v827 = vunpack.c.l.b16 %v539
      %v828 = vunpack.c.l.b16 %v540
      %v829 = vunpack.c.l.b16 %v541
      %v830 = vunpack.c.l.b16 %v542
      %v831 = vunpack.c.l.b16 %v543
      %v832 = vunpack.c.l.b16 %v544
      %v833 = vunpack.c.l.b16 %v545
      %v834 = vunpack.c.l.b16 %v546
      %v835 = vunpack.c.l.b16 %v547
      %v836 = vunpack.c.l.b16 %v548
      %v837 = vunpack.c.l.b16 %v549
      %v838 = vunpack.c.l.b16 %v550
      %v839 = vunpack.c.l.b16 %v551
      %v840 = vunpack.c.l.b16 %v552
      %v841 = vunpack.c.l.b16 %v553
      %v842 = vunpack.c.l.b16 %v554
      %v843 = vunpack.c.l.b16 %v555
      %v844 = vunpack.c.l.b16 %v556
      %v845 = vunpack.c.l.b16 %v557
      %v846 = vunpack.c.l.b16 %v558
      %v847 = vunpack.c.l.b16 %v559
      %v848 = vunpack.c.l.b16 %v560
      %v849 = vunpack.c.l.b16 %v561
      %v850 = vunpack.c.l.b16 %v562
      %v851 = vunpack.c.l.b16 %v563
      %v852 = vunpack.c.l.b16 %v564
      %v853 = vunpack.c.l.b16 %v565
      %v854 = vunpack.c.l.b16 %v566
      %v855 = vunpack.c.l.b16 %v567
      %v856 = vunpack.c.l.b16 %v568
      %v857 = vunpack.c.l.b16 %v569
      %v858 = vunpack.c.l.b16 %v570
      %v859 = vunpack.c.l.b16 %v571
      %v860 = vunpack.c.l.b16 %v572
      %v861 = vunpack.c.l.b16 %v573
      %v862 = vunpack.c.l.b16 %v574
      %v863 = vunpack.c.l.b16 %v575
      %v864 = vunpack.c.l.b16 %v576
      %v865 = vunpack.c.l.b16 %v577
      %v866 = vunpack.c.l.b16 %v578
      %v867 = vunpack.c.l.b16 %v579
      %v868 = vunpack.c.l.b16 %v580
      %v869 = vunpack.c.l.b16 %v581
      %v870 = vunpack.c.l.b16 %v582
      %v871 = vunpack.c.l.b16 %v583
      %v872 = vunpack.c.l.b16 %v584
      %v873 = vunpack.c.l.b16 %v585
      %v874 = vunpack.c.l.b16 %v586
      %v875 = vunpack.c.l.b16 %v587
      %v876 = vunpack.c.l.b16 %v588
      %v877 = vunpack.c.l.b16 %v589
      %v878 = vunpack.c.l.b16 %v590
      %v879 = vunpack.c.l.b16 %v591
      %v880 = vunpack.c.l.b16 %v592
      %v881 = vunpack.c.l.b16 %v593
      %v882 = vunpack.c.l.b16 %v594
      %v883 = vunpack.c.l.b16 %v595
      %v884 = vunpack.c.l.b16 %v596
      %v885 = vunpack.c.l.b16 %v597
      %v886 = vunpack.c.l.b16 %v598
      %v887 = vunpack.c.l.b16 %v599
      %v888 = vunpack.c.l.b16 %v600
      %v889 = vunpack.c.l.b16 %v601
      %v890 = vunpack.c.l.b16 %v602
      %v891 = vunpack.c.l.b16 %v603
      %v892 = vunpack.c.l.b16 %v604
      %v893 = vunpack.c.l.b16 %v605
      %v894 = vunpack.c.l.b16 %v606
      %v895 = vunpack.c.l.b16 %v607
      %v896 = vunpack.c.l.b16 %v608
      %v897 = vunpack.c.l.b16 %v609
      %v898 = vpack.c.b16 %v755, %v754
      %v899 = vpack.c.b16 %v757, %v756
      %v900 = vpack.c.b16 %v759, %v758
      %v901 = vpack.c.b16 %v761, %v760
      %v902 = vpack.c.b16 %v763, %v762
      %v903 = vpack.c.b16 %v765, %v764
      %v904 = vpack.c.b16 %v767, %v766
      %v905 = vpack.c.b16 %v769, %v768
      %v906 = vpack.c.b16 %v771, %v770
      %v907 = vpack.c.b16 %v773, %v772
      %v908 = vpack.c.b16 %v775, %v774
      %v909 = vpack.c.b16 %v777, %v776
      %v910 = vpack.c.b16 %v779, %v778
      %v911 = vpack.c.b16 %v781, %v780
      %v912 = vpack.c.b16 %v783, %v782
      %v913 = vpack.c.b16 %v785, %v784
      %v914 = vpack.c.b16 %v787, %v786
      %v915 = vpack.c.b16 %v789, %v788
      %v916 = vpack.c.b16 %v791, %v790
      %v917 = vpack.c.b16 %v793, %v792
      %v918 = vpack.c.b16 %v795, %v794
      %v919 = vpack.c.b16 %v797, %v796
      %v920 = vpack.c.b16 %v799, %v798
      %v921 = vpack.c.b16 %v801, %v800
      %v922 = vpack.c.b16 %v803, %v802
      %v923 = vpack.c.b16 %v805, %v804
      %v924 = vpack.c.b16 %v807, %v806
      %v925 = vpack.c.b16 %v809, %v808
      %v926 = vpack.c.b16 %v811, %v810
      %v927 = vpack.c.b16 %v813, %v812
      %v928 = vpack.c.b16 %v815, %v814
      %v929 = vpack.c.b16 %v817, %v816
      %v930 = vpack.c.b16 %v819, %v818
      %v931 = vpack.c.b16 %v821, %v820
      %v932 = vpack.c.b16 %v823, %v822
      %v933 = vpack.c.b16 %v825, %v824
      %v934 = vpack.c.b16 %v827, %v826
      %v935 = vpack.c.b16 %v829, %v828
      %v936 = vpack.c.b16 %v831, %v830
      %v937 = vpack.c.b16 %v833, %v832
      %v938 = vpack.c.b16 %v835, %v834
      %v939 = vpack.c.b16 %v837, %v836
      %v940 = vpack.c.b16 %v839, %v838
      %v941 = vpack.c.b16 %v841, %v840
      %v942 = vpack.c.b16 %v843, %v842
      %v943 = vpack.c.b16 %v845, %v844
      %v944 = vpack.c.b16 %v847, %v846
      %v945 = vpack.c.b16 %v849, %v848
      %v946 = vpack.c.b16 %v851, %v850
      %v947 = vpack.c.b16 %v853, %v852
      %v948 = vpack.c.b16 %v855, %v854
      %v949 = vpack.c.b16 %v857, %v856
      %v950 = vpack.c.b16 %v859, %v858
      %v951 = vpack.c.b16 %v861, %v860
      %v952 = vpack.c.b16 %v863, %v862
      %v953 = vpack.c.b16 %v865, %v864
      %v954 = vpack.c.b16 %v867, %v866
      %v955 = vpack.c.b16 %v869, %v868
      %v956 = vpack.c.b16 %v871, %v870
      %v957 = vpack.c.b16 %v873, %v872
      %v958 = vpack.c.b16 %v875, %v874
      %v959 = vpack.c.b16 %v877, %v876
      %v960 = vpack.c.b16 %v879, %v878
      %v961 = vpack.c.b16 %v881, %v880
      %v962 = vpack.c.b16 %v883, %v882
      %v963 = vpack.c.b16 %v885, %v884
      %v964 = vpack.c.b16 %v887, %v886
      %v965 = vpack.c.b16 %v889, %v888
      %v966 = vpack.c.b16 %v891, %v890
      %v967 = vpack.c.b16 %v893, %v892
      %v968 = vpack.c.b16 %v895, %v894
      %v969 = vpack.c.b16 %v897, %v896
      %1042 = vmatprep.subr.bf16.mxu0 0
      %1043 = vmatpush1.bf16.msra.mxu0 %v898
      %1044 = vmatprep.subr.bf16.mxu0 0
      %1045 = vmatpush1.bf16.msra.mxu0 %v899
      %1046 = vmatprep.subr.bf16.mxu0 0
      %1047 = vmatpush1.bf16.msra.mxu0 %v900
      %1048 = vmatprep.subr.bf16.mxu0 0
      %1049 = vmatpush1.bf16.msra.mxu0 %v901
      %1050 = vmatprep.subr.bf16.mxu0 0
      %1051 = vmatpush1.bf16.msra.mxu0 %v902
      %1052 = vmatprep.subr.bf16.mxu0 0
      %1053 = vmatpush1.bf16.msra.mxu0 %v903
      %1054 = vmatprep.subr.bf16.mxu0 0
      %1055 = vmatpush1.bf16.msra.mxu0 %v904
      %1056 = vmatprep.subr.bf16.mxu0 0
      %1057 = vmatpush1.bf16.msra.mxu0 %v905
      %1058 = vmatprep.subr.bf16.mxu0 0
      %1059 = vmatpush1.bf16.msra.mxu0 %v906
      %1060 = vmatprep.subr.bf16.mxu0 0
      %1061 = vmatpush1.bf16.msra.mxu0 %v907
      %1062 = vmatprep.subr.bf16.mxu0 0
      %1063 = vmatpush1.bf16.msra.mxu0 %v908
      %1064 = vmatprep.subr.bf16.mxu0 0
      %1065 = vmatpush1.bf16.msra.mxu0 %v909
      %1066 = vmatprep.subr.bf16.mxu0 0
      %1067 = vmatpush1.bf16.msra.mxu0 %v910
      %1068 = vmatprep.subr.bf16.mxu0 0
      %1069 = vmatpush1.bf16.msra.mxu0 %v911
      %1070 = vmatprep.subr.bf16.mxu0 0
      %1071 = vmatpush1.bf16.msra.mxu0 %v912
      %1072 = vmatprep.subr.bf16.mxu0 0
      %1073 = vmatpush1.bf16.msra.mxu0 %v913
      %1074 = vmatprep.mubr.bf16.mxu0 %v440
      %1075 = vmatmul.mubr.bf16.gmra.mrb[0].mxu0 %v439
      %v1076 = vpop.f32.mrb[0].mxu0
      %v1077 = vadd.f32 0.0, %v1076
      %v1078 = vpop.f32.mrb[0].mxu0
      %v1079 = vpop.f32.mrb[0].mxu0
      %v1080 = vadd.f32 0.0, %v1079
      %v1081 = vpop.f32.mrb[0].mxu0
      %1082 = vmatprep.mubr.bf16.mxu0 %v446
      %1083 = vmatmul.mubr.bf16.gmra.mrb[0].mxu0 %v445
      %v1084 = vpop.f32.mrb[0].mxu0
      %v1085 = vadd.f32 0.0, %v1084
      %v1086 = vpop.f32.mrb[0].mxu0
      %v1087 = vpop.f32.mrb[0].mxu0
      %v1088 = vadd.f32 0.0, %v1087
      %v1089 = vpop.f32.mrb[0].mxu0
      %1090 = vmatprep.mubr.bf16.mxu0 %v452
      %1091 = vmatmul.mubr.bf16.gmra.mrb[0].mxu0 %v451
      %v1092 = vpop.f32.mrb[0].mxu0
      %v1093 = vadd.f32 0.0, %v1092
      %v1094 = vpop.f32.mrb[0].mxu0
      %v1095 = vpop.f32.mrb[0].mxu0
      %v1096 = vadd.f32 0.0, %v1095
      %v1097 = vpop.f32.mrb[0].mxu0
      %1098 = vmatprep.mubr.bf16.mxu0 %v458
      %1099 = vmatmul.mubr.bf16.gmra.mrb[0].mxu0 %v457
      %v1100 = vpop.f32.mrb[0].mxu0
      %v1101 = vadd.f32 0.0, %v1100
      %v1102 = vpop.f32.mrb[0].mxu0
      %v1103 = vpop.f32.mrb[0].mxu0
      %v1104 = vadd.f32 0.0, %v1103
      %v1105 = vpop.f32.mrb[0].mxu0
      %1106 = vdwg.mxu0
      %1107 = vmatprep.subr.bf16.mxu0 0
      %1108 = vmatpush1.bf16.msra.mxu0 %v914
      %1109 = vmatprep.subr.bf16.mxu0 0
      %1110 = vmatpush1.bf16.msra.mxu0 %v915
      %1111 = vmatprep.subr.bf16.mxu0 0
      %1112 = vmatpush1.bf16.msra.mxu0 %v916
      %1113 = vmatprep.subr.bf16.mxu0 0
      %1114 = vmatpush1.bf16.msra.mxu0 %v917
      %1115 = vmatprep.subr.bf16.mxu0 0
      %1116 = vmatpush1.bf16.msra.mxu0 %v918
      %1117 = vmatprep.subr.bf16.mxu0 0
      %1118 = vmatpush1.bf16.msra.mxu0 %v919
      %1119 = vmatprep.subr.bf16.mxu0 0
      %1120 = vmatpush1.bf16.msra.mxu0 %v920
      %1121 = vmatprep.subr.bf16.mxu0 0
      %1122 = vmatpush1.bf16.msra.mxu0 %v921
      %1123 = vmatprep.subr.bf16.mxu0 0
      %1124 = vmatpush1.bf16.msra.mxu0 %v922
      %1125 = vmatprep.subr.bf16.mxu0 0
      %1126 = vmatpush1.bf16.msra.mxu0 %v923
      %1127 = vmatprep.subr.bf16.mxu0 0
      %1128 = vmatpush1.bf16.msra.mxu0 %v924
      %1129 = vmatprep.subr.bf16.mxu0 0
      %1130 = vmatpush1.bf16.msra.mxu0 %v925
      %1131 = vmatprep.subr.bf16.mxu0 0
      %1132 = vmatpush1.bf16.msra.mxu0 %v926
      %1133 = vmatprep.subr.bf16.mxu0 0
      %1134 = vmatpush1.bf16.msra.mxu0 %v927
      %1135 = vmatprep.subr.bf16.mxu0 0
      %1136 = vmatpush1.bf16.msra.mxu0 %v928
      %1137 = vmatprep.subr.bf16.mxu0 0
      %1138 = vmatpush1.bf16.msra.mxu0 %v929
      %1139 = vmatprep.mubr.bf16.mxu0 %v442
      %1140 = vmatmul.mubr.bf16.gmra.mrb[0].mxu0 %v441
      %v1141 = vpop.f32.mrb[0].mxu0
      %v1142 = vadd.f32 %v1077, %v1141
      %v1143 = vpop.f32.mrb[0].mxu0
      %v1144 = vpop.f32.mrb[0].mxu0
      %v1145 = vadd.f32 %v1080, %v1144
      %v1146 = vpop.f32.mrb[0].mxu0
      %1147 = vmatprep.mubr.bf16.mxu0 %v448
      %1148 = vmatmul.mubr.bf16.gmra.mrb[0].mxu0 %v447
      %v1149 = vpop.f32.mrb[0].mxu0
      %v1150 = vadd.f32 %v1085, %v1149
      %v1151 = vpop.f32.mrb[0].mxu0
      %v1152 = vpop.f32.mrb[0].mxu0
      %v1153 = vadd.f32 %v1088, %v1152
      %v1154 = vpop.f32.mrb[0].mxu0
      %1155 = vmatprep.mubr.bf16.mxu0 %v454
      %1156 = vmatmul.mubr.bf16.gmra.mrb[0].mxu0 %v453
      %v1157 = vpop.f32.mrb[0].mxu0
      %v1158 = vadd.f32 %v1093, %v1157
      %v1159 = vpop.f32.mrb[0].mxu0
      %v1160 = vpop.f32.mrb[0].mxu0
      %v1161 = vadd.f32 %v1096, %v1160
      %v1162 = vpop.f32.mrb[0].mxu0
      %1163 = vmatprep.mubr.bf16.mxu0 %v460
      %1164 = vmatmul.mubr.bf16.gmra.mrb[0].mxu0 %v459
      %v1165 = vpop.f32.mrb[0].mxu0
      %v1166 = vadd.f32 %v1101, %v1165
      %v1167 = vpop.f32.mrb[0].mxu0
      %v1168 = vpop.f32.mrb[0].mxu0
      %v1169 = vadd.f32 %v1104, %v1168
      %v1170 = vpop.f32.mrb[0].mxu0
      %1171 = vdwg.mxu0
      %1172 = vmatprep.subr.bf16.mxu0 0
      %1173 = vmatpush1.bf16.msra.mxu0 %v930
      %1174 = vmatprep.subr.bf16.mxu0 0
      %1175 = vmatpush1.bf16.msra.mxu0 %v931
      %1176 = vmatprep.subr.bf16.mxu0 0
      %1177 = vmatpush1.bf16.msra.mxu0 %v932
      %1178 = vmatprep.subr.bf16.mxu0 0
      %1179 = vmatpush1.bf16.msra.mxu0 %v933
      %1180 = vmatprep.subr.bf16.mxu0 0
      %1181 = vmatpush1.bf16.msra.mxu0 %v934
      %1182 = vmatprep.subr.bf16.mxu0 0
      %1183 = vmatpush1.bf16.msra.mxu0 %v935
      %1184 = vmatprep.subr.bf16.mxu0 0
      %1185 = vmatpush1.bf16.msra.mxu0 %v936
      %1186 = vmatprep.subr.bf16.mxu0 0
      %1187 = vmatpush1.bf16.msra.mxu0 %v937
      %1188 = vmatprep.subr.bf16.mxu0 0
      %1189 = vmatpush1.bf16.msra.mxu0 %v938
      %1190 = vmatprep.subr.bf16.mxu0 0
      %1191 = vmatpush1.bf16.msra.mxu0 %v939
      %1192 = vmatprep.subr.bf16.mxu0 0
      %1193 = vmatpush1.bf16.msra.mxu0 %v940
      %1194 = vmatprep.subr.bf16.mxu0 0
      %1195 = vmatpush1.bf16.msra.mxu0 %v941
      %1196 = vmatprep.subr.bf16.mxu0 0
      %1197 = vmatpush1.bf16.msra.mxu0 %v942
      %1198 = vmatprep.subr.bf16.mxu0 0
      %1199 = vmatpush1.bf16.msra.mxu0 %v943
      %1200 = vmatprep.subr.bf16.mxu0 0
      %1201 = vmatpush1.bf16.msra.mxu0 %v944
      %1202 = vmatprep.subr.bf16.mxu0 0
      %1203 = vmatpush1.bf16.msra.mxu0 %v945
      %1204 = vmatprep.mubr.bf16.mxu0 %v444
      %1205 = vmatmul.mubr.bf16.gmra.mrb[0].mxu0 %v443
      %v1206 = vpop.f32.mrb[0].mxu0
      %v1207 = vadd.f32 %v1142, %v1206
      %v1208 = vpop.f32.mrb[0].mxu0
      %v1209 = vpop.f32.mrb[0].mxu0
      %v1210 = vadd.f32 %v1145, %v1209
      %v1211 = vpop.f32.mrb[0].mxu0
      %1212 = vmatprep.mubr.bf16.mxu0 %v450
      %1213 = vmatmul.mubr.bf16.gmra.mrb[0].mxu0 %v449
      %v1214 = vpop.f32.mrb[0].mxu0
      %v1215 = vadd.f32 %v1150, %v1214
      %v1216 = vpop.f32.mrb[0].mxu0
      %v1217 = vpop.f32.mrb[0].mxu0
      %v1218 = vadd.f32 %v1153, %v1217
      %v1219 = vpop.f32.mrb[0].mxu0
      %1220 = vmatprep.mubr.bf16.mxu0 %v456
      %1221 = vmatmul.mubr.bf16.gmra.mrb[0].mxu0 %v455
      %v1222 = vpop.f32.mrb[0].mxu0
      %v1223 = vadd.f32 %v1158, %v1222
      %v1224 = vpop.f32.mrb[0].mxu0
      %v1225 = vpop.f32.mrb[0].mxu0
      %v1226 = vadd.f32 %v1161, %v1225
      %v1227 = vpop.f32.mrb[0].mxu0
      %1228 = vmatprep.mubr.bf16.mxu0 %v462
      %1229 = vmatmul.mubr.bf16.gmra.mrb[0].mxu0 %v461
      %v1230 = vpop.f32.mrb[0].mxu0
      %v1231 = vadd.f32 %v1166, %v1230
      %v1232 = vpop.f32.mrb[0].mxu0
      %v1233 = vpop.f32.mrb[0].mxu0
      %v1234 = vadd.f32 %v1169, %v1233
      %v1235 = vpop.f32.mrb[0].mxu0
      %1236 = vdwg.mxu0
      %1237 = vmatprep.subr.bf16.mxu0 0
      %1238 = vmatpush1.bf16.msra.mxu0 %v946
      %1239 = vmatprep.subr.bf16.mxu0 0
      %1240 = vmatpush1.bf16.msra.mxu0 %v947
      %1241 = vmatprep.subr.bf16.mxu0 0
      %1242 = vmatpush1.bf16.msra.mxu0 %v948
      %1243 = vmatprep.subr.bf16.mxu0 0
      %1244 = vmatpush1.bf16.msra.mxu0 %v949
      %1245 = vmatprep.subr.bf16.mxu0 0
      %1246 = vmatpush1.bf16.msra.mxu0 %v950
      %1247 = vmatprep.subr.bf16.mxu0 0
      %1248 = vmatpush1.bf16.msra.mxu0 %v951
      %1249 = vmatprep.subr.bf16.mxu0 0
      %1250 = vmatpush1.bf16.msra.mxu0 %v952
      %1251 = vmatprep.subr.bf16.mxu0 0
      %1252 = vmatpush1.bf16.msra.mxu0 %v953
      %1253 = vmatprep.subr.bf16.mxu0 0
      %1254 = vmatpush1.bf16.msra.mxu0 %v954
      %1255 = vmatprep.subr.bf16.mxu0 0
      %1256 = vmatpush1.bf16.msra.mxu0 %v955
      %1257 = vmatprep.subr.bf16.mxu0 0
      %1258 = vmatpush1.bf16.msra.mxu0 %v956
      %1259 = vmatprep.subr.bf16.mxu0 0
      %1260 = vmatpush1.bf16.msra.mxu0 %v957
      %1261 = vmatprep.subr.bf16.mxu0 0
      %1262 = vmatpush1.bf16.msra.mxu0 %v958
      %1263 = vmatprep.subr.bf16.mxu0 0
      %1264 = vmatpush1.bf16.msra.mxu0 %v959
      %1265 = vmatprep.subr.bf16.mxu0 0
      %1266 = vmatpush1.bf16.msra.mxu0 %v960
      %1267 = vmatprep.subr.bf16.mxu0 0
      %1268 = vmatpush1.bf16.msra.mxu0 %v961
      %1269 = vmatprep.mubr.bf16.mxu0 %v446
      %1270 = vmatmul.mubr.bf16.gmra.mrb[0].mxu0 %v445
      %v1271 = vpop.f32.mrb[0].mxu0
      %v1272 = vadd.f32 %v1207, %v1271
      %v1273 = vpop.f32.mrb[0].mxu0
      %v1274 = vpop.f32.mrb[0].mxu0
      %v1275 = vadd.f32 %v1210, %v1274
      %v1276 = vpop.f32.mrb[0].mxu0
      %1277 = vmatprep.mubr.bf16.mxu0 %v452
      %1278 = vmatmul.mubr.bf16.gmra.mrb[0].mxu0 %v451
      %v1279 = vpop.f32.mrb[0].mxu0
      %v1280 = vadd.f32 %v1215, %v1279
      %v1281 = vpop.f32.mrb[0].mxu0
      %v1282 = vpop.f32.mrb[0].mxu0
      %v1283 = vadd.f32 %v1218, %v1282
      %v1284 = vpop.f32.mrb[0].mxu0
      %1285 = vmatprep.mubr.bf16.mxu0 %v458
      %1286 = vmatmul.mubr.bf16.gmra.mrb[0].mxu0 %v457
      %v1287 = vpop.f32.mrb[0].mxu0
      %v1288 = vadd.f32 %v1223, %v1287
      %v1289 = vpop.f32.mrb[0].mxu0
      %v1290 = vpop.f32.mrb[0].mxu0
      %v1291 = vadd.f32 %v1226, %v1290
      %v1292 = vpop.f32.mrb[0].mxu0
      %1293 = vmatprep.mubr.bf16.mxu0 %v464
      %1294 = vmatmul.mubr.bf16.gmra.mrb[0].mxu0 %v463
      %v1295 = vpop.f32.mrb[0].mxu0
      %v1296 = vadd.f32 %v1231, %v1295
      %v1297 = vpop.f32.mrb[0].mxu0
      %v1298 = vpop.f32.mrb[0].mxu0
      %v1299 = vadd.f32 %v1234, %v1298
      %v1300 = vpop.f32.mrb[0].mxu0
      %1301 = vdwg.mxu0
      %1302 = vmatprep.subr.bf16.mxu0 0
      %1303 = vmatpush1.bf16.msra.mxu0 %v962
      %1304 = vmatprep.subr.bf16.mxu0 0
      %1305 = vmatpush1.bf16.msra.mxu0 %v963
      %1306 = vmatprep.subr.bf16.mxu0 0
      %1307 = vmatpush1.bf16.msra.mxu0 %v964
      %1308 = vmatprep.subr.bf16.mxu0 0
      %1309 = vmatpush1.bf16.msra.mxu0 %v965
      %1310 = vmatprep.subr.bf16.mxu0 0
      %1311 = vmatpush1.bf16.msra.mxu0 %v966
      %1312 = vmatprep.subr.bf16.mxu0 0
      %1313 = vmatpush1.bf16.msra.mxu0 %v967
      %1314 = vmatprep.subr.bf16.mxu0 0
      %1315 = vmatpush1.bf16.msra.mxu0 %v968
      %1316 = vmatprep.subr.bf16.mxu0 0
      %1317 = vmatpush1.bf16.msra.mxu0 %v969
      %1318 = vmatprep.subr.bf16.mxu0 0
      %1319 = vmatpush1.bf16.msra.mxu0 0
      %1320 = vmatprep.subr.bf16.mxu0 0
      %1321 = vmatpush1.bf16.msra.mxu0 0
      %1322 = vmatprep.subr.bf16.mxu0 0
      %1323 = vmatpush1.bf16.msra.mxu0 0
      %1324 = vmatprep.subr.bf16.mxu0 0
      %1325 = vmatpush1.bf16.msra.mxu0 0
      %1326 = vmatprep.subr.bf16.mxu0 0
      %1327 = vmatpush1.bf16.msra.mxu0 0
      %1328 = vmatprep.subr.bf16.mxu0 0
      %1329 = vmatpush1.bf16.msra.mxu0 0
      %1330 = vmatprep.subr.bf16.mxu0 0
      %1331 = vmatpush1.bf16.msra.mxu0 0
      %1332 = vmatprep.subr.bf16.mxu0 0
      %1333 = vmatpush1.bf16.msra.mxu0 0
      %1334 = vmatprep.mubr.bf16.mxu0 0
      %1335 = vmatmul.mubr.bf16.gmra.mrb[0].mxu0 %v447
      %v1336 = vpop.f32.mrb[0].mxu0
      %v1337 = vadd.f32 %v1272, %v1336
      %v1338 = vpop.f32.mrb[0].mxu0
      %v1339 = vpop.f32.mrb[0].mxu0
      %v1340 = vadd.f32 %v1275, %v1339
      %v1341 = vpop.f32.mrb[0].mxu0
      %1342 = vmatprep.mubr.bf16.mxu0 0
      %1343 = vmatmul.mubr.bf16.gmra.mrb[0].mxu0 %v453
      %v1344 = vpop.f32.mrb[0].mxu0
      %v1345 = vadd.f32 %v1280, %v1344
      %v1346 = vpop.f32.mrb[0].mxu0
      %v1347 = vpop.f32.mrb[0].mxu0
      %v1348 = vadd.f32 %v1283, %v1347
      %v1349 = vpop.f32.mrb[0].mxu0
      %1350 = vmatprep.mubr.bf16.mxu0 0
      %1351 = vmatmul.mubr.bf16.gmra.mrb[0].mxu0 %v459
      %v1352 = vpop.f32.mrb[0].mxu0
      %v1353 = vadd.f32 %v1288, %v1352
      %v1354 = vpop.f32.mrb[0].mxu0
      %v1355 = vpop.f32.mrb[0].mxu0
      %v1356 = vadd.f32 %v1291, %v1355
      %v1357 = vpop.f32.mrb[0].mxu0
      %1358 = vmatprep.mubr.bf16.mxu0 0
      %1359 = vmatmul.mubr.bf16.gmra.mrb[0].mxu0 %v465
      %v1360 = vpop.f32.mrb[0].mxu0
      %v1361 = vadd.f32 %v1296, %v1360
      %v1362 = vpop.f32.mrb[0].mxu0
      %v1363 = vpop.f32.mrb[0].mxu0
      %v1364 = vadd.f32 %v1299, %v1363
      %v1365 = vpop.f32.mrb[0].mxu0
      %1366 = vdwg.mxu0
      %v1367 = vld [vmem:[%s2] sm:$0x1]
      %v1369 = vlaneseq
      %v1370 = vshrl.u32 %v1369, 7
      %v1371 = vsub.s32 0, %v1370
      %v1372 = vrot.slane %v1367, %v1371
      %v1374 = vmul.f32 %v1337, %v1372
      %v1375 = vmul.f32 %v1340, %v1372
      %v1376 = vmul.f32 %v1345, %v1372
      %v1377 = vmul.f32 %v1348, %v1372
      %v1378 = vmul.f32 %v1353, %v1372
      %v1379 = vmul.f32 %v1356, %v1372
      %v1380 = vmul.f32 %v1361, %v1372
      %v1381 = vmul.f32 %v1364, %v1372
      %v1382 = vld [vmem:[%s3] sm:$0x1]
      %v1384 = vlaneseq
      %v1385 = vshrl.u32 %v1384, 7
      %v1386 = vsub.s32 0, %v1385
      %v1387 = vrot.slane %v1382, %v1386
      %v1389 = vadd.f32 %v1374, %v1387
      %v1390 = vadd.f32 %v1375, %v1387
      %v1391 = vadd.f32 %v1376, %v1387
      %v1392 = vadd.f32 %v1377, %v1387
      %v1393 = vadd.f32 %v1378, %v1387
      %v1394 = vadd.f32 %v1379, %v1387
      %v1395 = vadd.f32 %v1380, %v1387
      %v1396 = vadd.f32 %v1381, %v1387
      %v1397 = vmax.f32 %v1389, 0.0
      %v1398 = vmax.f32 %v1390, 0.0
      %v1399 = vmax.f32 %v1391, 0.0
      %v1400 = vmax.f32 %v1392, 0.0
      %v1401 = vmax.f32 %v1393, 0.0
      %v1402 = vmax.f32 %v1394, 0.0
      %v1403 = vmax.f32 %v1395, 0.0
      %v1404 = vmax.f32 %v1396, 0.0
      %1405 = vst [vmem:[#allocation3] sm:$0xff] 0.0
      %1406 = vst [vmem:[#allocation3 + $0x8] sm:$0x3] 0.0
      %1407 = vst [vmem:[#allocation3 + $0x10] sm:$0xff] 0.0
      %1408 = vst [vmem:[#allocation3 + $0x18] sm:$0x3] 0.0
      %1409 = vst [vmem:[#allocation3 + $0x20] sm:$0xff] 0.0
      %1410 = vst [vmem:[#allocation3 + $0x28] sm:$0x3] 0.0
      %1411 = vst [vmem:[#allocation3 + $0x30] sm:$0xff] 0.0
      %1412 = vst [vmem:[#allocation3 + $0x38] sm:$0x3] 0.0
      %1413 = vst [vmem:[#allocation3 + $0x40] sm:$0xff] 0.0
      %1414 = vst [vmem:[#allocation3 + $0x48] sm:$0x3] 0.0
      %1415 = vst [vmem:[#allocation3 + $0x50] sm:$0xff] 0.0
      %1416 = vst [vmem:[#allocation3 + $0x58] sm:$0x3] 0.0
      %1417 = vst [vmem:[#allocation3 + $0x60] sm:$0xff] 0.0
      %1418 = vst [vmem:[#allocation3 + $0x68] sm:$0x3] 0.0
      %1419 = vst [vmem:[#allocation3 + $0x70] sm:$0xff] 0.0
      %1420 = vst [vmem:[#allocation3 + $0x78] sm:$0x3] 0.0
      %1421 = vst [vmem:[#allocation3 + $0x80] sm:$0xff] 0.0
      %1422 = vst [vmem:[#allocation3 + $0x88] sm:$0x3] 0.0
      %1423 = vst [vmem:[#allocation3 + $0x90] sm:$0xff] 0.0
      %1424 = vst [vmem:[#allocation3 + $0x98] sm:$0x3] 0.0
      %s1425 = scalar_lea.vmem [#allocation3], 16
      %1426 = vst [vmem:[%s1425 + $0x1] sm:$0xff] %v1397
      %1427 = vst [vmem:[%s1425 + $0x11] sm:$0xff] %v1398
      %1428 = vst [vmem:[%s1425 + $0x21] sm:$0xff] %v1399
      %1429 = vst [vmem:[%s1425 + $0x31] sm:$0xff] %v1400
      %1430 = vst [vmem:[%s1425 + $0x41] sm:$0xff] %v1401
      %1431 = vst [vmem:[%s1425 + $0x51] sm:$0xff] %v1402
      %1432 = vst [vmem:[%s1425 + $0x61] sm:$0xff] %v1403
      %1433 = vst [vmem:[%s1425 + $0x71] sm:$0xff] %v1404
      %v1434 = vld [vmem:[#allocation3] sm:$0xff]
      %v1435 = vld [vmem:[#allocation3 + $0x8] sm:$0x3]
      %v1436 = vld [vmem:[#allocation3 + $0x10] sm:$0xff]
      %v1437 = vld [vmem:[#allocation3 + $0x18] sm:$0x3]
      %v1438 = vld [vmem:[#allocation3 + $0x20] sm:$0xff]
      %v1439 = vld [vmem:[#allocation3 + $0x28] sm:$0x3]
      %v1440 = vld [vmem:[#allocation3 + $0x30] sm:$0xff]
      %v1441 = vld [vmem:[#allocation3 + $0x38] sm:$0x3]
      %v1442 = vld [vmem:[#allocation3 + $0x40] sm:$0xff]
      %v1443 = vld [vmem:[#allocation3 + $0x48] sm:$0x3]
      %v1444 = vld [vmem:[#allocation3 + $0x50] sm:$0xff]
      %v1445 = vld [vmem:[#allocation3 + $0x58] sm:$0x3]
      %v1446 = vld [vmem:[#allocation3 + $0x60] sm:$0xff]
      %v1447 = vld [vmem:[#allocation3 + $0x68] sm:$0x3]
      %v1448 = vld [vmem:[#allocation3 + $0x70] sm:$0xff]
      %v1449 = vld [vmem:[#allocation3 + $0x78] sm:$0x3]
      %v1450 = vld [vmem:[#allocation3 + $0x80] sm:$0xff]
      %v1451 = vld [vmem:[#allocation3 + $0x88] sm:$0x3]
      %v1452 = vld [vmem:[#allocation3 + $0x90] sm:$0xff]
      %v1453 = vld [vmem:[#allocation3 + $0x98] sm:$0x3]
      %v1470 = vrot.slane %v1434, 1
      %v1471 = vrot.slane %v1435, 1
      %v1472 = vsel %vm353, %v1470, %v1471
      %v1473 = vrot.slane %v1436, 1
      %v1474 = vrot.slane %v1437, 1
      %v1475 = vsel %vm353, %v1473, %v1474
      %v1476 = vrot.slane %v1438, 1
      %v1477 = vrot.slane %v1439, 1
      %v1478 = vsel %vm353, %v1476, %v1477
      %v1479 = vrot.slane %v1440, 1
      %v1480 = vrot.slane %v1441, 1
      %v1481 = vsel %vm353, %v1479, %v1480
      %v1482 = vrot.slane %v1442, 1
      %v1483 = vrot.slane %v1443, 1
      %v1484 = vsel %vm353, %v1482, %v1483
      %v1485 = vrot.slane %v1444, 1
      %v1486 = vrot.slane %v1445, 1
      %v1487 = vsel %vm353, %v1485, %v1486
      %v1488 = vrot.slane %v1446, 1
      %v1489 = vrot.slane %v1447, 1
      %v1490 = vsel %vm353, %v1488, %v1489
      %v1491 = vrot.slane %v1448, 1
      %v1492 = vrot.slane %v1449, 1
      %v1493 = vsel %vm353, %v1491, %v1492
      %v1502 = vrot.slane %v1434, 2
      %v1503 = vrot.slane %v1435, 2
      %v1504 = vsel %vm386, %v1502, %v1503
      %v1505 = vrot.slane %v1436, 2
      %v1506 = vrot.slane %v1437, 2
      %v1507 = vsel %vm386, %v1505, %v1506
      %v1508 = vrot.slane %v1438, 2
      %v1509 = vrot.slane %v1439, 2
      %v1510 = vsel %vm386, %v1508, %v1509
      %v1511 = vrot.slane %v1440, 2
      %v1512 = vrot.slane %v1441, 2
      %v1513 = vsel %vm386, %v1511, %v1512
      %v1514 = vrot.slane %v1442, 2
      %v1515 = vrot.slane %v1443, 2
      %v1516 = vsel %vm386, %v1514, %v1515
      %v1517 = vrot.slane %v1444, 2
      %v1518 = vrot.slane %v1445, 2
      %v1519 = vsel %vm386, %v1517, %v1518
      %v1520 = vrot.slane %v1446, 2
      %v1521 = vrot.slane %v1447, 2
      %v1522 = vsel %vm386, %v1520, %v1521
      %v1523 = vrot.slane %v1448, 2
      %v1524 = vrot.slane %v1449, 2
      %v1525 = vsel %vm386, %v1523, %v1524
      %v1536 = vrot.slane %v1450, 1
      %v1537 = vrot.slane %v1451, 1
      %v1538 = vsel %vm353, %v1536, %v1537
      %v1540 = vrot.slane %v1450, 2
      %v1541 = vrot.slane %v1451, 2
      %v1542 = vsel %vm386, %v1540, %v1541
      %v1546 = vrot.slane %v1452, 1
      %v1547 = vrot.slane %v1453, 1
      %v1548 = vsel %vm353, %v1546, %v1547
      %v1550 = vrot.slane %v1452, 2
      %v1551 = vrot.slane %v1453, 2
      %v1552 = vsel %vm386, %v1550, %v1551
      %v1554 = vpack.c.bf16 %v1436, %v1434
      %v1555 = vpack.c.bf16 %v1475, %v1472
      %v1556 = vpack.c.bf16 %v1507, %v1504
      %v1557 = vpack.c.bf16 %v1438, %v1436
      %v1558 = vpack.c.bf16 %v1478, %v1475
      %v1559 = vpack.c.bf16 %v1510, %v1507
      %v1560 = vpack.c.bf16 %v1440, %v1438
      %v1561 = vpack.c.bf16 %v1481, %v1478
      %v1562 = vpack.c.bf16 %v1513, %v1510
      %v1563 = vpack.c.bf16 %v1442, %v1440
      %v1564 = vpack.c.bf16 %v1484, %v1481
      %v1565 = vpack.c.bf16 %v1516, %v1513
      %v1566 = vpack.c.bf16 %v1444, %v1442
      %v1567 = vpack.c.bf16 %v1487, %v1484
      %v1568 = vpack.c.bf16 %v1519, %v1516
      %v1569 = vpack.c.bf16 %v1446, %v1444
      %v1570 = vpack.c.bf16 %v1490, %v1487
      %v1571 = vpack.c.bf16 %v1522, %v1519
      %v1572 = vpack.c.bf16 %v1448, %v1446
      %v1573 = vpack.c.bf16 %v1493, %v1490
      %v1574 = vpack.c.bf16 %v1525, %v1522
      %v1575 = vpack.c.bf16 %v1450, %v1448
      %v1576 = vpack.c.bf16 %v1538, %v1493
      %v1577 = vpack.c.bf16 %v1542, %v1525
      %v1578 = vpack.c.bf16 %v1452, %v1450
      %v1579 = vpack.c.bf16 %v1548, %v1538
      %v1580 = vpack.c.bf16 %v1552, %v1542
      %v1581 = vld [vmem:[%s4] sm:$0xf]
      %v1582 = vld [vmem:[%s4 + $0x4] sm:$0xf]
      %v1583 = vld [vmem:[%s4 + $0x8] sm:$0xf]
      %v1584 = vld [vmem:[%s4 + $0xc] sm:$0xf]
      %v1585 = vld [vmem:[%s4 + $0x10] sm:$0xf]
      %v1586 = vld [vmem:[%s4 + $0x14] sm:$0xf]
      %v1587 = vld [vmem:[%s4 + $0x18] sm:$0xf]
      %v1588 = vld [vmem:[%s4 + $0x1c] sm:$0xf]
      %v1589 = vld [vmem:[%s4 + $0x20] sm:$0xf]
      %v1590 = vld [vmem:[%s4 + $0x24] sm:$0xf]
      %v1591 = vld [vmem:[%s4 + $0x28] sm:$0xf]
      %v1592 = vld [vmem:[%s4 + $0x2c] sm:$0xf]
      %v1593 = vld [vmem:[%s4 + $0x30] sm:$0xf]
      %v1594 = vld [vmem:[%s4 + $0x34] sm:$0xf]
      %v1595 = vld [vmem:[%s4 + $0x38] sm:$0xf]
      %v1596 = vld [vmem:[%s4 + $0x3c] sm:$0xf]
      %v1597 = vld [vmem:[%s4 + $0x40] sm:$0xf]
      %v1598 = vld [vmem:[%s4 + $0x44] sm:$0xf]
      %v1599 = vld [vmem:[%s4 + $0x48] sm:$0xf]
      %v1600 = vld [vmem:[%s4 + $0x4c] sm:$0xf]
      %v1601 = vld [vmem:[%s4 + $0x50] sm:$0xf]
      %v1602 = vld [vmem:[%s4 + $0x54] sm:$0xf]
      %v1603 = vld [vmem:[%s4 + $0x58] sm:$0xf]
      %v1604 = vld [vmem:[%s4 + $0x5c] sm:$0xf]
      %v1605 = vld [vmem:[%s4 + $0x60] sm:$0xf]
      %v1606 = vld [vmem:[%s4 + $0x64] sm:$0xf]
      %v1607 = vld [vmem:[%s4 + $0x68] sm:$0xf]
      %v1608 = vld [vmem:[%s4 + $0x6c] sm:$0xf]
      %v1609 = vld [vmem:[%s4 + $0x70] sm:$0xf]
      %v1610 = vld [vmem:[%s4 + $0x74] sm:$0xf]
      %v1611 = vld [vmem:[%s4 + $0x78] sm:$0xf]
      %v1612 = vld [vmem:[%s4 + $0x7c] sm:$0xf]
      %v1613 = vld [vmem:[%s4 + $0x80] sm:$0xf]
      %v1614 = vld [vmem:[%s4 + $0x84] sm:$0xf]
      %v1615 = vld [vmem:[%s4 + $0x88] sm:$0xf]
      %v1616 = vld [vmem:[%s4 + $0x8c] sm:$0xf]
      %v1617 = vld [vmem:[%s4 + $0x90] sm:$0xf]
      %v1618 = vld [vmem:[%s4 + $0x94] sm:$0xf]
      %v1619 = vld [vmem:[%s4 + $0x98] sm:$0xf]
      %v1620 = vld [vmem:[%s4 + $0x9c] sm:$0xf]
      %v1621 = vld [vmem:[%s4 + $0xa0] sm:$0xf]
      %v1622 = vld [vmem:[%s4 + $0xa4] sm:$0xf]
      %v1623 = vld [vmem:[%s4 + $0xa8] sm:$0xf]
      %v1624 = vld [vmem:[%s4 + $0xac] sm:$0xf]
      %v1625 = vld [vmem:[%s4 + $0xb0] sm:$0xf]
      %v1626 = vld [vmem:[%s4 + $0xb4] sm:$0xf]
      %v1627 = vld [vmem:[%s4 + $0xb8] sm:$0xf]
      %v1628 = vld [vmem:[%s4 + $0xbc] sm:$0xf]
      %v1629 = vld [vmem:[%s4 + $0xc0] sm:$0xf]
      %v1630 = vld [vmem:[%s4 + $0xc4] sm:$0xf]
      %v1631 = vld [vmem:[%s4 + $0xc8] sm:$0xf]
      %v1632 = vld [vmem:[%s4 + $0xcc] sm:$0xf]
      %v1633 = vld [vmem:[%s4 + $0xd0] sm:$0xf]
      %v1634 = vld [vmem:[%s4 + $0xd4] sm:$0xf]
      %v1635 = vld [vmem:[%s4 + $0xd8] sm:$0xf]
      %v1636 = vld [vmem:[%s4 + $0xdc] sm:$0xf]
      %v1637 = vld [vmem:[%s4 + $0xe0] sm:$0xf]
      %v1638 = vld [vmem:[%s4 + $0xe4] sm:$0xf]
      %v1639 = vld [vmem:[%s4 + $0xe8] sm:$0xf]
      %v1640 = vld [vmem:[%s4 + $0xec] sm:$0xf]
      %v1641 = vld [vmem:[%s4 + $0xf0] sm:$0xf]
      %v1642 = vld [vmem:[%s4 + $0xf4] sm:$0xf]
      %v1643 = vld [vmem:[%s4 + $0xf8] sm:$0xf]
      %v1644 = vld [vmem:[%s4 + $0xfc] sm:$0xf]
      %v1645 = vld [vmem:[%s4 + $0x100] sm:$0xf]
      %v1646 = vld [vmem:[%s4 + $0x104] sm:$0xf]
      %v1647 = vld [vmem:[%s4 + $0x108] sm:$0xf]
      %v1648 = vld [vmem:[%s4 + $0x10c] sm:$0xf]
      %v1649 = vld [vmem:[%s4 + $0x110] sm:$0xf]
      %v1650 = vld [vmem:[%s4 + $0x114] sm:$0xf]
      %v1651 = vld [vmem:[%s4 + $0x118] sm:$0xf]
      %v1652 = vld [vmem:[%s4 + $0x11c] sm:$0xf]
      %v1653 = vld [vmem:[%s4 + $0x120] sm:$0xf]
      %v1654 = vld [vmem:[%s4 + $0x124] sm:$0xf]
      %v1655 = vld [vmem:[%s4 + $0x128] sm:$0xf]
      %v1656 = vld [vmem:[%s4 + $0x12c] sm:$0xf]
      %v1657 = vld [vmem:[%s4 + $0x130] sm:$0xf]
      %v1658 = vld [vmem:[%s4 + $0x134] sm:$0xf]
      %v1659 = vld [vmem:[%s4 + $0x138] sm:$0xf]
      %v1660 = vld [vmem:[%s4 + $0x13c] sm:$0xf]
      %v1661 = vld [vmem:[%s4 + $0x140] sm:$0xf]
      %v1662 = vld [vmem:[%s4 + $0x144] sm:$0xf]
      %v1663 = vld [vmem:[%s4 + $0x148] sm:$0xf]
      %v1664 = vld [vmem:[%s4 + $0x14c] sm:$0xf]
      %v1665 = vld [vmem:[%s4 + $0x150] sm:$0xf]
      %v1666 = vld [vmem:[%s4 + $0x154] sm:$0xf]
      %v1667 = vld [vmem:[%s4 + $0x158] sm:$0xf]
      %v1668 = vld [vmem:[%s4 + $0x15c] sm:$0xf]
      %v1669 = vld [vmem:[%s4 + $0x160] sm:$0xf]
      %v1670 = vld [vmem:[%s4 + $0x164] sm:$0xf]
      %v1671 = vld [vmem:[%s4 + $0x168] sm:$0xf]
      %v1672 = vld [vmem:[%s4 + $0x16c] sm:$0xf]
      %v1673 = vld [vmem:[%s4 + $0x170] sm:$0xf]
      %v1674 = vld [vmem:[%s4 + $0x174] sm:$0xf]
      %v1675 = vld [vmem:[%s4 + $0x178] sm:$0xf]
      %v1676 = vld [vmem:[%s4 + $0x17c] sm:$0xf]
      %v1677 = vld [vmem:[%s4 + $0x180] sm:$0xf]
      %v1678 = vld [vmem:[%s4 + $0x184] sm:$0xf]
      %v1679 = vld [vmem:[%s4 + $0x188] sm:$0xf]
      %v1680 = vld [vmem:[%s4 + $0x18c] sm:$0xf]
      %v1681 = vld [vmem:[%s4 + $0x190] sm:$0xf]
      %v1682 = vld [vmem:[%s4 + $0x194] sm:$0xf]
      %v1683 = vld [vmem:[%s4 + $0x198] sm:$0xf]
      %v1684 = vld [vmem:[%s4 + $0x19c] sm:$0xf]
      %v1685 = vld [vmem:[%s4 + $0x1a0] sm:$0xf]
      %v1686 = vld [vmem:[%s4 + $0x1a4] sm:$0xf]
      %v1687 = vld [vmem:[%s4 + $0x1a8] sm:$0xf]
      %v1688 = vld [vmem:[%s4 + $0x1ac] sm:$0xf]
      %v1689 = vld [vmem:[%s4 + $0x1b0] sm:$0xf]
      %v1690 = vld [vmem:[%s4 + $0x1b4] sm:$0xf]
      %v1691 = vld [vmem:[%s4 + $0x1b8] sm:$0xf]
      %v1692 = vld [vmem:[%s4 + $0x1bc] sm:$0xf]
      %v1693 = vld [vmem:[%s4 + $0x1c0] sm:$0xf]
      %v1694 = vld [vmem:[%s4 + $0x1c4] sm:$0xf]
      %v1695 = vld [vmem:[%s4 + $0x1c8] sm:$0xf]
      %v1696 = vld [vmem:[%s4 + $0x1cc] sm:$0xf]
      %v1697 = vld [vmem:[%s4 + $0x1d0] sm:$0xf]
      %v1698 = vld [vmem:[%s4 + $0x1d4] sm:$0xf]
      %v1699 = vld [vmem:[%s4 + $0x1d8] sm:$0xf]
      %v1700 = vld [vmem:[%s4 + $0x1dc] sm:$0xf]
      %v1701 = vld [vmem:[%s4 + $0x1e0] sm:$0xf]
      %v1702 = vld [vmem:[%s4 + $0x1e4] sm:$0xf]
      %v1703 = vld [vmem:[%s4 + $0x1e8] sm:$0xf]
      %v1704 = vld [vmem:[%s4 + $0x1ec] sm:$0xf]
      %v1705 = vld [vmem:[%s4 + $0x1f0] sm:$0xf]
      %v1706 = vld [vmem:[%s4 + $0x1f4] sm:$0xf]
      %v1707 = vld [vmem:[%s4 + $0x1f8] sm:$0xf]
      %v1708 = vld [vmem:[%s4 + $0x1fc] sm:$0xf]
      %v1709 = vld [vmem:[%s4 + $0x200] sm:$0xf]
      %v1710 = vld [vmem:[%s4 + $0x204] sm:$0xf]
      %v1711 = vld [vmem:[%s4 + $0x208] sm:$0xf]
      %v1712 = vld [vmem:[%s4 + $0x20c] sm:$0xf]
      %v1713 = vld [vmem:[%s4 + $0x210] sm:$0xf]
      %v1714 = vld [vmem:[%s4 + $0x214] sm:$0xf]
      %v1715 = vld [vmem:[%s4 + $0x218] sm:$0xf]
      %v1716 = vld [vmem:[%s4 + $0x21c] sm:$0xf]
      %v1717 = vld [vmem:[%s4 + $0x220] sm:$0xf]
      %v1718 = vld [vmem:[%s4 + $0x224] sm:$0xf]
      %v1719 = vld [vmem:[%s4 + $0x228] sm:$0xf]
      %v1720 = vld [vmem:[%s4 + $0x22c] sm:$0xf]
      %v1721 = vld [vmem:[%s4 + $0x230] sm:$0xf]
      %v1722 = vld [vmem:[%s4 + $0x234] sm:$0xf]
      %v1723 = vld [vmem:[%s4 + $0x238] sm:$0xf]
      %v1724 = vld [vmem:[%s4 + $0x23c] sm:$0xf]
      %v1869 = vunpack.c.l.b16 %v1581
      %v1870 = vunpack.c.l.b16 %v1582
      %v1871 = vunpack.c.l.b16 %v1583
      %v1872 = vunpack.c.l.b16 %v1584
      %v1873 = vunpack.c.l.b16 %v1585
      %v1874 = vunpack.c.l.b16 %v1586
      %v1875 = vunpack.c.l.b16 %v1587
      %v1876 = vunpack.c.l.b16 %v1588
      %v1877 = vunpack.c.l.b16 %v1589
      %v1878 = vunpack.c.l.b16 %v1590
      %v1879 = vunpack.c.l.b16 %v1591
      %v1880 = vunpack.c.l.b16 %v1592
      %v1881 = vunpack.c.l.b16 %v1593
      %v1882 = vunpack.c.l.b16 %v1594
      %v1883 = vunpack.c.l.b16 %v1595
      %v1884 = vunpack.c.l.b16 %v1596
      %v1885 = vunpack.c.l.b16 %v1597
      %v1886 = vunpack.c.l.b16 %v1598
      %v1887 = vunpack.c.l.b16 %v1599
      %v1888 = vunpack.c.l.b16 %v1600
      %v1889 = vunpack.c.l.b16 %v1601
      %v1890 = vunpack.c.l.b16 %v1602
      %v1891 = vunpack.c.l.b16 %v1603
      %v1892 = vunpack.c.l.b16 %v1604
      %v1893 = vunpack.c.l.b16 %v1605
      %v1894 = vunpack.c.l.b16 %v1606
      %v1895 = vunpack.c.l.b16 %v1607
      %v1896 = vunpack.c.l.b16 %v1608
      %v1897 = vunpack.c.l.b16 %v1609
      %v1898 = vunpack.c.l.b16 %v1610
      %v1899 = vunpack.c.l.b16 %v1611
      %v1900 = vunpack.c.l.b16 %v1612
      %v1901 = vunpack.c.l.b16 %v1613
      %v1902 = vunpack.c.l.b16 %v1614
      %v1903 = vunpack.c.l.b16 %v1615
      %v1904 = vunpack.c.l.b16 %v1616
      %v1905 = vunpack.c.l.b16 %v1617
      %v1906 = vunpack.c.l.b16 %v1618
      %v1907 = vunpack.c.l.b16 %v1619
      %v1908 = vunpack.c.l.b16 %v1620
      %v1909 = vunpack.c.l.b16 %v1621
      %v1910 = vunpack.c.l.b16 %v1622
      %v1911 = vunpack.c.l.b16 %v1623
      %v1912 = vunpack.c.l.b16 %v1624
      %v1913 = vunpack.c.l.b16 %v1625
      %v1914 = vunpack.c.l.b16 %v1626
      %v1915 = vunpack.c.l.b16 %v1627
      %v1916 = vunpack.c.l.b16 %v1628
      %v1917 = vunpack.c.l.b16 %v1629
      %v1918 = vunpack.c.l.b16 %v1630
      %v1919 = vunpack.c.l.b16 %v1631
      %v1920 = vunpack.c.l.b16 %v1632
      %v1921 = vunpack.c.l.b16 %v1633
      %v1922 = vunpack.c.l.b16 %v1634
      %v1923 = vunpack.c.l.b16 %v1635
      %v1924 = vunpack.c.l.b16 %v1636
      %v1925 = vunpack.c.l.b16 %v1637
      %v1926 = vunpack.c.l.b16 %v1638
      %v1927 = vunpack.c.l.b16 %v1639
      %v1928 = vunpack.c.l.b16 %v1640
      %v1929 = vunpack.c.l.b16 %v1641
      %v1930 = vunpack.c.l.b16 %v1642
      %v1931 = vunpack.c.l.b16 %v1643
      %v1932 = vunpack.c.l.b16 %v1644
      %v1933 = vunpack.c.l.b16 %v1645
      %v1934 = vunpack.c.l.b16 %v1646
      %v1935 = vunpack.c.l.b16 %v1647
      %v1936 = vunpack.c.l.b16 %v1648
      %v1937 = vunpack.c.l.b16 %v1649
      %v1938 = vunpack.c.l.b16 %v1650
      %v1939 = vunpack.c.l.b16 %v1651
      %v1940 = vunpack.c.l.b16 %v1652
      %v1941 = vunpack.c.l.b16 %v1653
      %v1942 = vunpack.c.l.b16 %v1654
      %v1943 = vunpack.c.l.b16 %v1655
      %v1944 = vunpack.c.l.b16 %v1656
      %v1945 = vunpack.c.l.b16 %v1657
      %v1946 = vunpack.c.l.b16 %v1658
      %v1947 = vunpack.c.l.b16 %v1659
      %v1948 = vunpack.c.l.b16 %v1660
      %v1949 = vunpack.c.l.b16 %v1661
      %v1950 = vunpack.c.l.b16 %v1662
      %v1951 = vunpack.c.l.b16 %v1663
      %v1952 = vunpack.c.l.b16 %v1664
      %v1953 = vunpack.c.l.b16 %v1665
      %v1954 = vunpack.c.l.b16 %v1666
      %v1955 = vunpack.c.l.b16 %v1667
      %v1956 = vunpack.c.l.b16 %v1668
      %v1957 = vunpack.c.l.b16 %v1669
      %v1958 = vunpack.c.l.b16 %v1670
      %v1959 = vunpack.c.l.b16 %v1671
      %v1960 = vunpack.c.l.b16 %v1672
      %v1961 = vunpack.c.l.b16 %v1673
      %v1962 = vunpack.c.l.b16 %v1674
      %v1963 = vunpack.c.l.b16 %v1675
      %v1964 = vunpack.c.l.b16 %v1676
      %v1965 = vunpack.c.l.b16 %v1677
      %v1966 = vunpack.c.l.b16 %v1678
      %v1967 = vunpack.c.l.b16 %v1679
      %v1968 = vunpack.c.l.b16 %v1680
      %v1969 = vunpack.c.l.b16 %v1681
      %v1970 = vunpack.c.l.b16 %v1682
      %v1971 = vunpack.c.l.b16 %v1683
      %v1972 = vunpack.c.l.b16 %v1684
      %v1973 = vunpack.c.l.b16 %v1685
      %v1974 = vunpack.c.l.b16 %v1686
      %v1975 = vunpack.c.l.b16 %v1687
      %v1976 = vunpack.c.l.b16 %v1688
      %v1977 = vunpack.c.l.b16 %v1689
      %v1978 = vunpack.c.l.b16 %v1690
      %v1979 = vunpack.c.l.b16 %v1691
      %v1980 = vunpack.c.l.b16 %v1692
      %v1981 = vunpack.c.l.b16 %v1693
      %v1982 = vunpack.c.l.b16 %v1694
      %v1983 = vunpack.c.l.b16 %v1695
      %v1984 = vunpack.c.l.b16 %v1696
      %v1985 = vunpack.c.l.b16 %v1697
      %v1986 = vunpack.c.l.b16 %v1698
      %v1987 = vunpack.c.l.b16 %v1699
      %v1988 = vunpack.c.l.b16 %v1700
      %v1989 = vunpack.c.l.b16 %v1701
      %v1990 = vunpack.c.l.b16 %v1702
      %v1991 = vunpack.c.l.b16 %v1703
      %v1992 = vunpack.c.l.b16 %v1704
      %v1993 = vunpack.c.l.b16 %v1705
      %v1994 = vunpack.c.l.b16 %v1706
      %v1995 = vunpack.c.l.b16 %v1707
      %v1996 = vunpack.c.l.b16 %v1708
      %v1997 = vunpack.c.l.b16 %v1709
      %v1998 = vunpack.c.l.b16 %v1710
      %v1999 = vunpack.c.l.b16 %v1711
      %v2000 = vunpack.c.l.b16 %v1712
      %v2001 = vunpack.c.l.b16 %v1713
      %v2002 = vunpack.c.l.b16 %v1714
      %v2003 = vunpack.c.l.b16 %v1715
      %v2004 = vunpack.c.l.b16 %v1716
      %v2005 = vunpack.c.l.b16 %v1717
      %v2006 = vunpack.c.l.b16 %v1718
      %v2007 = vunpack.c.l.b16 %v1719
      %v2008 = vunpack.c.l.b16 %v1720
      %v2009 = vunpack.c.l.b16 %v1721
      %v2010 = vunpack.c.l.b16 %v1722
      %v2011 = vunpack.c.l.b16 %v1723
      %v2012 = vunpack.c.l.b16 %v1724
      %v2013 = vpack.c.b16 %v1870, %v1869
      %v2014 = vpack.c.b16 %v1872, %v1871
      %v2015 = vpack.c.b16 %v1874, %v1873
      %v2016 = vpack.c.b16 %v1876, %v1875
      %v2017 = vpack.c.b16 %v1878, %v1877
      %v2018 = vpack.c.b16 %v1880, %v1879
      %v2019 = vpack.c.b16 %v1882, %v1881
      %v2020 = vpack.c.b16 %v1884, %v1883
      %v2021 = vpack.c.b16 %v1886, %v1885
      %v2022 = vpack.c.b16 %v1888, %v1887
      %v2023 = vpack.c.b16 %v1890, %v1889
      %v2024 = vpack.c.b16 %v1892, %v1891
      %v2025 = vpack.c.b16 %v1894, %v1893
      %v2026 = vpack.c.b16 %v1896, %v1895
      %v2027 = vpack.c.b16 %v1898, %v1897
      %v2028 = vpack.c.b16 %v1900, %v1899
      %v2029 = vpack.c.b16 %v1902, %v1901
      %v2030 = vpack.c.b16 %v1904, %v1903
      %v2031 = vpack.c.b16 %v1906, %v1905
      %v2032 = vpack.c.b16 %v1908, %v1907
      %v2033 = vpack.c.b16 %v1910, %v1909
      %v2034 = vpack.c.b16 %v1912, %v1911
      %v2035 = vpack.c.b16 %v1914, %v1913
      %v2036 = vpack.c.b16 %v1916, %v1915
      %v2037 = vpack.c.b16 %v1918, %v1917
      %v2038 = vpack.c.b16 %v1920, %v1919
      %v2039 = vpack.c.b16 %v1922, %v1921
      %v2040 = vpack.c.b16 %v1924, %v1923
      %v2041 = vpack.c.b16 %v1926, %v1925
      %v2042 = vpack.c.b16 %v1928, %v1927
      %v2043 = vpack.c.b16 %v1930, %v1929
      %v2044 = vpack.c.b16 %v1932, %v1931
      %v2045 = vpack.c.b16 %v1934, %v1933
      %v2046 = vpack.c.b16 %v1936, %v1935
      %v2047 = vpack.c.b16 %v1938, %v1937
      %v2048 = vpack.c.b16 %v1940, %v1939
      %v2049 = vpack.c.b16 %v1942, %v1941
      %v2050 = vpack.c.b16 %v1944, %v1943
      %v2051 = vpack.c.b16 %v1946, %v1945
      %v2052 = vpack.c.b16 %v1948, %v1947
      %v2053 = vpack.c.b16 %v1950, %v1949
      %v2054 = vpack.c.b16 %v1952, %v1951
      %v2055 = vpack.c.b16 %v1954, %v1953
      %v2056 = vpack.c.b16 %v1956, %v1955
      %v2057 = vpack.c.b16 %v1958, %v1957
      %v2058 = vpack.c.b16 %v1960, %v1959
      %v2059 = vpack.c.b16 %v1962, %v1961
      %v2060 = vpack.c.b16 %v1964, %v1963
      %v2061 = vpack.c.b16 %v1966, %v1965
      %v2062 = vpack.c.b16 %v1968, %v1967
      %v2063 = vpack.c.b16 %v1970, %v1969
      %v2064 = vpack.c.b16 %v1972, %v1971
      %v2065 = vpack.c.b16 %v1974, %v1973
      %v2066 = vpack.c.b16 %v1976, %v1975
      %v2067 = vpack.c.b16 %v1978, %v1977
      %v2068 = vpack.c.b16 %v1980, %v1979
      %v2069 = vpack.c.b16 %v1982, %v1981
      %v2070 = vpack.c.b16 %v1984, %v1983
      %v2071 = vpack.c.b16 %v1986, %v1985
      %v2072 = vpack.c.b16 %v1988, %v1987
      %v2073 = vpack.c.b16 %v1990, %v1989
      %v2074 = vpack.c.b16 %v1992, %v1991
      %v2075 = vpack.c.b16 %v1994, %v1993
      %v2076 = vpack.c.b16 %v1996, %v1995
      %v2077 = vpack.c.b16 %v1998, %v1997
      %v2078 = vpack.c.b16 %v2000, %v1999
      %v2079 = vpack.c.b16 %v2002, %v2001
      %v2080 = vpack.c.b16 %v2004, %v2003
      %v2081 = vpack.c.b16 %v2006, %v2005
      %v2082 = vpack.c.b16 %v2008, %v2007
      %v2083 = vpack.c.b16 %v2010, %v2009
      %v2084 = vpack.c.b16 %v2012, %v2011
      %2157 = vmatprep.subr.bf16.mxu0 0
      %2158 = vmatpush1.bf16.msra.mxu0 %v2013
      %2159 = vmatprep.subr.bf16.mxu0 0
      %2160 = vmatpush1.bf16.msra.mxu0 %v2014
      %2161 = vmatprep.subr.bf16.mxu0 0
      %2162 = vmatpush1.bf16.msra.mxu0 %v2015
      %2163 = vmatprep.subr.bf16.mxu0 0
      %2164 = vmatpush1.bf16.msra.mxu0 %v2016
      %2165 = vmatprep.subr.bf16.mxu0 0
      %2166 = vmatpush1.bf16.msra.mxu0 %v2017
      %2167 = vmatprep.subr.bf16.mxu0 0
      %2168 = vmatpush1.bf16.msra.mxu0 %v2018
      %2169 = vmatprep.subr.bf16.mxu0 0
      %2170 = vmatpush1.bf16.msra.mxu0 %v2019
      %2171 = vmatprep.subr.bf16.mxu0 0
      %2172 = vmatpush1.bf16.msra.mxu0 %v2020
      %2173 = vmatprep.subr.bf16.mxu0 0
      %2174 = vmatpush1.bf16.msra.mxu0 %v2021
      %2175 = vmatprep.subr.bf16.mxu0 0
      %2176 = vmatpush1.bf16.msra.mxu0 %v2022
      %2177 = vmatprep.subr.bf16.mxu0 0
      %2178 = vmatpush1.bf16.msra.mxu0 %v2023
      %2179 = vmatprep.subr.bf16.mxu0 0
      %2180 = vmatpush1.bf16.msra.mxu0 %v2024
      %2181 = vmatprep.subr.bf16.mxu0 0
      %2182 = vmatpush1.bf16.msra.mxu0 %v2025
      %2183 = vmatprep.subr.bf16.mxu0 0
      %2184 = vmatpush1.bf16.msra.mxu0 %v2026
      %2185 = vmatprep.subr.bf16.mxu0 0
      %2186 = vmatpush1.bf16.msra.mxu0 %v2027
      %2187 = vmatprep.subr.bf16.mxu0 0
      %2188 = vmatpush1.bf16.msra.mxu0 %v2028
      %2189 = vmatprep.mubr.bf16.mxu0 %v1555
      %2190 = vmatmul.mubr.bf16.gmra.mrb[0].mxu0 %v1554
      %v2191 = vpop.f32.mrb[0].mxu0
      %v2192 = vadd.f32 0.0, %v2191
      %v2193 = vpop.f32.mrb[0].mxu0
      %v2194 = vpop.f32.mrb[0].mxu0
      %v2195 = vadd.f32 0.0, %v2194
      %v2196 = vpop.f32.mrb[0].mxu0
      %2197 = vmatprep.mubr.bf16.mxu0 %v1561
      %2198 = vmatmul.mubr.bf16.gmra.mrb[0].mxu0 %v1560
      %v2199 = vpop.f32.mrb[0].mxu0
      %v2200 = vadd.f32 0.0, %v2199
      %v2201 = vpop.f32.mrb[0].mxu0
      %v2202 = vpop.f32.mrb[0].mxu0
      %v2203 = vadd.f32 0.0, %v2202
      %v2204 = vpop.f32.mrb[0].mxu0
      %2205 = vmatprep.mubr.bf16.mxu0 %v1567
      %2206 = vmatmul.mubr.bf16.gmra.mrb[0].mxu0 %v1566
      %v2207 = vpop.f32.mrb[0].mxu0
      %v2208 = vadd.f32 0.0, %v2207
      %v2209 = vpop.f32.mrb[0].mxu0
      %v2210 = vpop.f32.mrb[0].mxu0
      %v2211 = vadd.f32 0.0, %v2210
      %v2212 = vpop.f32.mrb[0].mxu0
      %2213 = vmatprep.mubr.bf16.mxu0 %v1573
      %2214 = vmatmul.mubr.bf16.gmra.mrb[0].mxu0 %v1572
      %v2215 = vpop.f32.mrb[0].mxu0
      %v2216 = vadd.f32 0.0, %v2215
      %v2217 = vpop.f32.mrb[0].mxu0
      %v2218 = vpop.f32.mrb[0].mxu0
      %v2219 = vadd.f32 0.0, %v2218
      %v2220 = vpop.f32.mrb[0].mxu0
      %2221 = vdwg.mxu0
      %2222 = vmatprep.subr.bf16.mxu0 0
      %2223 = vmatpush1.bf16.msra.mxu0 %v2029
      %2224 = vmatprep.subr.bf16.mxu0 0
      %2225 = vmatpush1.bf16.msra.mxu0 %v2030
      %2226 = vmatprep.subr.bf16.mxu0 0
      %2227 = vmatpush1.bf16.msra.mxu0 %v2031
      %2228 = vmatprep.subr.bf16.mxu0 0
      %2229 = vmatpush1.bf16.msra.mxu0 %v2032
      %2230 = vmatprep.subr.bf16.mxu0 0
      %2231 = vmatpush1.bf16.msra.mxu0 %v2033
      %2232 = vmatprep.subr.bf16.mxu0 0
      %2233 = vmatpush1.bf16.msra.mxu0 %v2034
      %2234 = vmatprep.subr.bf16.mxu0 0
      %2235 = vmatpush1.bf16.msra.mxu0 %v2035
      %2236 = vmatprep.subr.bf16.mxu0 0
      %2237 = vmatpush1.bf16.msra.mxu0 %v2036
      %2238 = vmatprep.subr.bf16.mxu0 0
      %2239 = vmatpush1.bf16.msra.mxu0 %v2037
      %2240 = vmatprep.subr.bf16.mxu0 0
      %2241 = vmatpush1.bf16.msra.mxu0 %v2038
      %2242 = vmatprep.subr.bf16.mxu0 0
      %2243 = vmatpush1.bf16.msra.mxu0 %v2039
      %2244 = vmatprep.subr.bf16.mxu0 0
      %2245 = vmatpush1.bf16.msra.mxu0 %v2040
      %2246 = vmatprep.subr.bf16.mxu0 0
      %2247 = vmatpush1.bf16.msra.mxu0 %v2041
      %2248 = vmatprep.subr.bf16.mxu0 0
      %2249 = vmatpush1.bf16.msra.mxu0 %v2042
      %2250 = vmatprep.subr.bf16.mxu0 0
      %2251 = vmatpush1.bf16.msra.mxu0 %v2043
      %2252 = vmatprep.subr.bf16.mxu0 0
      %2253 = vmatpush1.bf16.msra.mxu0 %v2044
      %2254 = vmatprep.mubr.bf16.mxu0 %v1557
      %2255 = vmatmul.mubr.bf16.gmra.mrb[0].mxu0 %v1556
      %v2256 = vpop.f32.mrb[0].mxu0
      %v2257 = vadd.f32 %v2192, %v2256
      %v2258 = vpop.f32.mrb[0].mxu0
      %v2259 = vpop.f32.mrb[0].mxu0
      %v2260 = vadd.f32 %v2195, %v2259
      %v2261 = vpop.f32.mrb[0].mxu0
      %2262 = vmatprep.mubr.bf16.mxu0 %v1563
      %2263 = vmatmul.mubr.bf16.gmra.mrb[0].mxu0 %v1562
      %v2264 = vpop.f32.mrb[0].mxu0
      %v2265 = vadd.f32 %v2200, %v2264
      %v2266 = vpop.f32.mrb[0].mxu0
      %v2267 = vpop.f32.mrb[0].mxu0
      %v2268 = vadd.f32 %v2203, %v2267
      %v2269 = vpop.f32.mrb[0].mxu0
      %2270 = vmatprep.mubr.bf16.mxu0 %v1569
      %2271 = vmatmul.mubr.bf16.gmra.mrb[0].mxu0 %v1568
      %v2272 = vpop.f32.mrb[0].mxu0
      %v2273 = vadd.f32 %v2208, %v2272
      %v2274 = vpop.f32.mrb[0].mxu0
      %v2275 = vpop.f32.mrb[0].mxu0
      %v2276 = vadd.f32 %v2211, %v2275
      %v2277 = vpop.f32.mrb[0].mxu0
      %2278 = vmatprep.mubr.bf16.mxu0 %v1575
      %2279 = vmatmul.mubr.bf16.gmra.mrb[0].mxu0 %v1574
      %v2280 = vpop.f32.mrb[0].mxu0
      %v2281 = vadd.f32 %v2216, %v2280
      %v2282 = vpop.f32.mrb[0].mxu0
      %v2283 = vpop.f32.mrb[0].mxu0
      %v2284 = vadd.f32 %v2219, %v2283
      %v2285 = vpop.f32.mrb[0].mxu0
      %2286 = vdwg.mxu0
      %2287 = vmatprep.subr.bf16.mxu0 0
      %2288 = vmatpush1.bf16.msra.mxu0 %v2045
      %2289 = vmatprep.subr.bf16.mxu0 0
      %2290 = vmatpush1.bf16.msra.mxu0 %v2046
      %2291 = vmatprep.subr.bf16.mxu0 0
      %2292 = vmatpush1.bf16.msra.mxu0 %v2047
      %2293 = vmatprep.subr.bf16.mxu0 0
      %2294 = vmatpush1.bf16.msra.mxu0 %v2048
      %2295 = vmatprep.subr.bf16.mxu0 0
      %2296 = vmatpush1.bf16.msra.mxu0 %v2049
      %2297 = vmatprep.subr.bf16.mxu0 0
      %2298 = vmatpush1.bf16.msra.mxu0 %v2050
      %2299 = vmatprep.subr.bf16.mxu0 0
      %2300 = vmatpush1.bf16.msra.mxu0 %v2051
      %2301 = vmatprep.subr.bf16.mxu0 0
      %2302 = vmatpush1.bf16.msra.mxu0 %v2052
      %2303 = vmatprep.subr.bf16.mxu0 0
      %2304 = vmatpush1.bf16.msra.mxu0 %v2053
      %2305 = vmatprep.subr.bf16.mxu0 0
      %2306 = vmatpush1.bf16.msra.mxu0 %v2054
      %2307 = vmatprep.subr.bf16.mxu0 0
      %2308 = vmatpush1.bf16.msra.mxu0 %v2055
      %2309 = vmatprep.subr.bf16.mxu0 0
      %2310 = vmatpush1.bf16.msra.mxu0 %v2056
      %2311 = vmatprep.subr.bf16.mxu0 0
      %2312 = vmatpush1.bf16.msra.mxu0 %v2057
      %2313 = vmatprep.subr.bf16.mxu0 0
      %2314 = vmatpush1.bf16.msra.mxu0 %v2058
      %2315 = vmatprep.subr.bf16.mxu0 0
      %2316 = vmatpush1.bf16.msra.mxu0 %v2059
      %2317 = vmatprep.subr.bf16.mxu0 0
      %2318 = vmatpush1.bf16.msra.mxu0 %v2060
      %2319 = vmatprep.mubr.bf16.mxu0 %v1559
      %2320 = vmatmul.mubr.bf16.gmra.mrb[0].mxu0 %v1558
      %v2321 = vpop.f32.mrb[0].mxu0
      %v2322 = vadd.f32 %v2257, %v2321
      %v2323 = vpop.f32.mrb[0].mxu0
      %v2324 = vpop.f32.mrb[0].mxu0
      %v2325 = vadd.f32 %v2260, %v2324
      %v2326 = vpop.f32.mrb[0].mxu0
      %2327 = vmatprep.mubr.bf16.mxu0 %v1565
      %2328 = vmatmul.mubr.bf16.gmra.mrb[0].mxu0 %v1564
      %v2329 = vpop.f32.mrb[0].mxu0
      %v2330 = vadd.f32 %v2265, %v2329
      %v2331 = vpop.f32.mrb[0].mxu0
      %v2332 = vpop.f32.mrb[0].mxu0
      %v2333 = vadd.f32 %v2268, %v2332
      %v2334 = vpop.f32.mrb[0].mxu0
      %2335 = vmatprep.mubr.bf16.mxu0 %v1571
      %2336 = vmatmul.mubr.bf16.gmra.mrb[0].mxu0 %v1570
      %v2337 = vpop.f32.mrb[0].mxu0
      %v2338 = vadd.f32 %v2273, %v2337
      %v2339 = vpop.f32.mrb[0].mxu0
      %v2340 = vpop.f32.mrb[0].mxu0
      %v2341 = vadd.f32 %v2276, %v2340
      %v2342 = vpop.f32.mrb[0].mxu0
      %2343 = vmatprep.mubr.bf16.mxu0 %v1577
      %2344 = vmatmul.mubr.bf16.gmra.mrb[0].mxu0 %v1576
      %v2345 = vpop.f32.mrb[0].mxu0
      %v2346 = vadd.f32 %v2281, %v2345
      %v2347 = vpop.f32.mrb[0].mxu0
      %v2348 = vpop.f32.mrb[0].mxu0
      %v2349 = vadd.f32 %v2284, %v2348
      %v2350 = vpop.f32.mrb[0].mxu0
      %2351 = vdwg.mxu0
      %2352 = vmatprep.subr.bf16.mxu0 0
      %2353 = vmatpush1.bf16.msra.mxu0 %v2061
      %2354 = vmatprep.subr.bf16.mxu0 0
      %2355 = vmatpush1.bf16.msra.mxu0 %v2062
      %2356 = vmatprep.subr.bf16.mxu0 0
      %2357 = vmatpush1.bf16.msra.mxu0 %v2063
      %2358 = vmatprep.subr.bf16.mxu0 0
      %2359 = vmatpush1.bf16.msra.mxu0 %v2064
      %2360 = vmatprep.subr.bf16.mxu0 0
      %2361 = vmatpush1.bf16.msra.mxu0 %v2065
      %2362 = vmatprep.subr.bf16.mxu0 0
      %2363 = vmatpush1.bf16.msra.mxu0 %v2066
      %2364 = vmatprep.subr.bf16.mxu0 0
      %2365 = vmatpush1.bf16.msra.mxu0 %v2067
      %2366 = vmatprep.subr.bf16.mxu0 0
      %2367 = vmatpush1.bf16.msra.mxu0 %v2068
      %2368 = vmatprep.subr.bf16.mxu0 0
      %2369 = vmatpush1.bf16.msra.mxu0 %v2069
      %2370 = vmatprep.subr.bf16.mxu0 0
      %2371 = vmatpush1.bf16.msra.mxu0 %v2070
      %2372 = vmatprep.subr.bf16.mxu0 0
      %2373 = vmatpush1.bf16.msra.mxu0 %v2071
      %2374 = vmatprep.subr.bf16.mxu0 0
      %2375 = vmatpush1.bf16.msra.mxu0 %v2072
      %2376 = vmatprep.subr.bf16.mxu0 0
      %2377 = vmatpush1.bf16.msra.mxu0 %v2073
      %2378 = vmatprep.subr.bf16.mxu0 0
      %2379 = vmatpush1.bf16.msra.mxu0 %v2074
      %2380 = vmatprep.subr.bf16.mxu0 0
      %2381 = vmatpush1.bf16.msra.mxu0 %v2075
      %2382 = vmatprep.subr.bf16.mxu0 0
      %2383 = vmatpush1.bf16.msra.mxu0 %v2076
      %2384 = vmatprep.mubr.bf16.mxu0 %v1561
      %2385 = vmatmul.mubr.bf16.gmra.mrb[0].mxu0 %v1560
      %v2386 = vpop.f32.mrb[0].mxu0
      %v2387 = vadd.f32 %v2322, %v2386
      %v2388 = vpop.f32.mrb[0].mxu0
      %v2389 = vpop.f32.mrb[0].mxu0
      %v2390 = vadd.f32 %v2325, %v2389
      %v2391 = vpop.f32.mrb[0].mxu0
      %2392 = vmatprep.mubr.bf16.mxu0 %v1567
      %2393 = vmatmul.mubr.bf16.gmra.mrb[0].mxu0 %v1566
      %v2394 = vpop.f32.mrb[0].mxu0
      %v2395 = vadd.f32 %v2330, %v2394
      %v2396 = vpop.f32.mrb[0].mxu0
      %v2397 = vpop.f32.mrb[0].mxu0
      %v2398 = vadd.f32 %v2333, %v2397
      %v2399 = vpop.f32.mrb[0].mxu0
      %2400 = vmatprep.mubr.bf16.mxu0 %v1573
      %2401 = vmatmul.mubr.bf16.gmra.mrb[0].mxu0 %v1572
      %v2402 = vpop.f32.mrb[0].mxu0
      %v2403 = vadd.f32 %v2338, %v2402
      %v2404 = vpop.f32.mrb[0].mxu0
      %v2405 = vpop.f32.mrb[0].mxu0
      %v2406 = vadd.f32 %v2341, %v2405
      %v2407 = vpop.f32.mrb[0].mxu0
      %2408 = vmatprep.mubr.bf16.mxu0 %v1579
      %2409 = vmatmul.mubr.bf16.gmra.mrb[0].mxu0 %v1578
      %v2410 = vpop.f32.mrb[0].mxu0
      %v2411 = vadd.f32 %v2346, %v2410
      %v2412 = vpop.f32.mrb[0].mxu0
      %v2413 = vpop.f32.mrb[0].mxu0
      %v2414 = vadd.f32 %v2349, %v2413
      %v2415 = vpop.f32.mrb[0].mxu0
      %2416 = vdwg.mxu0
      %2417 = vmatprep.subr.bf16.mxu0 0
      %2418 = vmatpush1.bf16.msra.mxu0 %v2077
      %2419 = vmatprep.subr.bf16.mxu0 0
      %2420 = vmatpush1.bf16.msra.mxu0 %v2078
      %2421 = vmatprep.subr.bf16.mxu0 0
      %2422 = vmatpush1.bf16.msra.mxu0 %v2079
      %2423 = vmatprep.subr.bf16.mxu0 0
      %2424 = vmatpush1.bf16.msra.mxu0 %v2080
      %2425 = vmatprep.subr.bf16.mxu0 0
      %2426 = vmatpush1.bf16.msra.mxu0 %v2081
      %2427 = vmatprep.subr.bf16.mxu0 0
      %2428 = vmatpush1.bf16.msra.mxu0 %v2082
      %2429 = vmatprep.subr.bf16.mxu0 0
      %2430 = vmatpush1.bf16.msra.mxu0 %v2083
      %2431 = vmatprep.subr.bf16.mxu0 0
      %2432 = vmatpush1.bf16.msra.mxu0 %v2084
      %2433 = vmatprep.subr.bf16.mxu0 0
      %2434 = vmatpush1.bf16.msra.mxu0 0
      %2435 = vmatprep.subr.bf16.mxu0 0
      %2436 = vmatpush1.bf16.msra.mxu0 0
      %2437 = vmatprep.subr.bf16.mxu0 0
      %2438 = vmatpush1.bf16.msra.mxu0 0
      %2439 = vmatprep.subr.bf16.mxu0 0
      %2440 = vmatpush1.bf16.msra.mxu0 0
      %2441 = vmatprep.subr.bf16.mxu0 0
      %2442 = vmatpush1.bf16.msra.mxu0 0
      %2443 = vmatprep.subr.bf16.mxu0 0
      %2444 = vmatpush1.bf16.msra.mxu0 0
      %2445 = vmatprep.subr.bf16.mxu0 0
      %2446 = vmatpush1.bf16.msra.mxu0 0
      %2447 = vmatprep.subr.bf16.mxu0 0
      %2448 = vmatpush1.bf16.msra.mxu0 0
      %2449 = vmatprep.mubr.bf16.mxu0 0
      %2450 = vmatmul.mubr.bf16.gmra.mrb[0].mxu0 %v1562
      %v2451 = vpop.f32.mrb[0].mxu0
      %v2452 = vadd.f32 %v2387, %v2451
      %v2453 = vpop.f32.mrb[0].mxu0
      %v2454 = vpop.f32.mrb[0].mxu0
      %v2455 = vadd.f32 %v2390, %v2454
      %v2456 = vpop.f32.mrb[0].mxu0
      %2457 = vmatprep.mubr.bf16.mxu0 0
      %2458 = vmatmul.mubr.bf16.gmra.mrb[0].mxu0 %v1568
      %v2459 = vpop.f32.mrb[0].mxu0
      %v2460 = vadd.f32 %v2395, %v2459
      %v2461 = vpop.f32.mrb[0].mxu0
      %v2462 = vpop.f32.mrb[0].mxu0
      %v2463 = vadd.f32 %v2398, %v2462
      %v2464 = vpop.f32.mrb[0].mxu0
      %2465 = vmatprep.mubr.bf16.mxu0 0
      %2466 = vmatmul.mubr.bf16.gmra.mrb[0].mxu0 %v1574
      %v2467 = vpop.f32.mrb[0].mxu0
      %v2468 = vadd.f32 %v2403, %v2467
      %v2469 = vpop.f32.mrb[0].mxu0
      %v2470 = vpop.f32.mrb[0].mxu0
      %v2471 = vadd.f32 %v2406, %v2470
      %v2472 = vpop.f32.mrb[0].mxu0
      %2473 = vmatprep.mubr.bf16.mxu0 0
      %2474 = vmatmul.mubr.bf16.gmra.mrb[0].mxu0 %v1580
      %v2475 = vpop.f32.mrb[0].mxu0
      %v2476 = vadd.f32 %v2411, %v2475
      %v2477 = vpop.f32.mrb[0].mxu0
      %v2478 = vpop.f32.mrb[0].mxu0
      %v2479 = vadd.f32 %v2414, %v2478
      %v2480 = vpop.f32.mrb[0].mxu0
      %2481 = vdwg.mxu0
      %v2482 = vld [vmem:[%s5] sm:$0x1]
      %v2484 = vlaneseq
      %v2485 = vshrl.u32 %v2484, 7
      %v2486 = vsub.s32 0, %v2485
      %v2487 = vrot.slane %v2482, %v2486
      %v2489 = vmul.f32 %v2452, %v2487
      %v2490 = vmul.f32 %v2455, %v2487
      %v2491 = vmul.f32 %v2460, %v2487
      %v2492 = vmul.f32 %v2463, %v2487
      %v2493 = vmul.f32 %v2468, %v2487
      %v2494 = vmul.f32 %v2471, %v2487
      %v2495 = vmul.f32 %v2476, %v2487
      %v2496 = vmul.f32 %v2479, %v2487
      %v2497 = vld [vmem:[%s6] sm:$0x1]
      %v2499 = vlaneseq
      %v2500 = vshrl.u32 %v2499, 7
      %v2501 = vsub.s32 0, %v2500
      %v2502 = vrot.slane %v2497, %v2501
      %v2504 = vadd.f32 %v2489, %v2502
      %v2505 = vadd.f32 %v2490, %v2502
      %v2506 = vadd.f32 %v2491, %v2502
      %v2507 = vadd.f32 %v2492, %v2502
      %v2508 = vadd.f32 %v2493, %v2502
      %v2509 = vadd.f32 %v2494, %v2502
      %v2510 = vadd.f32 %v2495, %v2502
      %v2511 = vadd.f32 %v2496, %v2502
      %v2512 = vadd.f32 %v2504, %v280
      %v2513 = vadd.f32 %v2505, %v281
      %v2514 = vadd.f32 %v2506, %v282
      %v2515 = vadd.f32 %v2507, %v283
      %v2516 = vadd.f32 %v2508, %v284
      %v2517 = vadd.f32 %v2509, %v285
      %v2518 = vadd.f32 %v2510, %v286
      %v2519 = vadd.f32 %v2511, %v287
      %v2520 = vmax.f32 %v2512, 0.0
      %v2521 = vmax.f32 %v2513, 0.0
      %v2522 = vmax.f32 %v2514, 0.0
      %v2523 = vmax.f32 %v2515, 0.0
      %v2524 = vmax.f32 %v2516, 0.0
      %v2525 = vmax.f32 %v2517, 0.0
      %v2526 = vmax.f32 %v2518, 0.0
      %v2527 = vmax.f32 %v2519, 0.0
      %2528 = vst [vmem:[%s278] sm:$0xff] %v2520
      %2529 = vst [vmem:[%s278 + $0x8] sm:$0xff] %v2521
      %2530 = vst [vmem:[%s278 + $0x10] sm:$0xff] %v2522
      %2531 = vst [vmem:[%s278 + $0x18] sm:$0xff] %v2523
      %2532 = vst [vmem:[%s278 + $0x20] sm:$0xff] %v2524
      %2533 = vst [vmem:[%s278 + $0x28] sm:$0xff] %v2525
      %2534 = vst [vmem:[%s278 + $0x30] sm:$0xff] %v2526
      %2535 = vst [vmem:[%s278 + $0x38] sm:$0xff] %v2527
      %p2536 = scmp.lt.s32.totalorder %s18, 1
      %s2537 = scalar_select %p2536, %s18, 1
      %s2538 = smul.addr %s2537, 8
      %s2539 = smul.addr %s2538, 8
      %s2540 = scalar_lea.vmem %s7, %s2539
      // Predicated region
      $region49: #{res_stage_basetransform_forward.3} parent=47 // pred_check
        %p2541 = pneg %p188
      $region50: #{res_stage_basetransform_forward.3} parent=47 // pred_check_branch
        %2543 = sbr.rel (%p2541) target = $region52
      $region51: #{res_stage_basetransform_forward.3} parent=47 // pred_region
        _
      $region52: #{res_stage_basetransform_forward.3} parent=47 // pred_fallthru
        _
    $region48: #{res_stage_basetransform_forward.3} parent=5 // pred_fallthru
      _
    %p2544 = scmp.le.s32.totalorder 2, %s13
    // Predicated region
    $region53: #{res_stage_basetransform_forward.3} parent=5 // pred_check
      %p2545 = pneg %p2544
    $region54: #{res_stage_basetransform_forward.3} parent=5 // pred_check_branch
      %2547 = sbr.rel (%p2545) target = $region56
    $region55: #{res_stage_basetransform_forward.3} parent=5 // pred_region
      %s2548 = ssub.s32 %s13, 2
      // Predicated region
      $region57: #{res_stage_basetransform_forward.3} parent=55 // pred_check
        %p2549 = pneg %p194
      $region58: #{res_stage_basetransform_forward.3} parent=55 // pred_check_branch
        %2551 = sbr.rel (%p2549) target = $region60
      $region59: #{res_stage_basetransform_forward.3} parent=55 // pred_region
        %p2552 = scmp.lt.s32.totalorder %s19, 1
        %s2553 = scalar_select %p2552, %s19, 1
        %s2554 = smul.addr %s2553, 8
        %s2555 = smul.addr %s2554, 8
        %s2556 = scalar_lea.vmem %s7, %s2555
      $region60: #{res_stage_basetransform_forward.3} parent=55 // pred_fallthru
        _
    $region56: #{res_stage_basetransform_forward.3} parent=5 // pred_fallthru
      _
  $region6: #{res_stage_basetransform_forward.3} parent=0 // loop_footer
    %s17 = sadd.s32 1, %s13
  $region7: #{res_stage_basetransform_forward.3} parent=0 // loop_footer_branch
    %12 = sbr.rel target = $region3
  $region8: #{res_stage_basetransform_forward.3} parent=0 // loop_exit
    _

// kernel: res_stage_basetransform_forward.2
$region0: #{res_stage_basetransform_forward.2}
  #allocation0 [shape = 'u32[]', space=smem, size = 0x4, offset = 0x4, fixed_abs, tag = 'smem constant byte address 0x4 - core index']
  #allocation1 [shape = 'u32[144,128]{1,0:T(1,128)}', space=vmem, size = 0x12000, scoped, tag = 'internal scratch']
  #allocation2 [shape = 'f32[10,10,128]{2,1,0:T(8,128)}', space=vmem, size = 0x14000, scoped, tag = 'scratch operand']
  %s0 = inlined_call_operand.vmem [shape: f32[2,4,9,9,128], index: 0, kind: input, shape index: {}]
  %s1 = inlined_call_operand.vmem [shape: bf16[1152,128], index: 1, kind: input, shape index: {}]
  %s2 = inlined_call_operand.vmem [shape: f32[1,128], index: 2, kind: input, shape index: {}]
  %s3 = inlined_call_operand.vmem [shape: f32[1,128], index: 3, kind: input, shape index: {}]
  %s4 = inlined_call_operand.vmem [shape: bf16[1152,128], index: 4, kind: input, shape index: {}]
  %s5 = inlined_call_operand.vmem [shape: f32[1,128], index: 5, kind: input, shape index: {}]
  %s6 = inlined_call_operand.vmem [shape: f32[1,128], index: 6, kind: input, shape index: {}]
  %s7 = inlined_call_operand.vmem [shape: bf16[128,128], index: 7, kind: input, shape index: {}]
  %s8 = inlined_call_operand.vmem [shape: f32[1,128], index: 8, kind: input, shape index: {}]
  %s9 = inlined_call_operand.vmem [shape: f32[1,128], index: 9, kind: input, shape index: {}]
  %s10 = inlined_call_operand.vmem [shape: f32[2,8,8,128], index: 10, kind: output, shape index: {}]
  %s11 = sld [smem:[#allocation0]]
  $region73: #{res_stage_basetransform_forward.2} parent=0
    _
  %s13 = ssub.s32 1, %s11
  %s14 = scalar_select 0, %s13, %s11
  loop: start=0, step=1, limit=4
  $region2: #{res_stage_basetransform_forward.2} parent=0 // loop_pre_header
    _
  $region3: #{res_stage_basetransform_forward.2} parent=0 // loop_header
    %s16 = sphi 0, %s20
    %p17 = scmp.ge.s32.totalorder %s16, 4
    %s26 = sphi 0, %s28
    %s29 = sphi 0, %s26
    %s30 = sphi 0, %s29
    %s46 = sphi 0, %s30
    %s50 = sphi 0, %s50
    %s52 = sphi 0, %s50
    %s53 = sphi 0, %s52
    %s67 = sphi 0, %s53
    %s71 = sphi 0, %s71
    %s73 = sphi 0, %s71
    %s74 = sphi 0, %s73
    %s88 = sphi 0, %s74
    %s92 = sphi 0, %s92
    %s94 = sphi 0, %s92
    %s95 = sphi 0, %s94
    %s109 = sphi 0, %s95
    %s113 = sphi 0, %s113
    %s115 = sphi 0, %s113
    %s116 = sphi 0, %s115
    %s130 = sphi 0, %s116
    %s134 = sphi 0, %s134
    %s136 = sphi 0, %s134
    %s137 = sphi 0, %s136
    %s151 = sphi 0, %s137
    %s155 = sphi 0, %s155
    %s157 = sphi 0, %s155
    %s158 = sphi 0, %s157
    %s172 = sphi 0, %s158
    %s176 = sphi 0, %s176
    %s178 = sphi 0, %s176
    %s179 = sphi 0, %s178
    %s193 = sphi 0, %s179
    %s197 = sphi 0, %s197
    %s199 = sphi 0, %s197
    %s200 = sphi 0, %s199
    %s214 = sphi 0, %s200
    %s218 = sphi 0, %s218
    %s220 = sphi 0, %s218
    %s221 = sphi 0, %s220
    %s235 = sphi 0, %s221
    %s241 = sphi 0, %s243
    %s244 = sphi 0, %s241
    %s245 = sphi 0, %s244
    %s261 = sphi 0, %s245
  $region4: #{res_stage_basetransform_forward.2} parent=0 // loop_header_branch
    %19 = sbr.rel (%p17) target = $region8
  $region5: #{res_stage_basetransform_forward.2} parent=0 // loop_body
    %s21 = ssub.s32 %s16, 1
    %s22 = ssub.s32 %s16, 2
    %s23 = sadd.s32 %s16, 1
    %s24 = ssub.s32 %s16, %s23
    %p25 = scmp.eq.s32.totalorder %s24, 0
    %s27 = sadd.s32 %s26, 1
    %s28 = scalar_select %p25, %s26, %s27
    %p31 = pneg %p25
    %p32 = scmp.eq.s32.totalorder %s16, 1
    %p33 = por %p31, %p32
    %p34 = scmp.ne.s32.totalorder %s26, %s29
    %p35 = scmp.eq.s32.totalorder %s16, 0
    %p36 = por %p34, %p35
    %p37 = scmp.ne.s32.totalorder %s26, %s29
    %p38 = scmp.eq.s32.totalorder %s21, 1
    %p39 = por %p37, %p38
    %p40 = scmp.ne.s32.totalorder %s29, %s30
    %p41 = scmp.eq.s32.totalorder %s21, 0
    %p42 = por %p40, %p41
    %p43 = scmp.ne.s32.totalorder %s29, %s30
    %p44 = scmp.eq.s32.totalorder %s22, 1
    %p45 = por %p43, %p44
    %p47 = scmp.ne.s32.totalorder %s30, %s46
    %p48 = scmp.eq.s32.totalorder %s22, 0
    %p49 = por %p47, %p48
    %s51 = sadd.s32 %s50, 1
    %p54 = scmp.eq.s32.totalorder %s16, 1
    %p55 = scmp.ne.s32.totalorder %s50, %s52
    %p56 = scmp.eq.s32.totalorder %s16, 0
    %p57 = por %p55, %p56
    %p58 = scmp.ne.s32.totalorder %s50, %s52
    %p59 = scmp.eq.s32.totalorder %s21, 1
    %p60 = por %p58, %p59
    %p61 = scmp.ne.s32.totalorder %s52, %s53
    %p62 = scmp.eq.s32.totalorder %s21, 0
    %p63 = por %p61, %p62
    %p64 = scmp.ne.s32.totalorder %s52, %s53
    %p65 = scmp.eq.s32.totalorder %s22, 1
    %p66 = por %p64, %p65
    %p68 = scmp.ne.s32.totalorder %s53, %s67
    %p69 = scmp.eq.s32.totalorder %s22, 0
    %p70 = por %p68, %p69
    %s72 = sadd.s32 %s71, 1
    %p75 = scmp.eq.s32.totalorder %s16, 1
    %p76 = scmp.ne.s32.totalorder %s71, %s73
    %p77 = scmp.eq.s32.totalorder %s16, 0
    %p78 = por %p76, %p77
    %p79 = scmp.ne.s32.totalorder %s71, %s73
    %p80 = scmp.eq.s32.totalorder %s21, 1
    %p81 = por %p79, %p80
    %p82 = scmp.ne.s32.totalorder %s73, %s74
    %p83 = scmp.eq.s32.totalorder %s21, 0
    %p84 = por %p82, %p83
    %p85 = scmp.ne.s32.totalorder %s73, %s74
    %p86 = scmp.eq.s32.totalorder %s22, 1
    %p87 = por %p85, %p86
    %p89 = scmp.ne.s32.totalorder %s74, %s88
    %p90 = scmp.eq.s32.totalorder %s22, 0
    %p91 = por %p89, %p90
    %s93 = sadd.s32 %s92, 1
    %p96 = scmp.eq.s32.totalorder %s16, 1
    %p97 = scmp.ne.s32.totalorder %s92, %s94
    %p98 = scmp.eq.s32.totalorder %s16, 0
    %p99 = por %p97, %p98
    %p100 = scmp.ne.s32.totalorder %s92, %s94
    %p101 = scmp.eq.s32.totalorder %s21, 1
    %p102 = por %p100, %p101
    %p103 = scmp.ne.s32.totalorder %s94, %s95
    %p104 = scmp.eq.s32.totalorder %s21, 0
    %p105 = por %p103, %p104
    %p106 = scmp.ne.s32.totalorder %s94, %s95
    %p107 = scmp.eq.s32.totalorder %s22, 1
    %p108 = por %p106, %p107
    %p110 = scmp.ne.s32.totalorder %s95, %s109
    %p111 = scmp.eq.s32.totalorder %s22, 0
    %p112 = por %p110, %p111
    %s114 = sadd.s32 %s113, 1
    %p117 = scmp.eq.s32.totalorder %s16, 1
    %p118 = scmp.ne.s32.totalorder %s113, %s115
    %p119 = scmp.eq.s32.totalorder %s16, 0
    %p120 = por %p118, %p119
    %p121 = scmp.ne.s32.totalorder %s113, %s115
    %p122 = scmp.eq.s32.totalorder %s21, 1
    %p123 = por %p121, %p122
    %p124 = scmp.ne.s32.totalorder %s115, %s116
    %p125 = scmp.eq.s32.totalorder %s21, 0
    %p126 = por %p124, %p125
    %p127 = scmp.ne.s32.totalorder %s115, %s116
    %p128 = scmp.eq.s32.totalorder %s22, 1
    %p129 = por %p127, %p128
    %p131 = scmp.ne.s32.totalorder %s116, %s130
    %p132 = scmp.eq.s32.totalorder %s22, 0
    %p133 = por %p131, %p132
    %s135 = sadd.s32 %s134, 1
    %p138 = scmp.eq.s32.totalorder %s16, 1
    %p139 = scmp.ne.s32.totalorder %s134, %s136
    %p140 = scmp.eq.s32.totalorder %s16, 0
    %p141 = por %p139, %p140
    %p142 = scmp.ne.s32.totalorder %s134, %s136
    %p143 = scmp.eq.s32.totalorder %s21, 1
    %p144 = por %p142, %p143
    %p145 = scmp.ne.s32.totalorder %s136, %s137
    %p146 = scmp.eq.s32.totalorder %s21, 0
    %p147 = por %p145, %p146
    %p148 = scmp.ne.s32.totalorder %s136, %s137
    %p149 = scmp.eq.s32.totalorder %s22, 1
    %p150 = por %p148, %p149
    %p152 = scmp.ne.s32.totalorder %s137, %s151
    %p153 = scmp.eq.s32.totalorder %s22, 0
    %p154 = por %p152, %p153
    %s156 = sadd.s32 %s155, 1
    %p159 = scmp.eq.s32.totalorder %s16, 1
    %p160 = scmp.ne.s32.totalorder %s155, %s157
    %p161 = scmp.eq.s32.totalorder %s16, 0
    %p162 = por %p160, %p161
    %p163 = scmp.ne.s32.totalorder %s155, %s157
    %p164 = scmp.eq.s32.totalorder %s21, 1
    %p165 = por %p163, %p164
    %p166 = scmp.ne.s32.totalorder %s157, %s158
    %p167 = scmp.eq.s32.totalorder %s21, 0
    %p168 = por %p166, %p167
    %p169 = scmp.ne.s32.totalorder %s157, %s158
    %p170 = scmp.eq.s32.totalorder %s22, 1
    %p171 = por %p169, %p170
    %p173 = scmp.ne.s32.totalorder %s158, %s172
    %p174 = scmp.eq.s32.totalorder %s22, 0
    %p175 = por %p173, %p174
    %s177 = sadd.s32 %s176, 1
    %p180 = scmp.eq.s32.totalorder %s16, 1
    %p181 = scmp.ne.s32.totalorder %s176, %s178
    %p182 = scmp.eq.s32.totalorder %s16, 0
    %p183 = por %p181, %p182
    %p184 = scmp.ne.s32.totalorder %s176, %s178
    %p185 = scmp.eq.s32.totalorder %s21, 1
    %p186 = por %p184, %p185
    %p187 = scmp.ne.s32.totalorder %s178, %s179
    %p188 = scmp.eq.s32.totalorder %s21, 0
    %p189 = por %p187, %p188
    %p190 = scmp.ne.s32.totalorder %s178, %s179
    %p191 = scmp.eq.s32.totalorder %s22, 1
    %p192 = por %p190, %p191
    %p194 = scmp.ne.s32.totalorder %s179, %s193
    %p195 = scmp.eq.s32.totalorder %s22, 0
    %p196 = por %p194, %p195
    %s198 = sadd.s32 %s197, 1
    %p201 = scmp.eq.s32.totalorder %s16, 1
    %p202 = scmp.ne.s32.totalorder %s197, %s199
    %p203 = scmp.eq.s32.totalorder %s16, 0
    %p204 = por %p202, %p203
    %p205 = scmp.ne.s32.totalorder %s197, %s199
    %p206 = scmp.eq.s32.totalorder %s21, 1
    %p207 = por %p205, %p206
    %p208 = scmp.ne.s32.totalorder %s199, %s200
    %p209 = scmp.eq.s32.totalorder %s21, 0
    %p210 = por %p208, %p209
    %p211 = scmp.ne.s32.totalorder %s199, %s200
    %p212 = scmp.eq.s32.totalorder %s22, 1
    %p213 = por %p211, %p212
    %p215 = scmp.ne.s32.totalorder %s200, %s214
    %p216 = scmp.eq.s32.totalorder %s22, 0
    %p217 = por %p215, %p216
    %s219 = sadd.s32 %s218, 1
    %p222 = scmp.eq.s32.totalorder %s16, 1
    %p223 = scmp.ne.s32.totalorder %s218, %s220
    %p224 = scmp.eq.s32.totalorder %s16, 0
    %p225 = por %p223, %p224
    %p226 = scmp.ne.s32.totalorder %s218, %s220
    %p227 = scmp.eq.s32.totalorder %s21, 1
    %p228 = por %p226, %p227
    %p229 = scmp.ne.s32.totalorder %s220, %s221
    %p230 = scmp.eq.s32.totalorder %s21, 0
    %p231 = por %p229, %p230
    %p232 = scmp.ne.s32.totalorder %s220, %s221
    %p233 = scmp.eq.s32.totalorder %s22, 1
    %p234 = por %p232, %p233
    %p236 = scmp.ne.s32.totalorder %s221, %s235
    %p237 = scmp.eq.s32.totalorder %s22, 0
    %p238 = por %p236, %p237
    %s239 = ssub.s32 %s16, %s23
    %p240 = scmp.eq.s32.totalorder %s239, 0
    %s242 = sadd.s32 %s241, 1
    %s243 = scalar_select %p240, %s241, %s242
    %p246 = pneg %p240
    %p247 = scmp.eq.s32.totalorder %s16, 1
    %p248 = por %p246, %p247
    %p249 = scmp.ne.s32.totalorder %s241, %s244
    %p250 = scmp.eq.s32.totalorder %s16, 0
    %p251 = por %p249, %p250
    %p252 = scmp.ne.s32.totalorder %s241, %s244
    %p253 = scmp.eq.s32.totalorder %s21, 1
    %p254 = por %p252, %p253
    %p255 = scmp.ne.s32.totalorder %s244, %s245
    %p256 = scmp.eq.s32.totalorder %s21, 0
    %p257 = por %p255, %p256
    %p258 = scmp.ne.s32.totalorder %s244, %s245
    %p259 = scmp.eq.s32.totalorder %s22, 1
    %p260 = por %p258, %p259
    %p262 = scmp.ne.s32.totalorder %s245, %s261
    %p263 = scmp.eq.s32.totalorder %s22, 0
    %p264 = por %p262, %p263
    %p265 = scmp.le.s32.totalorder 1, %s16
    %p266 = scmp.lt.s32.totalorder %s16, 3
    %p267 = pnand %p265, %p266
    %p268 = pneg %p267
    // Predicated region
    $region9: #{res_stage_basetransform_forward.2} parent=5 // pred_check
      _
    $region10: #{res_stage_basetransform_forward.2} parent=5 // pred_check_branch
      %270 = sbr.rel (%p267) target = $region12
    $region11: #{res_stage_basetransform_forward.2} parent=5 // pred_region
      %s271 = ssub.s32 %s16, 1
      // Predicated region
      $region13: #{res_stage_basetransform_forward.2} parent=11 // pred_check
        %p272 = pneg %p63
      $region14: #{res_stage_basetransform_forward.2} parent=11 // pred_check_branch
        %274 = sbr.rel (%p272) target = $region16
      $region15: #{res_stage_basetransform_forward.2} parent=11 // pred_region
        _
      $region16: #{res_stage_basetransform_forward.2} parent=11 // pred_fallthru
        _
      // Predicated region
      $region17: #{res_stage_basetransform_forward.2} parent=11 // pred_check
        %p275 = pneg %p84
      $region18: #{res_stage_basetransform_forward.2} parent=11 // pred_check_branch
        %277 = sbr.rel (%p275) target = $region20
      $region19: #{res_stage_basetransform_forward.2} parent=11 // pred_region
        _
      $region20: #{res_stage_basetransform_forward.2} parent=11 // pred_fallthru
        _
      // Predicated region
      $region21: #{res_stage_basetransform_forward.2} parent=11 // pred_check
        %p278 = pneg %p105
      $region22: #{res_stage_basetransform_forward.2} parent=11 // pred_check_branch
        %280 = sbr.rel (%p278) target = $region24
      $region23: #{res_stage_basetransform_forward.2} parent=11 // pred_region
        _
      $region24: #{res_stage_basetransform_forward.2} parent=11 // pred_fallthru
        _
      // Predicated region
      $region25: #{res_stage_basetransform_forward.2} parent=11 // pred_check
        %p281 = pneg %p126
      $region26: #{res_stage_basetransform_forward.2} parent=11 // pred_check_branch
        %283 = sbr.rel (%p281) target = $region28
      $region27: #{res_stage_basetransform_forward.2} parent=11 // pred_region
        _
      $region28: #{res_stage_basetransform_forward.2} parent=11 // pred_fallthru
        _
      // Predicated region
      $region29: #{res_stage_basetransform_forward.2} parent=11 // pred_check
        %p284 = pneg %p147
      $region30: #{res_stage_basetransform_forward.2} parent=11 // pred_check_branch
        %286 = sbr.rel (%p284) target = $region32
      $region31: #{res_stage_basetransform_forward.2} parent=11 // pred_region
        _
      $region32: #{res_stage_basetransform_forward.2} parent=11 // pred_fallthru
        _
      // Predicated region
      $region33: #{res_stage_basetransform_forward.2} parent=11 // pred_check
        %p287 = pneg %p168
      $region34: #{res_stage_basetransform_forward.2} parent=11 // pred_check_branch
        %289 = sbr.rel (%p287) target = $region36
      $region35: #{res_stage_basetransform_forward.2} parent=11 // pred_region
        _
      $region36: #{res_stage_basetransform_forward.2} parent=11 // pred_fallthru
        _
      // Predicated region
      $region37: #{res_stage_basetransform_forward.2} parent=11 // pred_check
        %p290 = pneg %p189
      $region38: #{res_stage_basetransform_forward.2} parent=11 // pred_check_branch
        %292 = sbr.rel (%p290) target = $region40
      $region39: #{res_stage_basetransform_forward.2} parent=11 // pred_region
        _
      $region40: #{res_stage_basetransform_forward.2} parent=11 // pred_fallthru
        _
      // Predicated region
      $region41: #{res_stage_basetransform_forward.2} parent=11 // pred_check
        %p293 = pneg %p210
      $region42: #{res_stage_basetransform_forward.2} parent=11 // pred_check_branch
        %295 = sbr.rel (%p293) target = $region44
      $region43: #{res_stage_basetransform_forward.2} parent=11 // pred_region
        _
      $region44: #{res_stage_basetransform_forward.2} parent=11 // pred_fallthru
        _
      // Predicated region
      $region45: #{res_stage_basetransform_forward.2} parent=11 // pred_check
        %p296 = pneg %p231
      $region46: #{res_stage_basetransform_forward.2} parent=11 // pred_check_branch
        %298 = sbr.rel (%p296) target = $region48
      $region47: #{res_stage_basetransform_forward.2} parent=11 // pred_region
        _
      $region48: #{res_stage_basetransform_forward.2} parent=11 // pred_fallthru
        _
    $region12: #{res_stage_basetransform_forward.2} parent=5 // pred_fallthru
      _
    %p299 = scmp.lt.s32.totalorder %s16, 2
    // Predicated region
    $region49: #{res_stage_basetransform_forward.2} parent=5 // pred_check
      %p300 = pneg %p299
    $region50: #{res_stage_basetransform_forward.2} parent=5 // pred_check_branch
      %302 = sbr.rel (%p300) target = $region52
    $region51: #{res_stage_basetransform_forward.2} parent=5 // pred_region
      // Predicated region
      $region53: #{res_stage_basetransform_forward.2} parent=51 // pred_check
        %p303 = pneg %p36
      $region54: #{res_stage_basetransform_forward.2} parent=51 // pred_check_branch
        %305 = sbr.rel (%p303) target = $region56
      $region55: #{res_stage_basetransform_forward.2} parent=51 // pred_region
        %p306 = scmp.lt.s32.totalorder %s16, 1
        %s307 = scalar_select %p306, %s16, 1
        %s308 = smul.addr %s307, 72
        %s309 = smul.addr %s308, 8
        %s310 = scalar_lea.vmem %s0, %s309
      $region56: #{res_stage_basetransform_forward.2} parent=51 // pred_fallthru
        _
    $region52: #{res_stage_basetransform_forward.2} parent=5 // pred_fallthru
      _
    %p311 = scmp.le.s32.totalorder 1, %s16
    %p312 = scmp.lt.s32.totalorder %s16, 3
    %p313 = pnand %p311, %p312
    %p314 = pneg %p313
    // Predicated region
    $region57: #{res_stage_basetransform_forward.2} parent=5 // pred_check
      _
    $region58: #{res_stage_basetransform_forward.2} parent=5 // pred_check_branch
      %316 = sbr.rel (%p313) target = $region60
    $region59: #{res_stage_basetransform_forward.2} parent=5 // pred_region
      %s317 = ssub.s32 %s16, 1
      %p318 = scmp.lt.s32.totalorder %s21, 1
      %s319 = scalar_select %p318, %s21, 1
      %s320 = smul.addr %s319, 72
      %s321 = smul.addr %s320, 8
      %s322 = scalar_lea.vmem %s0, %s321
      %p323 = pneg %p42
      %p324 = pneg %p39
      %p325 = pneg %p63
      %p326 = pneg %p60
      %p327 = pneg %p84
      %p328 = pneg %p81
      %p329 = pneg %p105
      %p330 = pneg %p102
      %p331 = pneg %p126
      %p332 = pneg %p123
      %p333 = pneg %p147
      %p334 = pneg %p144
      %p335 = pneg %p168
      %p336 = pneg %p165
      %p337 = pneg %p189
      %p338 = pneg %p186
      %p339 = pneg %p210
      %p340 = pneg %p207
      %p341 = pneg %p231
      %p342 = pneg %p228
      %p343 = pneg %p257
      %p344 = pneg %p254
      %p345 = scmp.lt.s32.totalorder %s21, 1
      %s346 = scalar_select %p345, %s21, 1
      %s347 = smul.addr %s346, 8
      %s348 = smul.addr %s347, 8
      %s349 = scalar_lea.vmem %s10, %s348
      %p350 = scmp.lt.s32.totalorder %s21, 1
      %s351 = scalar_select %p350, %s21, 1
      %s352 = smul.addr %s351, 72
      %s353 = smul.addr %s352, 8
      %s354 = scalar_lea.vmem %s0, %s353
      %p355 = scmp.lt.s32.totalorder %s21, 1
      %s356 = scalar_select %p355, %s21, 1
      %s357 = smul.addr %s356, 8
      %s358 = smul.addr %s357, 8
      %s359 = scalar_lea.vmem %s10, %s358
      %v361 = vld [vmem:[%s354] sm:$0xff]
      %v362 = vld [vmem:[%s354 + $0x8] sm:$0x1]
      %v363 = vld [vmem:[%s354 + $0x10] sm:$0xff]
      %v364 = vld [vmem:[%s354 + $0x18] sm:$0x1]
      %v365 = vld [vmem:[%s354 + $0x20] sm:$0xff]
      %v366 = vld [vmem:[%s354 + $0x28] sm:$0x1]
      %v367 = vld [vmem:[%s354 + $0x30] sm:$0xff]
      %v368 = vld [vmem:[%s354 + $0x38] sm:$0x1]
      %v369 = vld [vmem:[%s354 + $0x40] sm:$0xff]
      %v370 = vld [vmem:[%s354 + $0x48] sm:$0x1]
      %v371 = vld [vmem:[%s354 + $0x50] sm:$0xff]
      %v372 = vld [vmem:[%s354 + $0x58] sm:$0x1]
      %v373 = vld [vmem:[%s354 + $0x60] sm:$0xff]
      %v374 = vld [vmem:[%s354 + $0x68] sm:$0x1]
      %v375 = vld [vmem:[%s354 + $0x70] sm:$0xff]
      %v376 = vld [vmem:[%s354 + $0x78] sm:$0x1]
      %v377 = vld [vmem:[%s354 + $0x80] sm:$0xff]
      %v378 = vld [vmem:[%s354 + $0x88] sm:$0x1]
      %v379 = vld [vmem:[%s354 + $0x90] sm:$0xff]
      %v380 = vld [vmem:[%s354 + $0xa0] sm:$0xff]
      %v381 = vld [vmem:[%s354 + $0xb0] sm:$0xff]
      %v382 = vld [vmem:[%s354 + $0xc0] sm:$0xff]
      %v383 = vld [vmem:[%s354 + $0xd0] sm:$0xff]
      %v384 = vld [vmem:[%s354 + $0xe0] sm:$0xff]
      %v385 = vld [vmem:[%s354 + $0xf0] sm:$0xff]
      %v386 = vld [vmem:[%s354 + $0x100] sm:$0xff]
      %v387 = vld [vmem:[%s354 + $0x110] sm:$0xff]
      %v388 = vld [vmem:[%s354 + $0x120] sm:$0xff]
      %v389 = vld [vmem:[%s354 + $0x128] sm:$0x1]
      %v390 = vld [vmem:[%s354 + $0x130] sm:$0xff]
      %v391 = vld [vmem:[%s354 + $0x138] sm:$0x1]
      %v392 = vld [vmem:[%s354 + $0x140] sm:$0xff]
      %v393 = vld [vmem:[%s354 + $0x148] sm:$0x1]
      %v394 = vld [vmem:[%s354 + $0x150] sm:$0xff]
      %v395 = vld [vmem:[%s354 + $0x158] sm:$0x1]
      %v396 = vld [vmem:[%s354 + $0x160] sm:$0xff]
      %v397 = vld [vmem:[%s354 + $0x168] sm:$0x1]
      %v398 = vld [vmem:[%s354 + $0x170] sm:$0xff]
      %v399 = vld [vmem:[%s354 + $0x178] sm:$0x1]
      %v400 = vld [vmem:[%s354 + $0x180] sm:$0xff]
      %v401 = vld [vmem:[%s354 + $0x188] sm:$0x1]
      %v402 = vld [vmem:[%s354 + $0x190] sm:$0xff]
      %v403 = vld [vmem:[%s354 + $0x198] sm:$0x1]
      %v404 = vld [vmem:[%s354 + $0x1b0] sm:$0xff]
      %v405 = vld [vmem:[%s354 + $0x1c0] sm:$0xff]
      %v406 = vld [vmem:[%s354 + $0x1d0] sm:$0xff]
      %v407 = vld [vmem:[%s354 + $0x1e0] sm:$0xff]
      %v408 = vld [vmem:[%s354 + $0x1f0] sm:$0xff]
      %v409 = vld [vmem:[%s354 + $0x200] sm:$0xff]
      %v410 = vld [vmem:[%s354 + $0x210] sm:$0xff]
      %v411 = vld [vmem:[%s354 + $0x220] sm:$0xff]
      %vm428 = vcmask 1046528
      %v429 = vrot.slane %v361, 1
      %v430 = vrot.slane %v362, 1
      %v431 = vsel %vm428, %v429, %v430
      %v432 = vrot.slane %v363, 1
      %v433 = vrot.slane %v364, 1
      %v434 = vsel %vm428, %v432, %v433
      %v435 = vrot.slane %v365, 1
      %v436 = vrot.slane %v366, 1
      %v437 = vsel %vm428, %v435, %v436
      %v438 = vrot.slane %v367, 1
      %v439 = vrot.slane %v368, 1
      %v440 = vsel %vm428, %v438, %v439
      %v441 = vrot.slane %v369, 1
      %v442 = vrot.slane %v370, 1
      %v443 = vsel %vm428, %v441, %v442
      %v444 = vrot.slane %v371, 1
      %v445 = vrot.slane %v372, 1
      %v446 = vsel %vm428, %v444, %v445
      %v447 = vrot.slane %v373, 1
      %v448 = vrot.slane %v374, 1
      %v449 = vsel %vm428, %v447, %v448
      %v450 = vrot.slane %v375, 1
      %v451 = vrot.slane %v376, 1
      %v452 = vsel %vm428, %v450, %v451
      %v477 = vrot.slane %v388, 1
      %v478 = vrot.slane %v389, 1
      %v479 = vsel %vm428, %v477, %v478
      %v480 = vrot.slane %v390, 1
      %v481 = vrot.slane %v391, 1
      %v482 = vsel %vm428, %v480, %v481
      %v483 = vrot.slane %v392, 1
      %v484 = vrot.slane %v393, 1
      %v485 = vsel %vm428, %v483, %v484
      %v486 = vrot.slane %v394, 1
      %v487 = vrot.slane %v395, 1
      %v488 = vsel %vm428, %v486, %v487
      %v489 = vrot.slane %v396, 1
      %v490 = vrot.slane %v397, 1
      %v491 = vsel %vm428, %v489, %v490
      %v492 = vrot.slane %v398, 1
      %v493 = vrot.slane %v399, 1
      %v494 = vsel %vm428, %v492, %v493
      %v495 = vrot.slane %v400, 1
      %v496 = vrot.slane %v401, 1
      %v497 = vsel %vm428, %v495, %v496
      %v498 = vrot.slane %v402, 1
      %v499 = vrot.slane %v403, 1
      %v500 = vsel %vm428, %v498, %v499
      %v511 = vrot.slane %v377, 1
      %v512 = vrot.slane %v378, 1
      %v513 = vsel %vm428, %v511, %v512
      %v515 = vpack.c.bf16 %v363, %v361
      %v516 = vpack.c.bf16 %v380, %v379
      %v517 = vpack.c.bf16 %v434, %v431
      %v518 = vpack.c.bf16 %v390, %v388
      %v519 = vpack.c.bf16 %v405, %v404
      %v520 = vpack.c.bf16 %v482, %v479
      %v521 = vpack.c.bf16 %v365, %v363
      %v522 = vpack.c.bf16 %v381, %v380
      %v523 = vpack.c.bf16 %v437, %v434
      %v524 = vpack.c.bf16 %v367, %v365
      %v525 = vpack.c.bf16 %v382, %v381
      %v526 = vpack.c.bf16 %v440, %v437
      %v527 = vpack.c.bf16 %v394, %v392
      %v528 = vpack.c.bf16 %v407, %v406
      %v529 = vpack.c.bf16 %v488, %v485
      %v530 = vpack.c.bf16 %v369, %v367
      %v531 = vpack.c.bf16 %v383, %v382
      %v532 = vpack.c.bf16 %v443, %v440
      %v533 = vpack.c.bf16 %v371, %v369
      %v534 = vpack.c.bf16 %v384, %v383
      %v535 = vpack.c.bf16 %v446, %v443
      %v536 = vpack.c.bf16 %v398, %v396
      %v537 = vpack.c.bf16 %v409, %v408
      %v538 = vpack.c.bf16 %v494, %v491
      %v539 = vpack.c.bf16 %v373, %v371
      %v540 = vpack.c.bf16 %v385, %v384
      %v541 = vpack.c.bf16 %v449, %v446
      %v542 = vpack.c.bf16 %v375, %v373
      %v543 = vpack.c.bf16 %v386, %v385
      %v544 = vpack.c.bf16 %v452, %v449
      %v545 = vpack.c.bf16 %v402, %v400
      %v546 = vpack.c.bf16 %v411, %v410
      %v547 = vpack.c.bf16 %v500, %v497
      %v548 = vpack.c.bf16 %v377, %v375
      %v549 = vpack.c.bf16 %v387, %v386
      %v550 = vpack.c.bf16 %v513, %v452
      %v551 = vld [vmem:[%s1] sm:$0xf]
      %v552 = vld [vmem:[%s1 + $0x4] sm:$0xf]
      %v553 = vld [vmem:[%s1 + $0x8] sm:$0xf]
      %v554 = vld [vmem:[%s1 + $0xc] sm:$0xf]
      %v555 = vld [vmem:[%s1 + $0x10] sm:$0xf]
      %v556 = vld [vmem:[%s1 + $0x14] sm:$0xf]
      %v557 = vld [vmem:[%s1 + $0x18] sm:$0xf]
      %v558 = vld [vmem:[%s1 + $0x1c] sm:$0xf]
      %v559 = vld [vmem:[%s1 + $0x20] sm:$0xf]
      %v560 = vld [vmem:[%s1 + $0x24] sm:$0xf]
      %v561 = vld [vmem:[%s1 + $0x28] sm:$0xf]
      %v562 = vld [vmem:[%s1 + $0x2c] sm:$0xf]
      %v563 = vld [vmem:[%s1 + $0x30] sm:$0xf]
      %v564 = vld [vmem:[%s1 + $0x34] sm:$0xf]
      %v565 = vld [vmem:[%s1 + $0x38] sm:$0xf]
      %v566 = vld [vmem:[%s1 + $0x3c] sm:$0xf]
      %v567 = vld [vmem:[%s1 + $0x40] sm:$0xf]
      %v568 = vld [vmem:[%s1 + $0x44] sm:$0xf]
      %v569 = vld [vmem:[%s1 + $0x48] sm:$0xf]
      %v570 = vld [vmem:[%s1 + $0x4c] sm:$0xf]
      %v571 = vld [vmem:[%s1 + $0x50] sm:$0xf]
      %v572 = vld [vmem:[%s1 + $0x54] sm:$0xf]
      %v573 = vld [vmem:[%s1 + $0x58] sm:$0xf]
      %v574 = vld [vmem:[%s1 + $0x5c] sm:$0xf]
      %v575 = vld [vmem:[%s1 + $0x60] sm:$0xf]
      %v576 = vld [vmem:[%s1 + $0x64] sm:$0xf]
      %v577 = vld [vmem:[%s1 + $0x68] sm:$0xf]
      %v578 = vld [vmem:[%s1 + $0x6c] sm:$0xf]
      %v579 = vld [vmem:[%s1 + $0x70] sm:$0xf]
      %v580 = vld [vmem:[%s1 + $0x74] sm:$0xf]
      %v581 = vld [vmem:[%s1 + $0x78] sm:$0xf]
      %v582 = vld [vmem:[%s1 + $0x7c] sm:$0xf]
      %v583 = vld [vmem:[%s1 + $0x80] sm:$0xf]
      %v584 = vld [vmem:[%s1 + $0x84] sm:$0xf]
      %v585 = vld [vmem:[%s1 + $0x88] sm:$0xf]
      %v586 = vld [vmem:[%s1 + $0x8c] sm:$0xf]
      %v587 = vld [vmem:[%s1 + $0x90] sm:$0xf]
      %v588 = vld [vmem:[%s1 + $0x94] sm:$0xf]
      %v589 = vld [vmem:[%s1 + $0x98] sm:$0xf]
      %v590 = vld [vmem:[%s1 + $0x9c] sm:$0xf]
      %v591 = vld [vmem:[%s1 + $0xa0] sm:$0xf]
      %v592 = vld [vmem:[%s1 + $0xa4] sm:$0xf]
      %v593 = vld [vmem:[%s1 + $0xa8] sm:$0xf]
      %v594 = vld [vmem:[%s1 + $0xac] sm:$0xf]
      %v595 = vld [vmem:[%s1 + $0xb0] sm:$0xf]
      %v596 = vld [vmem:[%s1 + $0xb4] sm:$0xf]
      %v597 = vld [vmem:[%s1 + $0xb8] sm:$0xf]
      %v598 = vld [vmem:[%s1 + $0xbc] sm:$0xf]
      %v599 = vld [vmem:[%s1 + $0xc0] sm:$0xf]
      %v600 = vld [vmem:[%s1 + $0xc4] sm:$0xf]
      %v601 = vld [vmem:[%s1 + $0xc8] sm:$0xf]
      %v602 = vld [vmem:[%s1 + $0xcc] sm:$0xf]
      %v603 = vld [vmem:[%s1 + $0xd0] sm:$0xf]
      %v604 = vld [vmem:[%s1 + $0xd4] sm:$0xf]
      %v605 = vld [vmem:[%s1 + $0xd8] sm:$0xf]
      %v606 = vld [vmem:[%s1 + $0xdc] sm:$0xf]
      %v607 = vld [vmem:[%s1 + $0xe0] sm:$0xf]
      %v608 = vld [vmem:[%s1 + $0xe4] sm:$0xf]
      %v609 = vld [vmem:[%s1 + $0xe8] sm:$0xf]
      %v610 = vld [vmem:[%s1 + $0xec] sm:$0xf]
      %v611 = vld [vmem:[%s1 + $0xf0] sm:$0xf]
      %v612 = vld [vmem:[%s1 + $0xf4] sm:$0xf]
      %v613 = vld [vmem:[%s1 + $0xf8] sm:$0xf]
      %v614 = vld [vmem:[%s1 + $0xfc] sm:$0xf]
      %v615 = vld [vmem:[%s1 + $0x100] sm:$0xf]
      %v616 = vld [vmem:[%s1 + $0x104] sm:$0xf]
      %v617 = vld [vmem:[%s1 + $0x108] sm:$0xf]
      %v618 = vld [vmem:[%s1 + $0x10c] sm:$0xf]
      %v619 = vld [vmem:[%s1 + $0x110] sm:$0xf]
      %v620 = vld [vmem:[%s1 + $0x114] sm:$0xf]
      %v621 = vld [vmem:[%s1 + $0x118] sm:$0xf]
      %v622 = vld [vmem:[%s1 + $0x11c] sm:$0xf]
      %v623 = vld [vmem:[%s1 + $0x120] sm:$0xf]
      %v624 = vld [vmem:[%s1 + $0x124] sm:$0xf]
      %v625 = vld [vmem:[%s1 + $0x128] sm:$0xf]
      %v626 = vld [vmem:[%s1 + $0x12c] sm:$0xf]
      %v627 = vld [vmem:[%s1 + $0x130] sm:$0xf]
      %v628 = vld [vmem:[%s1 + $0x134] sm:$0xf]
      %v629 = vld [vmem:[%s1 + $0x138] sm:$0xf]
      %v630 = vld [vmem:[%s1 + $0x13c] sm:$0xf]
      %v631 = vld [vmem:[%s1 + $0x140] sm:$0xf]
      %v632 = vld [vmem:[%s1 + $0x144] sm:$0xf]
      %v633 = vld [vmem:[%s1 + $0x148] sm:$0xf]
      %v634 = vld [vmem:[%s1 + $0x14c] sm:$0xf]
      %v635 = vld [vmem:[%s1 + $0x150] sm:$0xf]
      %v636 = vld [vmem:[%s1 + $0x154] sm:$0xf]
      %v637 = vld [vmem:[%s1 + $0x158] sm:$0xf]
      %v638 = vld [vmem:[%s1 + $0x15c] sm:$0xf]
      %v639 = vld [vmem:[%s1 + $0x160] sm:$0xf]
      %v640 = vld [vmem:[%s1 + $0x164] sm:$0xf]
      %v641 = vld [vmem:[%s1 + $0x168] sm:$0xf]
      %v642 = vld [vmem:[%s1 + $0x16c] sm:$0xf]
      %v643 = vld [vmem:[%s1 + $0x170] sm:$0xf]
      %v644 = vld [vmem:[%s1 + $0x174] sm:$0xf]
      %v645 = vld [vmem:[%s1 + $0x178] sm:$0xf]
      %v646 = vld [vmem:[%s1 + $0x17c] sm:$0xf]
      %v647 = vld [vmem:[%s1 + $0x180] sm:$0xf]
      %v648 = vld [vmem:[%s1 + $0x184] sm:$0xf]
      %v649 = vld [vmem:[%s1 + $0x188] sm:$0xf]
      %v650 = vld [vmem:[%s1 + $0x18c] sm:$0xf]
      %v651 = vld [vmem:[%s1 + $0x190] sm:$0xf]
      %v652 = vld [vmem:[%s1 + $0x194] sm:$0xf]
      %v653 = vld [vmem:[%s1 + $0x198] sm:$0xf]
      %v654 = vld [vmem:[%s1 + $0x19c] sm:$0xf]
      %v655 = vld [vmem:[%s1 + $0x1a0] sm:$0xf]
      %v656 = vld [vmem:[%s1 + $0x1a4] sm:$0xf]
      %v657 = vld [vmem:[%s1 + $0x1a8] sm:$0xf]
      %v658 = vld [vmem:[%s1 + $0x1ac] sm:$0xf]
      %v659 = vld [vmem:[%s1 + $0x1b0] sm:$0xf]
      %v660 = vld [vmem:[%s1 + $0x1b4] sm:$0xf]
      %v661 = vld [vmem:[%s1 + $0x1b8] sm:$0xf]
      %v662 = vld [vmem:[%s1 + $0x1bc] sm:$0xf]
      %v663 = vld [vmem:[%s1 + $0x1c0] sm:$0xf]
      %v664 = vld [vmem:[%s1 + $0x1c4] sm:$0xf]
      %v665 = vld [vmem:[%s1 + $0x1c8] sm:$0xf]
      %v666 = vld [vmem:[%s1 + $0x1cc] sm:$0xf]
      %v667 = vld [vmem:[%s1 + $0x1d0] sm:$0xf]
      %v668 = vld [vmem:[%s1 + $0x1d4] sm:$0xf]
      %v669 = vld [vmem:[%s1 + $0x1d8] sm:$0xf]
      %v670 = vld [vmem:[%s1 + $0x1dc] sm:$0xf]
      %v671 = vld [vmem:[%s1 + $0x1e0] sm:$0xf]
      %v672 = vld [vmem:[%s1 + $0x1e4] sm:$0xf]
      %v673 = vld [vmem:[%s1 + $0x1e8] sm:$0xf]
      %v674 = vld [vmem:[%s1 + $0x1ec] sm:$0xf]
      %v675 = vld [vmem:[%s1 + $0x1f0] sm:$0xf]
      %v676 = vld [vmem:[%s1 + $0x1f4] sm:$0xf]
      %v677 = vld [vmem:[%s1 + $0x1f8] sm:$0xf]
      %v678 = vld [vmem:[%s1 + $0x1fc] sm:$0xf]
      %v679 = vld [vmem:[%s1 + $0x200] sm:$0xf]
      %v680 = vld [vmem:[%s1 + $0x204] sm:$0xf]
      %v681 = vld [vmem:[%s1 + $0x208] sm:$0xf]
      %v682 = vld [vmem:[%s1 + $0x20c] sm:$0xf]
      %v683 = vld [vmem:[%s1 + $0x210] sm:$0xf]
      %v684 = vld [vmem:[%s1 + $0x214] sm:$0xf]
      %v685 = vld [vmem:[%s1 + $0x218] sm:$0xf]
      %v686 = vld [vmem:[%s1 + $0x21c] sm:$0xf]
      %v687 = vld [vmem:[%s1 + $0x220] sm:$0xf]
      %v688 = vld [vmem:[%s1 + $0x224] sm:$0xf]
      %v689 = vld [vmem:[%s1 + $0x228] sm:$0xf]
      %v690 = vld [vmem:[%s1 + $0x22c] sm:$0xf]
      %v691 = vld [vmem:[%s1 + $0x230] sm:$0xf]
      %v692 = vld [vmem:[%s1 + $0x234] sm:$0xf]
      %v693 = vld [vmem:[%s1 + $0x238] sm:$0xf]
      %v694 = vld [vmem:[%s1 + $0x23c] sm:$0xf]
      %v839 = vunpack.c.l.b16 %v551
      %v840 = vunpack.c.l.b16 %v552
      %v841 = vunpack.c.l.b16 %v553
      %v842 = vunpack.c.l.b16 %v554
      %v843 = vunpack.c.l.b16 %v555
      %v844 = vunpack.c.l.b16 %v556
      %v845 = vunpack.c.l.b16 %v557
      %v846 = vunpack.c.l.b16 %v558
      %v847 = vunpack.c.l.b16 %v559
      %v848 = vunpack.c.l.b16 %v560
      %v849 = vunpack.c.l.b16 %v561
      %v850 = vunpack.c.l.b16 %v562
      %v851 = vunpack.c.l.b16 %v563
      %v852 = vunpack.c.l.b16 %v564
      %v853 = vunpack.c.l.b16 %v565
      %v854 = vunpack.c.l.b16 %v566
      %v855 = vunpack.c.l.b16 %v567
      %v856 = vunpack.c.l.b16 %v568
      %v857 = vunpack.c.l.b16 %v569
      %v858 = vunpack.c.l.b16 %v570
      %v859 = vunpack.c.l.b16 %v571
      %v860 = vunpack.c.l.b16 %v572
      %v861 = vunpack.c.l.b16 %v573
      %v862 = vunpack.c.l.b16 %v574
      %v863 = vunpack.c.l.b16 %v575
      %v864 = vunpack.c.l.b16 %v576
      %v865 = vunpack.c.l.b16 %v577
      %v866 = vunpack.c.l.b16 %v578
      %v867 = vunpack.c.l.b16 %v579
      %v868 = vunpack.c.l.b16 %v580
      %v869 = vunpack.c.l.b16 %v581
      %v870 = vunpack.c.l.b16 %v582
      %v871 = vunpack.c.l.b16 %v583
      %v872 = vunpack.c.l.b16 %v584
      %v873 = vunpack.c.l.b16 %v585
      %v874 = vunpack.c.l.b16 %v586
      %v875 = vunpack.c.l.b16 %v587
      %v876 = vunpack.c.l.b16 %v588
      %v877 = vunpack.c.l.b16 %v589
      %v878 = vunpack.c.l.b16 %v590
      %v879 = vunpack.c.l.b16 %v591
      %v880 = vunpack.c.l.b16 %v592
      %v881 = vunpack.c.l.b16 %v593
      %v882 = vunpack.c.l.b16 %v594
      %v883 = vunpack.c.l.b16 %v595
      %v884 = vunpack.c.l.b16 %v596
      %v885 = vunpack.c.l.b16 %v597
      %v886 = vunpack.c.l.b16 %v598
      %v887 = vunpack.c.l.b16 %v599
      %v888 = vunpack.c.l.b16 %v600
      %v889 = vunpack.c.l.b16 %v601
      %v890 = vunpack.c.l.b16 %v602
      %v891 = vunpack.c.l.b16 %v603
      %v892 = vunpack.c.l.b16 %v604
      %v893 = vunpack.c.l.b16 %v605
      %v894 = vunpack.c.l.b16 %v606
      %v895 = vunpack.c.l.b16 %v607
      %v896 = vunpack.c.l.b16 %v608
      %v897 = vunpack.c.l.b16 %v609
      %v898 = vunpack.c.l.b16 %v610
      %v899 = vunpack.c.l.b16 %v611
      %v900 = vunpack.c.l.b16 %v612
      %v901 = vunpack.c.l.b16 %v613
      %v902 = vunpack.c.l.b16 %v614
      %v903 = vunpack.c.l.b16 %v615
      %v904 = vunpack.c.l.b16 %v616
      %v905 = vunpack.c.l.b16 %v617
      %v906 = vunpack.c.l.b16 %v618
      %v907 = vunpack.c.l.b16 %v619
      %v908 = vunpack.c.l.b16 %v620
      %v909 = vunpack.c.l.b16 %v621
      %v910 = vunpack.c.l.b16 %v622
      %v911 = vunpack.c.l.b16 %v623
      %v912 = vunpack.c.l.b16 %v624
      %v913 = vunpack.c.l.b16 %v625
      %v914 = vunpack.c.l.b16 %v626
      %v915 = vunpack.c.l.b16 %v627
      %v916 = vunpack.c.l.b16 %v628
      %v917 = vunpack.c.l.b16 %v629
      %v918 = vunpack.c.l.b16 %v630
      %v919 = vunpack.c.l.b16 %v631
      %v920 = vunpack.c.l.b16 %v632
      %v921 = vunpack.c.l.b16 %v633
      %v922 = vunpack.c.l.b16 %v634
      %v923 = vunpack.c.l.b16 %v635
      %v924 = vunpack.c.l.b16 %v636
      %v925 = vunpack.c.l.b16 %v637
      %v926 = vunpack.c.l.b16 %v638
      %v927 = vunpack.c.l.b16 %v639
      %v928 = vunpack.c.l.b16 %v640
      %v929 = vunpack.c.l.b16 %v641
      %v930 = vunpack.c.l.b16 %v642
      %v931 = vunpack.c.l.b16 %v643
      %v932 = vunpack.c.l.b16 %v644
      %v933 = vunpack.c.l.b16 %v645
      %v934 = vunpack.c.l.b16 %v646
      %v935 = vunpack.c.l.b16 %v647
      %v936 = vunpack.c.l.b16 %v648
      %v937 = vunpack.c.l.b16 %v649
      %v938 = vunpack.c.l.b16 %v650
      %v939 = vunpack.c.l.b16 %v651
      %v940 = vunpack.c.l.b16 %v652
      %v941 = vunpack.c.l.b16 %v653
      %v942 = vunpack.c.l.b16 %v654
      %v943 = vunpack.c.l.b16 %v655
      %v944 = vunpack.c.l.b16 %v656
      %v945 = vunpack.c.l.b16 %v657
      %v946 = vunpack.c.l.b16 %v658
      %v947 = vunpack.c.l.b16 %v659
      %v948 = vunpack.c.l.b16 %v660
      %v949 = vunpack.c.l.b16 %v661
      %v950 = vunpack.c.l.b16 %v662
      %v951 = vunpack.c.l.b16 %v663
      %v952 = vunpack.c.l.b16 %v664
      %v953 = vunpack.c.l.b16 %v665
      %v954 = vunpack.c.l.b16 %v666
      %v955 = vunpack.c.l.b16 %v667
      %v956 = vunpack.c.l.b16 %v668
      %v957 = vunpack.c.l.b16 %v669
      %v958 = vunpack.c.l.b16 %v670
      %v959 = vunpack.c.l.b16 %v671
      %v960 = vunpack.c.l.b16 %v672
      %v961 = vunpack.c.l.b16 %v673
      %v962 = vunpack.c.l.b16 %v674
      %v963 = vunpack.c.l.b16 %v675
      %v964 = vunpack.c.l.b16 %v676
      %v965 = vunpack.c.l.b16 %v677
      %v966 = vunpack.c.l.b16 %v678
      %v967 = vunpack.c.l.b16 %v679
      %v968 = vunpack.c.l.b16 %v680
      %v969 = vunpack.c.l.b16 %v681
      %v970 = vunpack.c.l.b16 %v682
      %v971 = vunpack.c.l.b16 %v683
      %v972 = vunpack.c.l.b16 %v684
      %v973 = vunpack.c.l.b16 %v685
      %v974 = vunpack.c.l.b16 %v686
      %v975 = vunpack.c.l.b16 %v687
      %v976 = vunpack.c.l.b16 %v688
      %v977 = vunpack.c.l.b16 %v689
      %v978 = vunpack.c.l.b16 %v690
      %v979 = vunpack.c.l.b16 %v691
      %v980 = vunpack.c.l.b16 %v692
      %v981 = vunpack.c.l.b16 %v693
      %v982 = vunpack.c.l.b16 %v694
      %v983 = vpack.c.b16 %v840, %v839
      %v984 = vpack.c.b16 %v842, %v841
      %v985 = vpack.c.b16 %v844, %v843
      %v986 = vpack.c.b16 %v846, %v845
      %v987 = vpack.c.b16 %v848, %v847
      %v988 = vpack.c.b16 %v850, %v849
      %v989 = vpack.c.b16 %v852, %v851
      %v990 = vpack.c.b16 %v854, %v853
      %v991 = vpack.c.b16 %v856, %v855
      %v992 = vpack.c.b16 %v858, %v857
      %v993 = vpack.c.b16 %v860, %v859
      %v994 = vpack.c.b16 %v862, %v861
      %v995 = vpack.c.b16 %v864, %v863
      %v996 = vpack.c.b16 %v866, %v865
      %v997 = vpack.c.b16 %v868, %v867
      %v998 = vpack.c.b16 %v870, %v869
      %v999 = vpack.c.b16 %v872, %v871
      %v1000 = vpack.c.b16 %v874, %v873
      %v1001 = vpack.c.b16 %v876, %v875
      %v1002 = vpack.c.b16 %v878, %v877
      %v1003 = vpack.c.b16 %v880, %v879
      %v1004 = vpack.c.b16 %v882, %v881
      %v1005 = vpack.c.b16 %v884, %v883
      %v1006 = vpack.c.b16 %v886, %v885
      %v1007 = vpack.c.b16 %v888, %v887
      %v1008 = vpack.c.b16 %v890, %v889
      %v1009 = vpack.c.b16 %v892, %v891
      %v1010 = vpack.c.b16 %v894, %v893
      %v1011 = vpack.c.b16 %v896, %v895
      %v1012 = vpack.c.b16 %v898, %v897
      %v1013 = vpack.c.b16 %v900, %v899
      %v1014 = vpack.c.b16 %v902, %v901
      %v1015 = vpack.c.b16 %v904, %v903
      %v1016 = vpack.c.b16 %v906, %v905
      %v1017 = vpack.c.b16 %v908, %v907
      %v1018 = vpack.c.b16 %v910, %v909
      %v1019 = vpack.c.b16 %v912, %v911
      %v1020 = vpack.c.b16 %v914, %v913
      %v1021 = vpack.c.b16 %v916, %v915
      %v1022 = vpack.c.b16 %v918, %v917
      %v1023 = vpack.c.b16 %v920, %v919
      %v1024 = vpack.c.b16 %v922, %v921
      %v1025 = vpack.c.b16 %v924, %v923
      %v1026 = vpack.c.b16 %v926, %v925
      %v1027 = vpack.c.b16 %v928, %v927
      %v1028 = vpack.c.b16 %v930, %v929
      %v1029 = vpack.c.b16 %v932, %v931
      %v1030 = vpack.c.b16 %v934, %v933
      %v1031 = vpack.c.b16 %v936, %v935
      %v1032 = vpack.c.b16 %v938, %v937
      %v1033 = vpack.c.b16 %v940, %v939
      %v1034 = vpack.c.b16 %v942, %v941
      %v1035 = vpack.c.b16 %v944, %v943
      %v1036 = vpack.c.b16 %v946, %v945
      %v1037 = vpack.c.b16 %v948, %v947
      %v1038 = vpack.c.b16 %v950, %v949
      %v1039 = vpack.c.b16 %v952, %v951
      %v1040 = vpack.c.b16 %v954, %v953
      %v1041 = vpack.c.b16 %v956, %v955
      %v1042 = vpack.c.b16 %v958, %v957
      %v1043 = vpack.c.b16 %v960, %v959
      %v1044 = vpack.c.b16 %v962, %v961
      %v1045 = vpack.c.b16 %v964, %v963
      %v1046 = vpack.c.b16 %v966, %v965
      %v1047 = vpack.c.b16 %v968, %v967
      %v1048 = vpack.c.b16 %v970, %v969
      %v1049 = vpack.c.b16 %v972, %v971
      %v1050 = vpack.c.b16 %v974, %v973
      %v1051 = vpack.c.b16 %v976, %v975
      %v1052 = vpack.c.b16 %v978, %v977
      %v1053 = vpack.c.b16 %v980, %v979
      %v1054 = vpack.c.b16 %v982, %v981
      %1127 = vmatprep.subr.bf16.mxu0 0
      %1128 = vmatpush1.bf16.msra.mxu0 %v983
      %1129 = vmatprep.subr.bf16.mxu0 0
      %1130 = vmatpush1.bf16.msra.mxu0 %v984
      %1131 = vmatprep.subr.bf16.mxu0 0
      %1132 = vmatpush1.bf16.msra.mxu0 %v985
      %1133 = vmatprep.subr.bf16.mxu0 0
      %1134 = vmatpush1.bf16.msra.mxu0 %v986
      %1135 = vmatprep.subr.bf16.mxu0 0
      %1136 = vmatpush1.bf16.msra.mxu0 %v987
      %1137 = vmatprep.subr.bf16.mxu0 0
      %1138 = vmatpush1.bf16.msra.mxu0 %v988
      %1139 = vmatprep.subr.bf16.mxu0 0
      %1140 = vmatpush1.bf16.msra.mxu0 %v989
      %1141 = vmatprep.subr.bf16.mxu0 0
      %1142 = vmatpush1.bf16.msra.mxu0 %v990
      %1143 = vmatprep.subr.bf16.mxu0 0
      %1144 = vmatpush1.bf16.msra.mxu0 %v991
      %1145 = vmatprep.subr.bf16.mxu0 0
      %1146 = vmatpush1.bf16.msra.mxu0 %v992
      %1147 = vmatprep.subr.bf16.mxu0 0
      %1148 = vmatpush1.bf16.msra.mxu0 %v993
      %1149 = vmatprep.subr.bf16.mxu0 0
      %1150 = vmatpush1.bf16.msra.mxu0 %v994
      %1151 = vmatprep.subr.bf16.mxu0 0
      %1152 = vmatpush1.bf16.msra.mxu0 %v995
      %1153 = vmatprep.subr.bf16.mxu0 0
      %1154 = vmatpush1.bf16.msra.mxu0 %v996
      %1155 = vmatprep.subr.bf16.mxu0 0
      %1156 = vmatpush1.bf16.msra.mxu0 %v997
      %1157 = vmatprep.subr.bf16.mxu0 0
      %1158 = vmatpush1.bf16.msra.mxu0 %v998
      %1159 = vmatprep.mubr.bf16.mxu0 %v516
      %1160 = vmatmul.mubr.bf16.gmra.mrb[0].mxu0 %v515
      %v1161 = vpop.f32.mrb[0].mxu0
      %v1162 = vadd.f32 0.0, %v1161
      %v1163 = vpop.f32.mrb[0].mxu0
      %v1164 = vpop.f32.mrb[0].mxu0
      %v1165 = vadd.f32 0.0, %v1164
      %v1166 = vpop.f32.mrb[0].mxu0
      %1167 = vmatprep.mubr.bf16.mxu0 %v525
      %1168 = vmatmul.mubr.bf16.gmra.mrb[0].mxu0 %v524
      %v1169 = vpop.f32.mrb[0].mxu0
      %v1170 = vadd.f32 0.0, %v1169
      %v1171 = vpop.f32.mrb[0].mxu0
      %v1172 = vpop.f32.mrb[0].mxu0
      %v1173 = vadd.f32 0.0, %v1172
      %v1174 = vpop.f32.mrb[0].mxu0
      %1175 = vmatprep.mubr.bf16.mxu0 %v534
      %1176 = vmatmul.mubr.bf16.gmra.mrb[0].mxu0 %v533
      %v1177 = vpop.f32.mrb[0].mxu0
      %v1178 = vadd.f32 0.0, %v1177
      %v1179 = vpop.f32.mrb[0].mxu0
      %v1180 = vpop.f32.mrb[0].mxu0
      %v1181 = vadd.f32 0.0, %v1180
      %v1182 = vpop.f32.mrb[0].mxu0
      %1183 = vmatprep.mubr.bf16.mxu0 %v543
      %1184 = vmatmul.mubr.bf16.gmra.mrb[0].mxu0 %v542
      %v1185 = vpop.f32.mrb[0].mxu0
      %v1186 = vadd.f32 0.0, %v1185
      %v1187 = vpop.f32.mrb[0].mxu0
      %v1188 = vpop.f32.mrb[0].mxu0
      %v1189 = vadd.f32 0.0, %v1188
      %v1190 = vpop.f32.mrb[0].mxu0
      %1191 = vdwg.mxu0
      %1192 = vmatprep.subr.bf16.mxu0 0
      %1193 = vmatpush1.bf16.msra.mxu0 %v999
      %1194 = vmatprep.subr.bf16.mxu0 0
      %1195 = vmatpush1.bf16.msra.mxu0 %v1000
      %1196 = vmatprep.subr.bf16.mxu0 0
      %1197 = vmatpush1.bf16.msra.mxu0 %v1001
      %1198 = vmatprep.subr.bf16.mxu0 0
      %1199 = vmatpush1.bf16.msra.mxu0 %v1002
      %1200 = vmatprep.subr.bf16.mxu0 0
      %1201 = vmatpush1.bf16.msra.mxu0 %v1003
      %1202 = vmatprep.subr.bf16.mxu0 0
      %1203 = vmatpush1.bf16.msra.mxu0 %v1004
      %1204 = vmatprep.subr.bf16.mxu0 0
      %1205 = vmatpush1.bf16.msra.mxu0 %v1005
      %1206 = vmatprep.subr.bf16.mxu0 0
      %1207 = vmatpush1.bf16.msra.mxu0 %v1006
      %1208 = vmatprep.subr.bf16.mxu0 0
      %1209 = vmatpush1.bf16.msra.mxu0 %v1007
      %1210 = vmatprep.subr.bf16.mxu0 0
      %1211 = vmatpush1.bf16.msra.mxu0 %v1008
      %1212 = vmatprep.subr.bf16.mxu0 0
      %1213 = vmatpush1.bf16.msra.mxu0 %v1009
      %1214 = vmatprep.subr.bf16.mxu0 0
      %1215 = vmatpush1.bf16.msra.mxu0 %v1010
      %1216 = vmatprep.subr.bf16.mxu0 0
      %1217 = vmatpush1.bf16.msra.mxu0 %v1011
      %1218 = vmatprep.subr.bf16.mxu0 0
      %1219 = vmatpush1.bf16.msra.mxu0 %v1012
      %1220 = vmatprep.subr.bf16.mxu0 0
      %1221 = vmatpush1.bf16.msra.mxu0 %v1013
      %1222 = vmatprep.subr.bf16.mxu0 0
      %1223 = vmatpush1.bf16.msra.mxu0 %v1014
      %1224 = vmatprep.mubr.bf16.mxu0 %v518
      %1225 = vmatmul.mubr.bf16.gmra.mrb[0].mxu0 %v517
      %v1226 = vpop.f32.mrb[0].mxu0
      %v1227 = vadd.f32 %v1162, %v1226
      %v1228 = vpop.f32.mrb[0].mxu0
      %v1229 = vpop.f32.mrb[0].mxu0
      %v1230 = vadd.f32 %v1165, %v1229
      %v1231 = vpop.f32.mrb[0].mxu0
      %1232 = vmatprep.mubr.bf16.mxu0 %v527
      %1233 = vmatmul.mubr.bf16.gmra.mrb[0].mxu0 %v526
      %v1234 = vpop.f32.mrb[0].mxu0
      %v1235 = vadd.f32 %v1170, %v1234
      %v1236 = vpop.f32.mrb[0].mxu0
      %v1237 = vpop.f32.mrb[0].mxu0
      %v1238 = vadd.f32 %v1173, %v1237
      %v1239 = vpop.f32.mrb[0].mxu0
      %1240 = vmatprep.mubr.bf16.mxu0 %v536
      %1241 = vmatmul.mubr.bf16.gmra.mrb[0].mxu0 %v535
      %v1242 = vpop.f32.mrb[0].mxu0
      %v1243 = vadd.f32 %v1178, %v1242
      %v1244 = vpop.f32.mrb[0].mxu0
      %v1245 = vpop.f32.mrb[0].mxu0
      %v1246 = vadd.f32 %v1181, %v1245
      %v1247 = vpop.f32.mrb[0].mxu0
      %1248 = vmatprep.mubr.bf16.mxu0 %v545
      %1249 = vmatmul.mubr.bf16.gmra.mrb[0].mxu0 %v544
      %v1250 = vpop.f32.mrb[0].mxu0
      %v1251 = vadd.f32 %v1186, %v1250
      %v1252 = vpop.f32.mrb[0].mxu0
      %v1253 = vpop.f32.mrb[0].mxu0
      %v1254 = vadd.f32 %v1189, %v1253
      %v1255 = vpop.f32.mrb[0].mxu0
      %1256 = vdwg.mxu0
      %1257 = vmatprep.subr.bf16.mxu0 0
      %1258 = vmatpush1.bf16.msra.mxu0 %v1015
      %1259 = vmatprep.subr.bf16.mxu0 0
      %1260 = vmatpush1.bf16.msra.mxu0 %v1016
      %1261 = vmatprep.subr.bf16.mxu0 0
      %1262 = vmatpush1.bf16.msra.mxu0 %v1017
      %1263 = vmatprep.subr.bf16.mxu0 0
      %1264 = vmatpush1.bf16.msra.mxu0 %v1018
      %1265 = vmatprep.subr.bf16.mxu0 0
      %1266 = vmatpush1.bf16.msra.mxu0 %v1019
      %1267 = vmatprep.subr.bf16.mxu0 0
      %1268 = vmatpush1.bf16.msra.mxu0 %v1020
      %1269 = vmatprep.subr.bf16.mxu0 0
      %1270 = vmatpush1.bf16.msra.mxu0 %v1021
      %1271 = vmatprep.subr.bf16.mxu0 0
      %1272 = vmatpush1.bf16.msra.mxu0 %v1022
      %1273 = vmatprep.subr.bf16.mxu0 0
      %1274 = vmatpush1.bf16.msra.mxu0 %v1023
      %1275 = vmatprep.subr.bf16.mxu0 0
      %1276 = vmatpush1.bf16.msra.mxu0 %v1024
      %1277 = vmatprep.subr.bf16.mxu0 0
      %1278 = vmatpush1.bf16.msra.mxu0 %v1025
      %1279 = vmatprep.subr.bf16.mxu0 0
      %1280 = vmatpush1.bf16.msra.mxu0 %v1026
      %1281 = vmatprep.subr.bf16.mxu0 0
      %1282 = vmatpush1.bf16.msra.mxu0 %v1027
      %1283 = vmatprep.subr.bf16.mxu0 0
      %1284 = vmatpush1.bf16.msra.mxu0 %v1028
      %1285 = vmatprep.subr.bf16.mxu0 0
      %1286 = vmatpush1.bf16.msra.mxu0 %v1029
      %1287 = vmatprep.subr.bf16.mxu0 0
      %1288 = vmatpush1.bf16.msra.mxu0 %v1030
      %1289 = vmatprep.mubr.bf16.mxu0 %v520
      %1290 = vmatmul.mubr.bf16.gmra.mrb[0].mxu0 %v519
      %v1291 = vpop.f32.mrb[0].mxu0
      %v1292 = vadd.f32 %v1227, %v1291
      %v1293 = vpop.f32.mrb[0].mxu0
      %v1294 = vpop.f32.mrb[0].mxu0
      %v1295 = vadd.f32 %v1230, %v1294
      %v1296 = vpop.f32.mrb[0].mxu0
      %1297 = vmatprep.mubr.bf16.mxu0 %v529
      %1298 = vmatmul.mubr.bf16.gmra.mrb[0].mxu0 %v528
      %v1299 = vpop.f32.mrb[0].mxu0
      %v1300 = vadd.f32 %v1235, %v1299
      %v1301 = vpop.f32.mrb[0].mxu0
      %v1302 = vpop.f32.mrb[0].mxu0
      %v1303 = vadd.f32 %v1238, %v1302
      %v1304 = vpop.f32.mrb[0].mxu0
      %1305 = vmatprep.mubr.bf16.mxu0 %v538
      %1306 = vmatmul.mubr.bf16.gmra.mrb[0].mxu0 %v537
      %v1307 = vpop.f32.mrb[0].mxu0
      %v1308 = vadd.f32 %v1243, %v1307
      %v1309 = vpop.f32.mrb[0].mxu0
      %v1310 = vpop.f32.mrb[0].mxu0
      %v1311 = vadd.f32 %v1246, %v1310
      %v1312 = vpop.f32.mrb[0].mxu0
      %1313 = vmatprep.mubr.bf16.mxu0 %v547
      %1314 = vmatmul.mubr.bf16.gmra.mrb[0].mxu0 %v546
      %v1315 = vpop.f32.mrb[0].mxu0
      %v1316 = vadd.f32 %v1251, %v1315
      %v1317 = vpop.f32.mrb[0].mxu0
      %v1318 = vpop.f32.mrb[0].mxu0
      %v1319 = vadd.f32 %v1254, %v1318
      %v1320 = vpop.f32.mrb[0].mxu0
      %1321 = vdwg.mxu0
      %1322 = vmatprep.subr.bf16.mxu0 0
      %1323 = vmatpush1.bf16.msra.mxu0 %v1031
      %1324 = vmatprep.subr.bf16.mxu0 0
      %1325 = vmatpush1.bf16.msra.mxu0 %v1032
      %1326 = vmatprep.subr.bf16.mxu0 0
      %1327 = vmatpush1.bf16.msra.mxu0 %v1033
      %1328 = vmatprep.subr.bf16.mxu0 0
      %1329 = vmatpush1.bf16.msra.mxu0 %v1034
      %1330 = vmatprep.subr.bf16.mxu0 0
      %1331 = vmatpush1.bf16.msra.mxu0 %v1035
      %1332 = vmatprep.subr.bf16.mxu0 0
      %1333 = vmatpush1.bf16.msra.mxu0 %v1036
      %1334 = vmatprep.subr.bf16.mxu0 0
      %1335 = vmatpush1.bf16.msra.mxu0 %v1037
      %1336 = vmatprep.subr.bf16.mxu0 0
      %1337 = vmatpush1.bf16.msra.mxu0 %v1038
      %1338 = vmatprep.subr.bf16.mxu0 0
      %1339 = vmatpush1.bf16.msra.mxu0 %v1039
      %1340 = vmatprep.subr.bf16.mxu0 0
      %1341 = vmatpush1.bf16.msra.mxu0 %v1040
      %1342 = vmatprep.subr.bf16.mxu0 0
      %1343 = vmatpush1.bf16.msra.mxu0 %v1041
      %1344 = vmatprep.subr.bf16.mxu0 0
      %1345 = vmatpush1.bf16.msra.mxu0 %v1042
      %1346 = vmatprep.subr.bf16.mxu0 0
      %1347 = vmatpush1.bf16.msra.mxu0 %v1043
      %1348 = vmatprep.subr.bf16.mxu0 0
      %1349 = vmatpush1.bf16.msra.mxu0 %v1044
      %1350 = vmatprep.subr.bf16.mxu0 0
      %1351 = vmatpush1.bf16.msra.mxu0 %v1045
      %1352 = vmatprep.subr.bf16.mxu0 0
      %1353 = vmatpush1.bf16.msra.mxu0 %v1046
      %1354 = vmatprep.mubr.bf16.mxu0 %v522
      %1355 = vmatmul.mubr.bf16.gmra.mrb[0].mxu0 %v521
      %v1356 = vpop.f32.mrb[0].mxu0
      %v1357 = vadd.f32 %v1292, %v1356
      %v1358 = vpop.f32.mrb[0].mxu0
      %v1359 = vpop.f32.mrb[0].mxu0
      %v1360 = vadd.f32 %v1295, %v1359
      %v1361 = vpop.f32.mrb[0].mxu0
      %1362 = vmatprep.mubr.bf16.mxu0 %v531
      %1363 = vmatmul.mubr.bf16.gmra.mrb[0].mxu0 %v530
      %v1364 = vpop.f32.mrb[0].mxu0
      %v1365 = vadd.f32 %v1300, %v1364
      %v1366 = vpop.f32.mrb[0].mxu0
      %v1367 = vpop.f32.mrb[0].mxu0
      %v1368 = vadd.f32 %v1303, %v1367
      %v1369 = vpop.f32.mrb[0].mxu0
      %1370 = vmatprep.mubr.bf16.mxu0 %v540
      %1371 = vmatmul.mubr.bf16.gmra.mrb[0].mxu0 %v539
      %v1372 = vpop.f32.mrb[0].mxu0
      %v1373 = vadd.f32 %v1308, %v1372
      %v1374 = vpop.f32.mrb[0].mxu0
      %v1375 = vpop.f32.mrb[0].mxu0
      %v1376 = vadd.f32 %v1311, %v1375
      %v1377 = vpop.f32.mrb[0].mxu0
      %1378 = vmatprep.mubr.bf16.mxu0 %v549
      %1379 = vmatmul.mubr.bf16.gmra.mrb[0].mxu0 %v548
      %v1380 = vpop.f32.mrb[0].mxu0
      %v1381 = vadd.f32 %v1316, %v1380
      %v1382 = vpop.f32.mrb[0].mxu0
      %v1383 = vpop.f32.mrb[0].mxu0
      %v1384 = vadd.f32 %v1319, %v1383
      %v1385 = vpop.f32.mrb[0].mxu0
      %1386 = vdwg.mxu0
      %1387 = vmatprep.subr.bf16.mxu0 0
      %1388 = vmatpush1.bf16.msra.mxu0 %v1047
      %1389 = vmatprep.subr.bf16.mxu0 0
      %1390 = vmatpush1.bf16.msra.mxu0 %v1048
      %1391 = vmatprep.subr.bf16.mxu0 0
      %1392 = vmatpush1.bf16.msra.mxu0 %v1049
      %1393 = vmatprep.subr.bf16.mxu0 0
      %1394 = vmatpush1.bf16.msra.mxu0 %v1050
      %1395 = vmatprep.subr.bf16.mxu0 0
      %1396 = vmatpush1.bf16.msra.mxu0 %v1051
      %1397 = vmatprep.subr.bf16.mxu0 0
      %1398 = vmatpush1.bf16.msra.mxu0 %v1052
      %1399 = vmatprep.subr.bf16.mxu0 0
      %1400 = vmatpush1.bf16.msra.mxu0 %v1053
      %1401 = vmatprep.subr.bf16.mxu0 0
      %1402 = vmatpush1.bf16.msra.mxu0 %v1054
      %1403 = vmatprep.subr.bf16.mxu0 0
      %1404 = vmatpush1.bf16.msra.mxu0 0
      %1405 = vmatprep.subr.bf16.mxu0 0
      %1406 = vmatpush1.bf16.msra.mxu0 0
      %1407 = vmatprep.subr.bf16.mxu0 0
      %1408 = vmatpush1.bf16.msra.mxu0 0
      %1409 = vmatprep.subr.bf16.mxu0 0
      %1410 = vmatpush1.bf16.msra.mxu0 0
      %1411 = vmatprep.subr.bf16.mxu0 0
      %1412 = vmatpush1.bf16.msra.mxu0 0
      %1413 = vmatprep.subr.bf16.mxu0 0
      %1414 = vmatpush1.bf16.msra.mxu0 0
      %1415 = vmatprep.subr.bf16.mxu0 0
      %1416 = vmatpush1.bf16.msra.mxu0 0
      %1417 = vmatprep.subr.bf16.mxu0 0
      %1418 = vmatpush1.bf16.msra.mxu0 0
      %1419 = vmatprep.mubr.bf16.mxu0 0
      %1420 = vmatmul.mubr.bf16.gmra.mrb[0].mxu0 %v523
      %v1421 = vpop.f32.mrb[0].mxu0
      %v1422 = vadd.f32 %v1357, %v1421
      %v1423 = vpop.f32.mrb[0].mxu0
      %v1424 = vpop.f32.mrb[0].mxu0
      %v1425 = vadd.f32 %v1360, %v1424
      %v1426 = vpop.f32.mrb[0].mxu0
      %1427 = vmatprep.mubr.bf16.mxu0 0
      %1428 = vmatmul.mubr.bf16.gmra.mrb[0].mxu0 %v532
      %v1429 = vpop.f32.mrb[0].mxu0
      %v1430 = vadd.f32 %v1365, %v1429
      %v1431 = vpop.f32.mrb[0].mxu0
      %v1432 = vpop.f32.mrb[0].mxu0
      %v1433 = vadd.f32 %v1368, %v1432
      %v1434 = vpop.f32.mrb[0].mxu0
      %1435 = vmatprep.mubr.bf16.mxu0 0
      %1436 = vmatmul.mubr.bf16.gmra.mrb[0].mxu0 %v541
      %v1437 = vpop.f32.mrb[0].mxu0
      %v1438 = vadd.f32 %v1373, %v1437
      %v1439 = vpop.f32.mrb[0].mxu0
      %v1440 = vpop.f32.mrb[0].mxu0
      %v1441 = vadd.f32 %v1376, %v1440
      %v1442 = vpop.f32.mrb[0].mxu0
      %1443 = vmatprep.mubr.bf16.mxu0 0
      %1444 = vmatmul.mubr.bf16.gmra.mrb[0].mxu0 %v550
      %v1445 = vpop.f32.mrb[0].mxu0
      %v1446 = vadd.f32 %v1381, %v1445
      %v1447 = vpop.f32.mrb[0].mxu0
      %v1448 = vpop.f32.mrb[0].mxu0
      %v1449 = vadd.f32 %v1384, %v1448
      %v1450 = vpop.f32.mrb[0].mxu0
      %1451 = vdwg.mxu0
      %v1452 = vld [vmem:[%s2] sm:$0x1]
      %v1454 = vlaneseq
      %v1455 = vshrl.u32 %v1454, 7
      %v1456 = vsub.s32 0, %v1455
      %v1457 = vrot.slane %v1452, %v1456
      %v1459 = vmul.f32 %v1422, %v1457
      %v1460 = vmul.f32 %v1425, %v1457
      %v1461 = vmul.f32 %v1430, %v1457
      %v1462 = vmul.f32 %v1433, %v1457
      %v1463 = vmul.f32 %v1438, %v1457
      %v1464 = vmul.f32 %v1441, %v1457
      %v1465 = vmul.f32 %v1446, %v1457
      %v1466 = vmul.f32 %v1449, %v1457
      %v1467 = vld [vmem:[%s3] sm:$0x1]
      %v1469 = vlaneseq
      %v1470 = vshrl.u32 %v1469, 7
      %v1471 = vsub.s32 0, %v1470
      %v1472 = vrot.slane %v1467, %v1471
      %v1474 = vadd.f32 %v1459, %v1472
      %v1475 = vadd.f32 %v1460, %v1472
      %v1476 = vadd.f32 %v1461, %v1472
      %v1477 = vadd.f32 %v1462, %v1472
      %v1478 = vadd.f32 %v1463, %v1472
      %v1479 = vadd.f32 %v1464, %v1472
      %v1480 = vadd.f32 %v1465, %v1472
      %v1481 = vadd.f32 %v1466, %v1472
      %v1482 = vmax.f32 %v1474, 0.0
      %v1483 = vmax.f32 %v1475, 0.0
      %v1484 = vmax.f32 %v1476, 0.0
      %v1485 = vmax.f32 %v1477, 0.0
      %v1486 = vmax.f32 %v1478, 0.0
      %v1487 = vmax.f32 %v1479, 0.0
      %v1488 = vmax.f32 %v1480, 0.0
      %v1489 = vmax.f32 %v1481, 0.0
      %1490 = vst [vmem:[#allocation2] sm:$0xff] 0.0
      %1491 = vst [vmem:[#allocation2 + $0x8] sm:$0x3] 0.0
      %1492 = vst [vmem:[#allocation2 + $0x10] sm:$0xff] 0.0
      %1493 = vst [vmem:[#allocation2 + $0x18] sm:$0x3] 0.0
      %1494 = vst [vmem:[#allocation2 + $0x20] sm:$0xff] 0.0
      %1495 = vst [vmem:[#allocation2 + $0x28] sm:$0x3] 0.0
      %1496 = vst [vmem:[#allocation2 + $0x30] sm:$0xff] 0.0
      %1497 = vst [vmem:[#allocation2 + $0x38] sm:$0x3] 0.0
      %1498 = vst [vmem:[#allocation2 + $0x40] sm:$0xff] 0.0
      %1499 = vst [vmem:[#allocation2 + $0x48] sm:$0x3] 0.0
      %1500 = vst [vmem:[#allocation2 + $0x50] sm:$0xff] 0.0
      %1501 = vst [vmem:[#allocation2 + $0x58] sm:$0x3] 0.0
      %1502 = vst [vmem:[#allocation2 + $0x60] sm:$0xff] 0.0
      %1503 = vst [vmem:[#allocation2 + $0x68] sm:$0x3] 0.0
      %1504 = vst [vmem:[#allocation2 + $0x70] sm:$0xff] 0.0
      %1505 = vst [vmem:[#allocation2 + $0x78] sm:$0x3] 0.0
      %1506 = vst [vmem:[#allocation2 + $0x80] sm:$0xff] 0.0
      %1507 = vst [vmem:[#allocation2 + $0x88] sm:$0x3] 0.0
      %1508 = vst [vmem:[#allocation2 + $0x90] sm:$0xff] 0.0
      %1509 = vst [vmem:[#allocation2 + $0x98] sm:$0x3] 0.0
      %s1510 = scalar_lea.vmem [#allocation2], 16
      %1511 = vst [vmem:[%s1510 + $0x1] sm:$0xff] %v1482
      %1512 = vst [vmem:[%s1510 + $0x11] sm:$0xff] %v1483
      %1513 = vst [vmem:[%s1510 + $0x21] sm:$0xff] %v1484
      %1514 = vst [vmem:[%s1510 + $0x31] sm:$0xff] %v1485
      %1515 = vst [vmem:[%s1510 + $0x41] sm:$0xff] %v1486
      %1516 = vst [vmem:[%s1510 + $0x51] sm:$0xff] %v1487
      %1517 = vst [vmem:[%s1510 + $0x61] sm:$0xff] %v1488
      %1518 = vst [vmem:[%s1510 + $0x71] sm:$0xff] %v1489
      %v1519 = vld [vmem:[#allocation2] sm:$0xff]
      %v1520 = vld [vmem:[#allocation2 + $0x8] sm:$0x3]
      %v1521 = vld [vmem:[#allocation2 + $0x10] sm:$0xff]
      %v1522 = vld [vmem:[#allocation2 + $0x18] sm:$0x3]
      %v1523 = vld [vmem:[#allocation2 + $0x20] sm:$0xff]
      %v1524 = vld [vmem:[#allocation2 + $0x28] sm:$0x3]
      %v1525 = vld [vmem:[#allocation2 + $0x30] sm:$0xff]
      %v1526 = vld [vmem:[#allocation2 + $0x38] sm:$0x3]
      %v1527 = vld [vmem:[#allocation2 + $0x40] sm:$0xff]
      %v1528 = vld [vmem:[#allocation2 + $0x48] sm:$0x3]
      %v1529 = vld [vmem:[#allocation2 + $0x50] sm:$0xff]
      %v1530 = vld [vmem:[#allocation2 + $0x58] sm:$0x3]
      %v1531 = vld [vmem:[#allocation2 + $0x60] sm:$0xff]
      %v1532 = vld [vmem:[#allocation2 + $0x68] sm:$0x3]
      %v1533 = vld [vmem:[#allocation2 + $0x70] sm:$0xff]
      %v1534 = vld [vmem:[#allocation2 + $0x78] sm:$0x3]
      %v1535 = vld [vmem:[#allocation2 + $0x80] sm:$0xff]
      %v1536 = vld [vmem:[#allocation2 + $0x88] sm:$0x3]
      %v1537 = vld [vmem:[#allocation2 + $0x90] sm:$0xff]
      %v1538 = vld [vmem:[#allocation2 + $0x98] sm:$0x3]
      %v1555 = vrot.slane %v1519, 1
      %v1556 = vrot.slane %v1520, 1
      %v1557 = vsel %vm428, %v1555, %v1556
      %v1558 = vrot.slane %v1521, 1
      %v1559 = vrot.slane %v1522, 1
      %v1560 = vsel %vm428, %v1558, %v1559
      %v1561 = vrot.slane %v1523, 1
      %v1562 = vrot.slane %v1524, 1
      %v1563 = vsel %vm428, %v1561, %v1562
      %v1564 = vrot.slane %v1525, 1
      %v1565 = vrot.slane %v1526, 1
      %v1566 = vsel %vm428, %v1564, %v1565
      %v1567 = vrot.slane %v1527, 1
      %v1568 = vrot.slane %v1528, 1
      %v1569 = vsel %vm428, %v1567, %v1568
      %v1570 = vrot.slane %v1529, 1
      %v1571 = vrot.slane %v1530, 1
      %v1572 = vsel %vm428, %v1570, %v1571
      %v1573 = vrot.slane %v1531, 1
      %v1574 = vrot.slane %v1532, 1
      %v1575 = vsel %vm428, %v1573, %v1574
      %v1576 = vrot.slane %v1533, 1
      %v1577 = vrot.slane %v1534, 1
      %v1578 = vsel %vm428, %v1576, %v1577
      %vm1587 = vcmask 1045504
      %v1588 = vrot.slane %v1519, 2
      %v1589 = vrot.slane %v1520, 2
      %v1590 = vsel %vm1587, %v1588, %v1589
      %v1591 = vrot.slane %v1521, 2
      %v1592 = vrot.slane %v1522, 2
      %v1593 = vsel %vm1587, %v1591, %v1592
      %v1594 = vrot.slane %v1523, 2
      %v1595 = vrot.slane %v1524, 2
      %v1596 = vsel %vm1587, %v1594, %v1595
      %v1597 = vrot.slane %v1525, 2
      %v1598 = vrot.slane %v1526, 2
      %v1599 = vsel %vm1587, %v1597, %v1598
      %v1600 = vrot.slane %v1527, 2
      %v1601 = vrot.slane %v1528, 2
      %v1602 = vsel %vm1587, %v1600, %v1601
      %v1603 = vrot.slane %v1529, 2
      %v1604 = vrot.slane %v1530, 2
      %v1605 = vsel %vm1587, %v1603, %v1604
      %v1606 = vrot.slane %v1531, 2
      %v1607 = vrot.slane %v1532, 2
      %v1608 = vsel %vm1587, %v1606, %v1607
      %v1609 = vrot.slane %v1533, 2
      %v1610 = vrot.slane %v1534, 2
      %v1611 = vsel %vm1587, %v1609, %v1610
      %v1622 = vrot.slane %v1535, 1
      %v1623 = vrot.slane %v1536, 1
      %v1624 = vsel %vm428, %v1622, %v1623
      %v1626 = vrot.slane %v1535, 2
      %v1627 = vrot.slane %v1536, 2
      %v1628 = vsel %vm1587, %v1626, %v1627
      %v1632 = vrot.slane %v1537, 1
      %v1633 = vrot.slane %v1538, 1
      %v1634 = vsel %vm428, %v1632, %v1633
      %v1636 = vrot.slane %v1537, 2
      %v1637 = vrot.slane %v1538, 2
      %v1638 = vsel %vm1587, %v1636, %v1637
      %v1640 = vpack.c.bf16 %v1521, %v1519
      %v1641 = vpack.c.bf16 %v1560, %v1557
      %v1642 = vpack.c.bf16 %v1593, %v1590
      %v1643 = vpack.c.bf16 %v1523, %v1521
      %v1644 = vpack.c.bf16 %v1563, %v1560
      %v1645 = vpack.c.bf16 %v1596, %v1593
      %v1646 = vpack.c.bf16 %v1525, %v1523
      %v1647 = vpack.c.bf16 %v1566, %v1563
      %v1648 = vpack.c.bf16 %v1599, %v1596
      %v1649 = vpack.c.bf16 %v1527, %v1525
      %v1650 = vpack.c.bf16 %v1569, %v1566
      %v1651 = vpack.c.bf16 %v1602, %v1599
      %v1652 = vpack.c.bf16 %v1529, %v1527
      %v1653 = vpack.c.bf16 %v1572, %v1569
      %v1654 = vpack.c.bf16 %v1605, %v1602
      %v1655 = vpack.c.bf16 %v1531, %v1529
      %v1656 = vpack.c.bf16 %v1575, %v1572
      %v1657 = vpack.c.bf16 %v1608, %v1605
      %v1658 = vpack.c.bf16 %v1533, %v1531
      %v1659 = vpack.c.bf16 %v1578, %v1575
      %v1660 = vpack.c.bf16 %v1611, %v1608
      %v1661 = vpack.c.bf16 %v1535, %v1533
      %v1662 = vpack.c.bf16 %v1624, %v1578
      %v1663 = vpack.c.bf16 %v1628, %v1611
      %v1664 = vpack.c.bf16 %v1537, %v1535
      %v1665 = vpack.c.bf16 %v1634, %v1624
      %v1666 = vpack.c.bf16 %v1638, %v1628
      %v1667 = vld [vmem:[%s4] sm:$0xf]
      %v1668 = vld [vmem:[%s4 + $0x4] sm:$0xf]
      %v1669 = vld [vmem:[%s4 + $0x8] sm:$0xf]
      %v1670 = vld [vmem:[%s4 + $0xc] sm:$0xf]
      %v1671 = vld [vmem:[%s4 + $0x10] sm:$0xf]
      %v1672 = vld [vmem:[%s4 + $0x14] sm:$0xf]
      %v1673 = vld [vmem:[%s4 + $0x18] sm:$0xf]
      %v1674 = vld [vmem:[%s4 + $0x1c] sm:$0xf]
      %v1675 = vld [vmem:[%s4 + $0x20] sm:$0xf]
      %v1676 = vld [vmem:[%s4 + $0x24] sm:$0xf]
      %v1677 = vld [vmem:[%s4 + $0x28] sm:$0xf]
      %v1678 = vld [vmem:[%s4 + $0x2c] sm:$0xf]
      %v1679 = vld [vmem:[%s4 + $0x30] sm:$0xf]
      %v1680 = vld [vmem:[%s4 + $0x34] sm:$0xf]
      %v1681 = vld [vmem:[%s4 + $0x38] sm:$0xf]
      %v1682 = vld [vmem:[%s4 + $0x3c] sm:$0xf]
      %v1683 = vld [vmem:[%s4 + $0x40] sm:$0xf]
      %v1684 = vld [vmem:[%s4 + $0x44] sm:$0xf]
      %v1685 = vld [vmem:[%s4 + $0x48] sm:$0xf]
      %v1686 = vld [vmem:[%s4 + $0x4c] sm:$0xf]
      %v1687 = vld [vmem:[%s4 + $0x50] sm:$0xf]
      %v1688 = vld [vmem:[%s4 + $0x54] sm:$0xf]
      %v1689 = vld [vmem:[%s4 + $0x58] sm:$0xf]
      %v1690 = vld [vmem:[%s4 + $0x5c] sm:$0xf]
      %v1691 = vld [vmem:[%s4 + $0x60] sm:$0xf]
      %v1692 = vld [vmem:[%s4 + $0x64] sm:$0xf]
      %v1693 = vld [vmem:[%s4 + $0x68] sm:$0xf]
      %v1694 = vld [vmem:[%s4 + $0x6c] sm:$0xf]
      %v1695 = vld [vmem:[%s4 + $0x70] sm:$0xf]
      %v1696 = vld [vmem:[%s4 + $0x74] sm:$0xf]
      %v1697 = vld [vmem:[%s4 + $0x78] sm:$0xf]
      %v1698 = vld [vmem:[%s4 + $0x7c] sm:$0xf]
      %v1699 = vld [vmem:[%s4 + $0x80] sm:$0xf]
      %v1700 = vld [vmem:[%s4 + $0x84] sm:$0xf]
      %v1701 = vld [vmem:[%s4 + $0x88] sm:$0xf]
      %v1702 = vld [vmem:[%s4 + $0x8c] sm:$0xf]
      %v1703 = vld [vmem:[%s4 + $0x90] sm:$0xf]
      %v1704 = vld [vmem:[%s4 + $0x94] sm:$0xf]
      %v1705 = vld [vmem:[%s4 + $0x98] sm:$0xf]
      %v1706 = vld [vmem:[%s4 + $0x9c] sm:$0xf]
      %v1707 = vld [vmem:[%s4 + $0xa0] sm:$0xf]
      %v1708 = vld [vmem:[%s4 + $0xa4] sm:$0xf]
      %v1709 = vld [vmem:[%s4 + $0xa8] sm:$0xf]
      %v1710 = vld [vmem:[%s4 + $0xac] sm:$0xf]
      %v1711 = vld [vmem:[%s4 + $0xb0] sm:$0xf]
      %v1712 = vld [vmem:[%s4 + $0xb4] sm:$0xf]
      %v1713 = vld [vmem:[%s4 + $0xb8] sm:$0xf]
      %v1714 = vld [vmem:[%s4 + $0xbc] sm:$0xf]
      %v1715 = vld [vmem:[%s4 + $0xc0] sm:$0xf]
      %v1716 = vld [vmem:[%s4 + $0xc4] sm:$0xf]
      %v1717 = vld [vmem:[%s4 + $0xc8] sm:$0xf]
      %v1718 = vld [vmem:[%s4 + $0xcc] sm:$0xf]
      %v1719 = vld [vmem:[%s4 + $0xd0] sm:$0xf]
      %v1720 = vld [vmem:[%s4 + $0xd4] sm:$0xf]
      %v1721 = vld [vmem:[%s4 + $0xd8] sm:$0xf]
      %v1722 = vld [vmem:[%s4 + $0xdc] sm:$0xf]
      %v1723 = vld [vmem:[%s4 + $0xe0] sm:$0xf]
      %v1724 = vld [vmem:[%s4 + $0xe4] sm:$0xf]
      %v1725 = vld [vmem:[%s4 + $0xe8] sm:$0xf]
      %v1726 = vld [vmem:[%s4 + $0xec] sm:$0xf]
      %v1727 = vld [vmem:[%s4 + $0xf0] sm:$0xf]
      %v1728 = vld [vmem:[%s4 + $0xf4] sm:$0xf]
      %v1729 = vld [vmem:[%s4 + $0xf8] sm:$0xf]
      %v1730 = vld [vmem:[%s4 + $0xfc] sm:$0xf]
      %v1731 = vld [vmem:[%s4 + $0x100] sm:$0xf]
      %v1732 = vld [vmem:[%s4 + $0x104] sm:$0xf]
      %v1733 = vld [vmem:[%s4 + $0x108] sm:$0xf]
      %v1734 = vld [vmem:[%s4 + $0x10c] sm:$0xf]
      %v1735 = vld [vmem:[%s4 + $0x110] sm:$0xf]
      %v1736 = vld [vmem:[%s4 + $0x114] sm:$0xf]
      %v1737 = vld [vmem:[%s4 + $0x118] sm:$0xf]
      %v1738 = vld [vmem:[%s4 + $0x11c] sm:$0xf]
      %v1739 = vld [vmem:[%s4 + $0x120] sm:$0xf]
      %v1740 = vld [vmem:[%s4 + $0x124] sm:$0xf]
      %v1741 = vld [vmem:[%s4 + $0x128] sm:$0xf]
      %v1742 = vld [vmem:[%s4 + $0x12c] sm:$0xf]
      %v1743 = vld [vmem:[%s4 + $0x130] sm:$0xf]
      %v1744 = vld [vmem:[%s4 + $0x134] sm:$0xf]
      %v1745 = vld [vmem:[%s4 + $0x138] sm:$0xf]
      %v1746 = vld [vmem:[%s4 + $0x13c] sm:$0xf]
      %v1747 = vld [vmem:[%s4 + $0x140] sm:$0xf]
      %v1748 = vld [vmem:[%s4 + $0x144] sm:$0xf]
      %v1749 = vld [vmem:[%s4 + $0x148] sm:$0xf]
      %v1750 = vld [vmem:[%s4 + $0x14c] sm:$0xf]
      %v1751 = vld [vmem:[%s4 + $0x150] sm:$0xf]
      %v1752 = vld [vmem:[%s4 + $0x154] sm:$0xf]
      %v1753 = vld [vmem:[%s4 + $0x158] sm:$0xf]
      %v1754 = vld [vmem:[%s4 + $0x15c] sm:$0xf]
      %v1755 = vld [vmem:[%s4 + $0x160] sm:$0xf]
      %v1756 = vld [vmem:[%s4 + $0x164] sm:$0xf]
      %v1757 = vld [vmem:[%s4 + $0x168] sm:$0xf]
      %v1758 = vld [vmem:[%s4 + $0x16c] sm:$0xf]
      %v1759 = vld [vmem:[%s4 + $0x170] sm:$0xf]
      %v1760 = vld [vmem:[%s4 + $0x174] sm:$0xf]
      %v1761 = vld [vmem:[%s4 + $0x178] sm:$0xf]
      %v1762 = vld [vmem:[%s4 + $0x17c] sm:$0xf]
      %v1763 = vld [vmem:[%s4 + $0x180] sm:$0xf]
      %v1764 = vld [vmem:[%s4 + $0x184] sm:$0xf]
      %v1765 = vld [vmem:[%s4 + $0x188] sm:$0xf]
      %v1766 = vld [vmem:[%s4 + $0x18c] sm:$0xf]
      %v1767 = vld [vmem:[%s4 + $0x190] sm:$0xf]
      %v1768 = vld [vmem:[%s4 + $0x194] sm:$0xf]
      %v1769 = vld [vmem:[%s4 + $0x198] sm:$0xf]
      %v1770 = vld [vmem:[%s4 + $0x19c] sm:$0xf]
      %v1771 = vld [vmem:[%s4 + $0x1a0] sm:$0xf]
      %v1772 = vld [vmem:[%s4 + $0x1a4] sm:$0xf]
      %v1773 = vld [vmem:[%s4 + $0x1a8] sm:$0xf]
      %v1774 = vld [vmem:[%s4 + $0x1ac] sm:$0xf]
      %v1775 = vld [vmem:[%s4 + $0x1b0] sm:$0xf]
      %v1776 = vld [vmem:[%s4 + $0x1b4] sm:$0xf]
      %v1777 = vld [vmem:[%s4 + $0x1b8] sm:$0xf]
      %v1778 = vld [vmem:[%s4 + $0x1bc] sm:$0xf]
      %v1779 = vld [vmem:[%s4 + $0x1c0] sm:$0xf]
      %v1780 = vld [vmem:[%s4 + $0x1c4] sm:$0xf]
      %v1781 = vld [vmem:[%s4 + $0x1c8] sm:$0xf]
      %v1782 = vld [vmem:[%s4 + $0x1cc] sm:$0xf]
      %v1783 = vld [vmem:[%s4 + $0x1d0] sm:$0xf]
      %v1784 = vld [vmem:[%s4 + $0x1d4] sm:$0xf]
      %v1785 = vld [vmem:[%s4 + $0x1d8] sm:$0xf]
      %v1786 = vld [vmem:[%s4 + $0x1dc] sm:$0xf]
      %v1787 = vld [vmem:[%s4 + $0x1e0] sm:$0xf]
      %v1788 = vld [vmem:[%s4 + $0x1e4] sm:$0xf]
      %v1789 = vld [vmem:[%s4 + $0x1e8] sm:$0xf]
      %v1790 = vld [vmem:[%s4 + $0x1ec] sm:$0xf]
      %v1791 = vld [vmem:[%s4 + $0x1f0] sm:$0xf]
      %v1792 = vld [vmem:[%s4 + $0x1f4] sm:$0xf]
      %v1793 = vld [vmem:[%s4 + $0x1f8] sm:$0xf]
      %v1794 = vld [vmem:[%s4 + $0x1fc] sm:$0xf]
      %v1795 = vld [vmem:[%s4 + $0x200] sm:$0xf]
      %v1796 = vld [vmem:[%s4 + $0x204] sm:$0xf]
      %v1797 = vld [vmem:[%s4 + $0x208] sm:$0xf]
      %v1798 = vld [vmem:[%s4 + $0x20c] sm:$0xf]
      %v1799 = vld [vmem:[%s4 + $0x210] sm:$0xf]
      %v1800 = vld [vmem:[%s4 + $0x214] sm:$0xf]
      %v1801 = vld [vmem:[%s4 + $0x218] sm:$0xf]
      %v1802 = vld [vmem:[%s4 + $0x21c] sm:$0xf]
      %v1803 = vld [vmem:[%s4 + $0x220] sm:$0xf]
      %v1804 = vld [vmem:[%s4 + $0x224] sm:$0xf]
      %v1805 = vld [vmem:[%s4 + $0x228] sm:$0xf]
      %v1806 = vld [vmem:[%s4 + $0x22c] sm:$0xf]
      %v1807 = vld [vmem:[%s4 + $0x230] sm:$0xf]
      %v1808 = vld [vmem:[%s4 + $0x234] sm:$0xf]
      %v1809 = vld [vmem:[%s4 + $0x238] sm:$0xf]
      %v1810 = vld [vmem:[%s4 + $0x23c] sm:$0xf]
      %v1955 = vunpack.c.l.b16 %v1667
      %v1956 = vunpack.c.l.b16 %v1668
      %v1957 = vunpack.c.l.b16 %v1669
      %v1958 = vunpack.c.l.b16 %v1670
      %v1959 = vunpack.c.l.b16 %v1671
      %v1960 = vunpack.c.l.b16 %v1672
      %v1961 = vunpack.c.l.b16 %v1673
      %v1962 = vunpack.c.l.b16 %v1674
      %v1963 = vunpack.c.l.b16 %v1675
      %v1964 = vunpack.c.l.b16 %v1676
      %v1965 = vunpack.c.l.b16 %v1677
      %v1966 = vunpack.c.l.b16 %v1678
      %v1967 = vunpack.c.l.b16 %v1679
      %v1968 = vunpack.c.l.b16 %v1680
      %v1969 = vunpack.c.l.b16 %v1681
      %v1970 = vunpack.c.l.b16 %v1682
      %v1971 = vunpack.c.l.b16 %v1683
      %v1972 = vunpack.c.l.b16 %v1684
      %v1973 = vunpack.c.l.b16 %v1685
      %v1974 = vunpack.c.l.b16 %v1686
      %v1975 = vunpack.c.l.b16 %v1687
      %v1976 = vunpack.c.l.b16 %v1688
      %v1977 = vunpack.c.l.b16 %v1689
      %v1978 = vunpack.c.l.b16 %v1690
      %v1979 = vunpack.c.l.b16 %v1691
      %v1980 = vunpack.c.l.b16 %v1692
      %v1981 = vunpack.c.l.b16 %v1693
      %v1982 = vunpack.c.l.b16 %v1694
      %v1983 = vunpack.c.l.b16 %v1695
      %v1984 = vunpack.c.l.b16 %v1696
      %v1985 = vunpack.c.l.b16 %v1697
      %v1986 = vunpack.c.l.b16 %v1698
      %v1987 = vunpack.c.l.b16 %v1699
      %v1988 = vunpack.c.l.b16 %v1700
      %v1989 = vunpack.c.l.b16 %v1701
      %v1990 = vunpack.c.l.b16 %v1702
      %v1991 = vunpack.c.l.b16 %v1703
      %v1992 = vunpack.c.l.b16 %v1704
      %v1993 = vunpack.c.l.b16 %v1705
      %v1994 = vunpack.c.l.b16 %v1706
      %v1995 = vunpack.c.l.b16 %v1707
      %v1996 = vunpack.c.l.b16 %v1708
      %v1997 = vunpack.c.l.b16 %v1709
      %v1998 = vunpack.c.l.b16 %v1710
      %v1999 = vunpack.c.l.b16 %v1711
      %v2000 = vunpack.c.l.b16 %v1712
      %v2001 = vunpack.c.l.b16 %v1713
      %v2002 = vunpack.c.l.b16 %v1714
      %v2003 = vunpack.c.l.b16 %v1715
      %v2004 = vunpack.c.l.b16 %v1716
      %v2005 = vunpack.c.l.b16 %v1717
      %v2006 = vunpack.c.l.b16 %v1718
      %v2007 = vunpack.c.l.b16 %v1719
      %v2008 = vunpack.c.l.b16 %v1720
      %v2009 = vunpack.c.l.b16 %v1721
      %v2010 = vunpack.c.l.b16 %v1722
      %v2011 = vunpack.c.l.b16 %v1723
      %v2012 = vunpack.c.l.b16 %v1724
      %v2013 = vunpack.c.l.b16 %v1725
      %v2014 = vunpack.c.l.b16 %v1726
      %v2015 = vunpack.c.l.b16 %v1727
      %v2016 = vunpack.c.l.b16 %v1728
      %v2017 = vunpack.c.l.b16 %v1729
      %v2018 = vunpack.c.l.b16 %v1730
      %v2019 = vunpack.c.l.b16 %v1731
      %v2020 = vunpack.c.l.b16 %v1732
      %v2021 = vunpack.c.l.b16 %v1733
      %v2022 = vunpack.c.l.b16 %v1734
      %v2023 = vunpack.c.l.b16 %v1735
      %v2024 = vunpack.c.l.b16 %v1736
      %v2025 = vunpack.c.l.b16 %v1737
      %v2026 = vunpack.c.l.b16 %v1738
      %v2027 = vunpack.c.l.b16 %v1739
      %v2028 = vunpack.c.l.b16 %v1740
      %v2029 = vunpack.c.l.b16 %v1741
      %v2030 = vunpack.c.l.b16 %v1742
      %v2031 = vunpack.c.l.b16 %v1743
      %v2032 = vunpack.c.l.b16 %v1744
      %v2033 = vunpack.c.l.b16 %v1745
      %v2034 = vunpack.c.l.b16 %v1746
      %v2035 = vunpack.c.l.b16 %v1747
      %v2036 = vunpack.c.l.b16 %v1748
      %v2037 = vunpack.c.l.b16 %v1749
      %v2038 = vunpack.c.l.b16 %v1750
      %v2039 = vunpack.c.l.b16 %v1751
      %v2040 = vunpack.c.l.b16 %v1752
      %v2041 = vunpack.c.l.b16 %v1753
      %v2042 = vunpack.c.l.b16 %v1754
      %v2043 = vunpack.c.l.b16 %v1755
      %v2044 = vunpack.c.l.b16 %v1756
      %v2045 = vunpack.c.l.b16 %v1757
      %v2046 = vunpack.c.l.b16 %v1758
      %v2047 = vunpack.c.l.b16 %v1759
      %v2048 = vunpack.c.l.b16 %v1760
      %v2049 = vunpack.c.l.b16 %v1761
      %v2050 = vunpack.c.l.b16 %v1762
      %v2051 = vunpack.c.l.b16 %v1763
      %v2052 = vunpack.c.l.b16 %v1764
      %v2053 = vunpack.c.l.b16 %v1765
      %v2054 = vunpack.c.l.b16 %v1766
      %v2055 = vunpack.c.l.b16 %v1767
      %v2056 = vunpack.c.l.b16 %v1768
      %v2057 = vunpack.c.l.b16 %v1769
      %v2058 = vunpack.c.l.b16 %v1770
      %v2059 = vunpack.c.l.b16 %v1771
      %v2060 = vunpack.c.l.b16 %v1772
      %v2061 = vunpack.c.l.b16 %v1773
      %v2062 = vunpack.c.l.b16 %v1774
      %v2063 = vunpack.c.l.b16 %v1775
      %v2064 = vunpack.c.l.b16 %v1776
      %v2065 = vunpack.c.l.b16 %v1777
      %v2066 = vunpack.c.l.b16 %v1778
      %v2067 = vunpack.c.l.b16 %v1779
      %v2068 = vunpack.c.l.b16 %v1780
      %v2069 = vunpack.c.l.b16 %v1781
      %v2070 = vunpack.c.l.b16 %v1782
      %v2071 = vunpack.c.l.b16 %v1783
      %v2072 = vunpack.c.l.b16 %v1784
      %v2073 = vunpack.c.l.b16 %v1785
      %v2074 = vunpack.c.l.b16 %v1786
      %v2075 = vunpack.c.l.b16 %v1787
      %v2076 = vunpack.c.l.b16 %v1788
      %v2077 = vunpack.c.l.b16 %v1789
      %v2078 = vunpack.c.l.b16 %v1790
      %v2079 = vunpack.c.l.b16 %v1791
      %v2080 = vunpack.c.l.b16 %v1792
      %v2081 = vunpack.c.l.b16 %v1793
      %v2082 = vunpack.c.l.b16 %v1794
      %v2083 = vunpack.c.l.b16 %v1795
      %v2084 = vunpack.c.l.b16 %v1796
      %v2085 = vunpack.c.l.b16 %v1797
      %v2086 = vunpack.c.l.b16 %v1798
      %v2087 = vunpack.c.l.b16 %v1799
      %v2088 = vunpack.c.l.b16 %v1800
      %v2089 = vunpack.c.l.b16 %v1801
      %v2090 = vunpack.c.l.b16 %v1802
      %v2091 = vunpack.c.l.b16 %v1803
      %v2092 = vunpack.c.l.b16 %v1804
      %v2093 = vunpack.c.l.b16 %v1805
      %v2094 = vunpack.c.l.b16 %v1806
      %v2095 = vunpack.c.l.b16 %v1807
      %v2096 = vunpack.c.l.b16 %v1808
      %v2097 = vunpack.c.l.b16 %v1809
      %v2098 = vunpack.c.l.b16 %v1810
      %v2099 = vpack.c.b16 %v1956, %v1955
      %v2100 = vpack.c.b16 %v1958, %v1957
      %v2101 = vpack.c.b16 %v1960, %v1959
      %v2102 = vpack.c.b16 %v1962, %v1961
      %v2103 = vpack.c.b16 %v1964, %v1963
      %v2104 = vpack.c.b16 %v1966, %v1965
      %v2105 = vpack.c.b16 %v1968, %v1967
      %v2106 = vpack.c.b16 %v1970, %v1969
      %v2107 = vpack.c.b16 %v1972, %v1971
      %v2108 = vpack.c.b16 %v1974, %v1973
      %v2109 = vpack.c.b16 %v1976, %v1975
      %v2110 = vpack.c.b16 %v1978, %v1977
      %v2111 = vpack.c.b16 %v1980, %v1979
      %v2112 = vpack.c.b16 %v1982, %v1981
      %v2113 = vpack.c.b16 %v1984, %v1983
      %v2114 = vpack.c.b16 %v1986, %v1985
      %v2115 = vpack.c.b16 %v1988, %v1987
      %v2116 = vpack.c.b16 %v1990, %v1989
      %v2117 = vpack.c.b16 %v1992, %v1991
      %v2118 = vpack.c.b16 %v1994, %v1993
      %v2119 = vpack.c.b16 %v1996, %v1995
      %v2120 = vpack.c.b16 %v1998, %v1997
      %v2121 = vpack.c.b16 %v2000, %v1999
      %v2122 = vpack.c.b16 %v2002, %v2001
      %v2123 = vpack.c.b16 %v2004, %v2003
      %v2124 = vpack.c.b16 %v2006, %v2005
      %v2125 = vpack.c.b16 %v2008, %v2007
      %v2126 = vpack.c.b16 %v2010, %v2009
      %v2127 = vpack.c.b16 %v2012, %v2011
      %v2128 = vpack.c.b16 %v2014, %v2013
      %v2129 = vpack.c.b16 %v2016, %v2015
      %v2130 = vpack.c.b16 %v2018, %v2017
      %v2131 = vpack.c.b16 %v2020, %v2019
      %v2132 = vpack.c.b16 %v2022, %v2021
      %v2133 = vpack.c.b16 %v2024, %v2023
      %v2134 = vpack.c.b16 %v2026, %v2025
      %v2135 = vpack.c.b16 %v2028, %v2027
      %v2136 = vpack.c.b16 %v2030, %v2029
      %v2137 = vpack.c.b16 %v2032, %v2031
      %v2138 = vpack.c.b16 %v2034, %v2033
      %v2139 = vpack.c.b16 %v2036, %v2035
      %v2140 = vpack.c.b16 %v2038, %v2037
      %v2141 = vpack.c.b16 %v2040, %v2039
      %v2142 = vpack.c.b16 %v2042, %v2041
      %v2143 = vpack.c.b16 %v2044, %v2043
      %v2144 = vpack.c.b16 %v2046, %v2045
      %v2145 = vpack.c.b16 %v2048, %v2047
      %v2146 = vpack.c.b16 %v2050, %v2049
      %v2147 = vpack.c.b16 %v2052, %v2051
      %v2148 = vpack.c.b16 %v2054, %v2053
      %v2149 = vpack.c.b16 %v2056, %v2055
      %v2150 = vpack.c.b16 %v2058, %v2057
      %v2151 = vpack.c.b16 %v2060, %v2059
      %v2152 = vpack.c.b16 %v2062, %v2061
      %v2153 = vpack.c.b16 %v2064, %v2063
      %v2154 = vpack.c.b16 %v2066, %v2065
      %v2155 = vpack.c.b16 %v2068, %v2067
      %v2156 = vpack.c.b16 %v2070, %v2069
      %v2157 = vpack.c.b16 %v2072, %v2071
      %v2158 = vpack.c.b16 %v2074, %v2073
      %v2159 = vpack.c.b16 %v2076, %v2075
      %v2160 = vpack.c.b16 %v2078, %v2077
      %v2161 = vpack.c.b16 %v2080, %v2079
      %v2162 = vpack.c.b16 %v2082, %v2081
      %v2163 = vpack.c.b16 %v2084, %v2083
      %v2164 = vpack.c.b16 %v2086, %v2085
      %v2165 = vpack.c.b16 %v2088, %v2087
      %v2166 = vpack.c.b16 %v2090, %v2089
      %v2167 = vpack.c.b16 %v2092, %v2091
      %v2168 = vpack.c.b16 %v2094, %v2093
      %v2169 = vpack.c.b16 %v2096, %v2095
      %v2170 = vpack.c.b16 %v2098, %v2097
      %2243 = vmatprep.subr.bf16.mxu0 0
      %2244 = vmatpush1.bf16.msra.mxu0 %v2099
      %2245 = vmatprep.subr.bf16.mxu0 0
      %2246 = vmatpush1.bf16.msra.mxu0 %v2100
      %2247 = vmatprep.subr.bf16.mxu0 0
      %2248 = vmatpush1.bf16.msra.mxu0 %v2101
      %2249 = vmatprep.subr.bf16.mxu0 0
      %2250 = vmatpush1.bf16.msra.mxu0 %v2102
      %2251 = vmatprep.subr.bf16.mxu0 0
      %2252 = vmatpush1.bf16.msra.mxu0 %v2103
      %2253 = vmatprep.subr.bf16.mxu0 0
      %2254 = vmatpush1.bf16.msra.mxu0 %v2104
      %2255 = vmatprep.subr.bf16.mxu0 0
      %2256 = vmatpush1.bf16.msra.mxu0 %v2105
      %2257 = vmatprep.subr.bf16.mxu0 0
      %2258 = vmatpush1.bf16.msra.mxu0 %v2106
      %2259 = vmatprep.subr.bf16.mxu0 0
      %2260 = vmatpush1.bf16.msra.mxu0 %v2107
      %2261 = vmatprep.subr.bf16.mxu0 0
      %2262 = vmatpush1.bf16.msra.mxu0 %v2108
      %2263 = vmatprep.subr.bf16.mxu0 0
      %2264 = vmatpush1.bf16.msra.mxu0 %v2109
      %2265 = vmatprep.subr.bf16.mxu0 0
      %2266 = vmatpush1.bf16.msra.mxu0 %v2110
      %2267 = vmatprep.subr.bf16.mxu0 0
      %2268 = vmatpush1.bf16.msra.mxu0 %v2111
      %2269 = vmatprep.subr.bf16.mxu0 0
      %2270 = vmatpush1.bf16.msra.mxu0 %v2112
      %2271 = vmatprep.subr.bf16.mxu0 0
      %2272 = vmatpush1.bf16.msra.mxu0 %v2113
      %2273 = vmatprep.subr.bf16.mxu0 0
      %2274 = vmatpush1.bf16.msra.mxu0 %v2114
      %2275 = vmatprep.mubr.bf16.mxu0 %v1641
      %2276 = vmatmul.mubr.bf16.gmra.mrb[0].mxu0 %v1640
      %v2277 = vpop.f32.mrb[0].mxu0
      %v2278 = vadd.f32 0.0, %v2277
      %v2279 = vpop.f32.mrb[0].mxu0
      %v2280 = vpop.f32.mrb[0].mxu0
      %v2281 = vadd.f32 0.0, %v2280
      %v2282 = vpop.f32.mrb[0].mxu0
      %2283 = vmatprep.mubr.bf16.mxu0 %v1647
      %2284 = vmatmul.mubr.bf16.gmra.mrb[0].mxu0 %v1646
      %v2285 = vpop.f32.mrb[0].mxu0
      %v2286 = vadd.f32 0.0, %v2285
      %v2287 = vpop.f32.mrb[0].mxu0
      %v2288 = vpop.f32.mrb[0].mxu0
      %v2289 = vadd.f32 0.0, %v2288
      %v2290 = vpop.f32.mrb[0].mxu0
      %2291 = vmatprep.mubr.bf16.mxu0 %v1653
      %2292 = vmatmul.mubr.bf16.gmra.mrb[0].mxu0 %v1652
      %v2293 = vpop.f32.mrb[0].mxu0
      %v2294 = vadd.f32 0.0, %v2293
      %v2295 = vpop.f32.mrb[0].mxu0
      %v2296 = vpop.f32.mrb[0].mxu0
      %v2297 = vadd.f32 0.0, %v2296
      %v2298 = vpop.f32.mrb[0].mxu0
      %2299 = vmatprep.mubr.bf16.mxu0 %v1659
      %2300 = vmatmul.mubr.bf16.gmra.mrb[0].mxu0 %v1658
      %v2301 = vpop.f32.mrb[0].mxu0
      %v2302 = vadd.f32 0.0, %v2301
      %v2303 = vpop.f32.mrb[0].mxu0
      %v2304 = vpop.f32.mrb[0].mxu0
      %v2305 = vadd.f32 0.0, %v2304
      %v2306 = vpop.f32.mrb[0].mxu0
      %2307 = vdwg.mxu0
      %2308 = vmatprep.subr.bf16.mxu0 0
      %2309 = vmatpush1.bf16.msra.mxu0 %v2115
      %2310 = vmatprep.subr.bf16.mxu0 0
      %2311 = vmatpush1.bf16.msra.mxu0 %v2116
      %2312 = vmatprep.subr.bf16.mxu0 0
      %2313 = vmatpush1.bf16.msra.mxu0 %v2117
      %2314 = vmatprep.subr.bf16.mxu0 0
      %2315 = vmatpush1.bf16.msra.mxu0 %v2118
      %2316 = vmatprep.subr.bf16.mxu0 0
      %2317 = vmatpush1.bf16.msra.mxu0 %v2119
      %2318 = vmatprep.subr.bf16.mxu0 0
      %2319 = vmatpush1.bf16.msra.mxu0 %v2120
      %2320 = vmatprep.subr.bf16.mxu0 0
      %2321 = vmatpush1.bf16.msra.mxu0 %v2121
      %2322 = vmatprep.subr.bf16.mxu0 0
      %2323 = vmatpush1.bf16.msra.mxu0 %v2122
      %2324 = vmatprep.subr.bf16.mxu0 0
      %2325 = vmatpush1.bf16.msra.mxu0 %v2123
      %2326 = vmatprep.subr.bf16.mxu0 0
      %2327 = vmatpush1.bf16.msra.mxu0 %v2124
      %2328 = vmatprep.subr.bf16.mxu0 0
      %2329 = vmatpush1.bf16.msra.mxu0 %v2125
      %2330 = vmatprep.subr.bf16.mxu0 0
      %2331 = vmatpush1.bf16.msra.mxu0 %v2126
      %2332 = vmatprep.subr.bf16.mxu0 0
      %2333 = vmatpush1.bf16.msra.mxu0 %v2127
      %2334 = vmatprep.subr.bf16.mxu0 0
      %2335 = vmatpush1.bf16.msra.mxu0 %v2128
      %2336 = vmatprep.subr.bf16.mxu0 0
      %2337 = vmatpush1.bf16.msra.mxu0 %v2129
      %2338 = vmatprep.subr.bf16.mxu0 0
      %2339 = vmatpush1.bf16.msra.mxu0 %v2130
      %2340 = vmatprep.mubr.bf16.mxu0 %v1643
      %2341 = vmatmul.mubr.bf16.gmra.mrb[0].mxu0 %v1642
      %v2342 = vpop.f32.mrb[0].mxu0
      %v2343 = vadd.f32 %v2278, %v2342
      %v2344 = vpop.f32.mrb[0].mxu0
      %v2345 = vpop.f32.mrb[0].mxu0
      %v2346 = vadd.f32 %v2281, %v2345
      %v2347 = vpop.f32.mrb[0].mxu0
      %2348 = vmatprep.mubr.bf16.mxu0 %v1649
      %2349 = vmatmul.mubr.bf16.gmra.mrb[0].mxu0 %v1648
      %v2350 = vpop.f32.mrb[0].mxu0
      %v2351 = vadd.f32 %v2286, %v2350
      %v2352 = vpop.f32.mrb[0].mxu0
      %v2353 = vpop.f32.mrb[0].mxu0
      %v2354 = vadd.f32 %v2289, %v2353
      %v2355 = vpop.f32.mrb[0].mxu0
      %2356 = vmatprep.mubr.bf16.mxu0 %v1655
      %2357 = vmatmul.mubr.bf16.gmra.mrb[0].mxu0 %v1654
      %v2358 = vpop.f32.mrb[0].mxu0
      %v2359 = vadd.f32 %v2294, %v2358
      %v2360 = vpop.f32.mrb[0].mxu0
      %v2361 = vpop.f32.mrb[0].mxu0
      %v2362 = vadd.f32 %v2297, %v2361
      %v2363 = vpop.f32.mrb[0].mxu0
      %2364 = vmatprep.mubr.bf16.mxu0 %v1661
      %2365 = vmatmul.mubr.bf16.gmra.mrb[0].mxu0 %v1660
      %v2366 = vpop.f32.mrb[0].mxu0
      %v2367 = vadd.f32 %v2302, %v2366
      %v2368 = vpop.f32.mrb[0].mxu0
      %v2369 = vpop.f32.mrb[0].mxu0
      %v2370 = vadd.f32 %v2305, %v2369
      %v2371 = vpop.f32.mrb[0].mxu0
      %2372 = vdwg.mxu0
      %2373 = vmatprep.subr.bf16.mxu0 0
      %2374 = vmatpush1.bf16.msra.mxu0 %v2131
      %2375 = vmatprep.subr.bf16.mxu0 0
      %2376 = vmatpush1.bf16.msra.mxu0 %v2132
      %2377 = vmatprep.subr.bf16.mxu0 0
      %2378 = vmatpush1.bf16.msra.mxu0 %v2133
      %2379 = vmatprep.subr.bf16.mxu0 0
      %2380 = vmatpush1.bf16.msra.mxu0 %v2134
      %2381 = vmatprep.subr.bf16.mxu0 0
      %2382 = vmatpush1.bf16.msra.mxu0 %v2135
      %2383 = vmatprep.subr.bf16.mxu0 0
      %2384 = vmatpush1.bf16.msra.mxu0 %v2136
      %2385 = vmatprep.subr.bf16.mxu0 0
      %2386 = vmatpush1.bf16.msra.mxu0 %v2137
      %2387 = vmatprep.subr.bf16.mxu0 0
      %2388 = vmatpush1.bf16.msra.mxu0 %v2138
      %2389 = vmatprep.subr.bf16.mxu0 0
      %2390 = vmatpush1.bf16.msra.mxu0 %v2139
      %2391 = vmatprep.subr.bf16.mxu0 0
      %2392 = vmatpush1.bf16.msra.mxu0 %v2140
      %2393 = vmatprep.subr.bf16.mxu0 0
      %2394 = vmatpush1.bf16.msra.mxu0 %v2141
      %2395 = vmatprep.subr.bf16.mxu0 0
      %2396 = vmatpush1.bf16.msra.mxu0 %v2142
      %2397 = vmatprep.subr.bf16.mxu0 0
      %2398 = vmatpush1.bf16.msra.mxu0 %v2143
      %2399 = vmatprep.subr.bf16.mxu0 0
      %2400 = vmatpush1.bf16.msra.mxu0 %v2144
      %2401 = vmatprep.subr.bf16.mxu0 0
      %2402 = vmatpush1.bf16.msra.mxu0 %v2145
      %2403 = vmatprep.subr.bf16.mxu0 0
      %2404 = vmatpush1.bf16.msra.mxu0 %v2146
      %2405 = vmatprep.mubr.bf16.mxu0 %v1645
      %2406 = vmatmul.mubr.bf16.gmra.mrb[0].mxu0 %v1644
      %v2407 = vpop.f32.mrb[0].mxu0
      %v2408 = vadd.f32 %v2343, %v2407
      %v2409 = vpop.f32.mrb[0].mxu0
      %v2410 = vpop.f32.mrb[0].mxu0
      %v2411 = vadd.f32 %v2346, %v2410
      %v2412 = vpop.f32.mrb[0].mxu0
      %2413 = vmatprep.mubr.bf16.mxu0 %v1651
      %2414 = vmatmul.mubr.bf16.gmra.mrb[0].mxu0 %v1650
      %v2415 = vpop.f32.mrb[0].mxu0
      %v2416 = vadd.f32 %v2351, %v2415
      %v2417 = vpop.f32.mrb[0].mxu0
      %v2418 = vpop.f32.mrb[0].mxu0
      %v2419 = vadd.f32 %v2354, %v2418
      %v2420 = vpop.f32.mrb[0].mxu0
      %2421 = vmatprep.mubr.bf16.mxu0 %v1657
      %2422 = vmatmul.mubr.bf16.gmra.mrb[0].mxu0 %v1656
      %v2423 = vpop.f32.mrb[0].mxu0
      %v2424 = vadd.f32 %v2359, %v2423
      %v2425 = vpop.f32.mrb[0].mxu0
      %v2426 = vpop.f32.mrb[0].mxu0
      %v2427 = vadd.f32 %v2362, %v2426
      %v2428 = vpop.f32.mrb[0].mxu0
      %2429 = vmatprep.mubr.bf16.mxu0 %v1663
      %2430 = vmatmul.mubr.bf16.gmra.mrb[0].mxu0 %v1662
      %v2431 = vpop.f32.mrb[0].mxu0
      %v2432 = vadd.f32 %v2367, %v2431
      %v2433 = vpop.f32.mrb[0].mxu0
      %v2434 = vpop.f32.mrb[0].mxu0
      %v2435 = vadd.f32 %v2370, %v2434
      %v2436 = vpop.f32.mrb[0].mxu0
      %2437 = vdwg.mxu0
      %2438 = vmatprep.subr.bf16.mxu0 0
      %2439 = vmatpush1.bf16.msra.mxu0 %v2147
      %2440 = vmatprep.subr.bf16.mxu0 0
      %2441 = vmatpush1.bf16.msra.mxu0 %v2148
      %2442 = vmatprep.subr.bf16.mxu0 0
      %2443 = vmatpush1.bf16.msra.mxu0 %v2149
      %2444 = vmatprep.subr.bf16.mxu0 0
      %2445 = vmatpush1.bf16.msra.mxu0 %v2150
      %2446 = vmatprep.subr.bf16.mxu0 0
      %2447 = vmatpush1.bf16.msra.mxu0 %v2151
      %2448 = vmatprep.subr.bf16.mxu0 0
      %2449 = vmatpush1.bf16.msra.mxu0 %v2152
      %2450 = vmatprep.subr.bf16.mxu0 0
      %2451 = vmatpush1.bf16.msra.mxu0 %v2153
      %2452 = vmatprep.subr.bf16.mxu0 0
      %2453 = vmatpush1.bf16.msra.mxu0 %v2154
      %2454 = vmatprep.subr.bf16.mxu0 0
      %2455 = vmatpush1.bf16.msra.mxu0 %v2155
      %2456 = vmatprep.subr.bf16.mxu0 0
      %2457 = vmatpush1.bf16.msra.mxu0 %v2156
      %2458 = vmatprep.subr.bf16.mxu0 0
      %2459 = vmatpush1.bf16.msra.mxu0 %v2157
      %2460 = vmatprep.subr.bf16.mxu0 0
      %2461 = vmatpush1.bf16.msra.mxu0 %v2158
      %2462 = vmatprep.subr.bf16.mxu0 0
      %2463 = vmatpush1.bf16.msra.mxu0 %v2159
      %2464 = vmatprep.subr.bf16.mxu0 0
      %2465 = vmatpush1.bf16.msra.mxu0 %v2160
      %2466 = vmatprep.subr.bf16.mxu0 0
      %2467 = vmatpush1.bf16.msra.mxu0 %v2161
      %2468 = vmatprep.subr.bf16.mxu0 0
      %2469 = vmatpush1.bf16.msra.mxu0 %v2162
      %2470 = vmatprep.mubr.bf16.mxu0 %v1647
      %2471 = vmatmul.mubr.bf16.gmra.mrb[0].mxu0 %v1646
      %v2472 = vpop.f32.mrb[0].mxu0
      %v2473 = vadd.f32 %v2408, %v2472
      %v2474 = vpop.f32.mrb[0].mxu0
      %v2475 = vpop.f32.mrb[0].mxu0
      %v2476 = vadd.f32 %v2411, %v2475
      %v2477 = vpop.f32.mrb[0].mxu0
      %2478 = vmatprep.mubr.bf16.mxu0 %v1653
      %2479 = vmatmul.mubr.bf16.gmra.mrb[0].mxu0 %v1652
      %v2480 = vpop.f32.mrb[0].mxu0
      %v2481 = vadd.f32 %v2416, %v2480
      %v2482 = vpop.f32.mrb[0].mxu0
      %v2483 = vpop.f32.mrb[0].mxu0
      %v2484 = vadd.f32 %v2419, %v2483
      %v2485 = vpop.f32.mrb[0].mxu0
      %2486 = vmatprep.mubr.bf16.mxu0 %v1659
      %2487 = vmatmul.mubr.bf16.gmra.mrb[0].mxu0 %v1658
      %v2488 = vpop.f32.mrb[0].mxu0
      %v2489 = vadd.f32 %v2424, %v2488
      %v2490 = vpop.f32.mrb[0].mxu0
      %v2491 = vpop.f32.mrb[0].mxu0
      %v2492 = vadd.f32 %v2427, %v2491
      %v2493 = vpop.f32.mrb[0].mxu0
      %2494 = vmatprep.mubr.bf16.mxu0 %v1665
      %2495 = vmatmul.mubr.bf16.gmra.mrb[0].mxu0 %v1664
      %v2496 = vpop.f32.mrb[0].mxu0
      %v2497 = vadd.f32 %v2432, %v2496
      %v2498 = vpop.f32.mrb[0].mxu0
      %v2499 = vpop.f32.mrb[0].mxu0
      %v2500 = vadd.f32 %v2435, %v2499
      %v2501 = vpop.f32.mrb[0].mxu0
      %2502 = vdwg.mxu0
      %2503 = vmatprep.subr.bf16.mxu0 0
      %2504 = vmatpush1.bf16.msra.mxu0 %v2163
      %2505 = vmatprep.subr.bf16.mxu0 0
      %2506 = vmatpush1.bf16.msra.mxu0 %v2164
      %2507 = vmatprep.subr.bf16.mxu0 0
      %2508 = vmatpush1.bf16.msra.mxu0 %v2165
      %2509 = vmatprep.subr.bf16.mxu0 0
      %2510 = vmatpush1.bf16.msra.mxu0 %v2166
      %2511 = vmatprep.subr.bf16.mxu0 0
      %2512 = vmatpush1.bf16.msra.mxu0 %v2167
      %2513 = vmatprep.subr.bf16.mxu0 0
      %2514 = vmatpush1.bf16.msra.mxu0 %v2168
      %2515 = vmatprep.subr.bf16.mxu0 0
      %2516 = vmatpush1.bf16.msra.mxu0 %v2169
      %2517 = vmatprep.subr.bf16.mxu0 0
      %2518 = vmatpush1.bf16.msra.mxu0 %v2170
      %2519 = vmatprep.subr.bf16.mxu0 0
      %2520 = vmatpush1.bf16.msra.mxu0 0
      %2521 = vmatprep.subr.bf16.mxu0 0
      %2522 = vmatpush1.bf16.msra.mxu0 0
      %2523 = vmatprep.subr.bf16.mxu0 0
      %2524 = vmatpush1.bf16.msra.mxu0 0
      %2525 = vmatprep.subr.bf16.mxu0 0
      %2526 = vmatpush1.bf16.msra.mxu0 0
      %2527 = vmatprep.subr.bf16.mxu0 0
      %2528 = vmatpush1.bf16.msra.mxu0 0
      %2529 = vmatprep.subr.bf16.mxu0 0
      %2530 = vmatpush1.bf16.msra.mxu0 0
      %2531 = vmatprep.subr.bf16.mxu0 0
      %2532 = vmatpush1.bf16.msra.mxu0 0
      %2533 = vmatprep.subr.bf16.mxu0 0
      %2534 = vmatpush1.bf16.msra.mxu0 0
      %2535 = vmatprep.mubr.bf16.mxu0 0
      %2536 = vmatmul.mubr.bf16.gmra.mrb[0].mxu0 %v1648
      %v2537 = vpop.f32.mrb[0].mxu0
      %v2538 = vadd.f32 %v2473, %v2537
      %v2539 = vpop.f32.mrb[0].mxu0
      %v2540 = vpop.f32.mrb[0].mxu0
      %v2541 = vadd.f32 %v2476, %v2540
      %v2542 = vpop.f32.mrb[0].mxu0
      %2543 = vmatprep.mubr.bf16.mxu0 0
      %2544 = vmatmul.mubr.bf16.gmra.mrb[0].mxu0 %v1654
      %v2545 = vpop.f32.mrb[0].mxu0
      %v2546 = vadd.f32 %v2481, %v2545
      %v2547 = vpop.f32.mrb[0].mxu0
      %v2548 = vpop.f32.mrb[0].mxu0
      %v2549 = vadd.f32 %v2484, %v2548
      %v2550 = vpop.f32.mrb[0].mxu0
      %2551 = vmatprep.mubr.bf16.mxu0 0
      %2552 = vmatmul.mubr.bf16.gmra.mrb[0].mxu0 %v1660
      %v2553 = vpop.f32.mrb[0].mxu0
      %v2554 = vadd.f32 %v2489, %v2553
      %v2555 = vpop.f32.mrb[0].mxu0
      %v2556 = vpop.f32.mrb[0].mxu0
      %v2557 = vadd.f32 %v2492, %v2556
      %v2558 = vpop.f32.mrb[0].mxu0
      %2559 = vmatprep.mubr.bf16.mxu0 0
      %2560 = vmatmul.mubr.bf16.gmra.mrb[0].mxu0 %v1666
      %v2561 = vpop.f32.mrb[0].mxu0
      %v2562 = vadd.f32 %v2497, %v2561
      %v2563 = vpop.f32.mrb[0].mxu0
      %v2564 = vpop.f32.mrb[0].mxu0
      %v2565 = vadd.f32 %v2500, %v2564
      %v2566 = vpop.f32.mrb[0].mxu0
      %2567 = vdwg.mxu0
      %v2568 = vld [vmem:[%s5] sm:$0x1]
      %v2570 = vlaneseq
      %v2571 = vshrl.u32 %v2570, 7
      %v2572 = vsub.s32 0, %v2571
      %v2573 = vrot.slane %v2568, %v2572
      %v2575 = vmul.f32 %v2538, %v2573
      %v2576 = vmul.f32 %v2541, %v2573
      %v2577 = vmul.f32 %v2546, %v2573
      %v2578 = vmul.f32 %v2549, %v2573
      %v2579 = vmul.f32 %v2554, %v2573
      %v2580 = vmul.f32 %v2557, %v2573
      %v2581 = vmul.f32 %v2562, %v2573
      %v2582 = vmul.f32 %v2565, %v2573
      %v2583 = vld [vmem:[%s6] sm:$0x1]
      %v2585 = vlaneseq
      %v2586 = vshrl.u32 %v2585, 7
      %v2587 = vsub.s32 0, %v2586
      %v2588 = vrot.slane %v2583, %v2587
      %v2590 = vadd.f32 %v2575, %v2588
      %v2591 = vadd.f32 %v2576, %v2588
      %v2592 = vadd.f32 %v2577, %v2588
      %v2593 = vadd.f32 %v2578, %v2588
      %v2594 = vadd.f32 %v2579, %v2588
      %v2595 = vadd.f32 %v2580, %v2588
      %v2596 = vadd.f32 %v2581, %v2588
      %v2597 = vadd.f32 %v2582, %v2588
      %v2598 = vld [vmem:[%s7] sm:$0xf]
      %v2599 = vld [vmem:[%s7 + $0x4] sm:$0xf]
      %v2600 = vld [vmem:[%s7 + $0x8] sm:$0xf]
      %v2601 = vld [vmem:[%s7 + $0xc] sm:$0xf]
      %v2602 = vld [vmem:[%s7 + $0x10] sm:$0xf]
      %v2603 = vld [vmem:[%s7 + $0x14] sm:$0xf]
      %v2604 = vld [vmem:[%s7 + $0x18] sm:$0xf]
      %v2605 = vld [vmem:[%s7 + $0x1c] sm:$0xf]
      %v2606 = vld [vmem:[%s7 + $0x20] sm:$0xf]
      %v2607 = vld [vmem:[%s7 + $0x24] sm:$0xf]
      %v2608 = vld [vmem:[%s7 + $0x28] sm:$0xf]
      %v2609 = vld [vmem:[%s7 + $0x2c] sm:$0xf]
      %v2610 = vld [vmem:[%s7 + $0x30] sm:$0xf]
      %v2611 = vld [vmem:[%s7 + $0x34] sm:$0xf]
      %v2612 = vld [vmem:[%s7 + $0x38] sm:$0xf]
      %v2613 = vld [vmem:[%s7 + $0x3c] sm:$0xf]
      %v2630 = vunpack.c.l.b16 %v2598
      %v2631 = vunpack.c.l.b16 %v2599
      %v2632 = vunpack.c.l.b16 %v2600
      %v2633 = vunpack.c.l.b16 %v2601
      %v2634 = vunpack.c.l.b16 %v2602
      %v2635 = vunpack.c.l.b16 %v2603
      %v2636 = vunpack.c.l.b16 %v2604
      %v2637 = vunpack.c.l.b16 %v2605
      %v2638 = vunpack.c.l.b16 %v2606
      %v2639 = vunpack.c.l.b16 %v2607
      %v2640 = vunpack.c.l.b16 %v2608
      %v2641 = vunpack.c.l.b16 %v2609
      %v2642 = vunpack.c.l.b16 %v2610
      %v2643 = vunpack.c.l.b16 %v2611
      %v2644 = vunpack.c.l.b16 %v2612
      %v2645 = vunpack.c.l.b16 %v2613
      %v2646 = vpack.c.b16 %v2631, %v2630
      %v2647 = vpack.c.b16 %v2633, %v2632
      %v2648 = vpack.c.b16 %v2635, %v2634
      %v2649 = vpack.c.b16 %v2637, %v2636
      %v2650 = vpack.c.b16 %v2639, %v2638
      %v2651 = vpack.c.b16 %v2641, %v2640
      %v2652 = vpack.c.b16 %v2643, %v2642
      %v2653 = vpack.c.b16 %v2645, %v2644
      %2662 = vmatprep.subr.bf16.mxu0 0
      %2663 = vmatpush1.bf16.msra.mxu0 %v2646
      %2664 = vmatprep.subr.bf16.mxu0 0
      %2665 = vmatpush1.bf16.msra.mxu0 %v2647
      %2666 = vmatprep.subr.bf16.mxu0 0
      %2667 = vmatpush1.bf16.msra.mxu0 %v2648
      %2668 = vmatprep.subr.bf16.mxu0 0
      %2669 = vmatpush1.bf16.msra.mxu0 %v2649
      %2670 = vmatprep.subr.bf16.mxu0 0
      %2671 = vmatpush1.bf16.msra.mxu0 %v2650
      %2672 = vmatprep.subr.bf16.mxu0 0
      %2673 = vmatpush1.bf16.msra.mxu0 %v2651
      %2674 = vmatprep.subr.bf16.mxu0 0
      %2675 = vmatpush1.bf16.msra.mxu0 %v2652
      %2676 = vmatprep.subr.bf16.mxu0 0
      %2677 = vmatpush1.bf16.msra.mxu0 %v2653
      %2678 = vmatprep.subr.bf16.mxu0 0
      %2679 = vmatpush1.bf16.msra.mxu0 0
      %2680 = vmatprep.subr.bf16.mxu0 0
      %2681 = vmatpush1.bf16.msra.mxu0 0
      %2682 = vmatprep.subr.bf16.mxu0 0
      %2683 = vmatpush1.bf16.msra.mxu0 0
      %2684 = vmatprep.subr.bf16.mxu0 0
      %2685 = vmatpush1.bf16.msra.mxu0 0
      %2686 = vmatprep.subr.bf16.mxu0 0
      %2687 = vmatpush1.bf16.msra.mxu0 0
      %2688 = vmatprep.subr.bf16.mxu0 0
      %2689 = vmatpush1.bf16.msra.mxu0 0
      %2690 = vmatprep.subr.bf16.mxu0 0
      %2691 = vmatpush1.bf16.msra.mxu0 0
      %2692 = vmatprep.subr.bf16.mxu0 0
      %2693 = vmatpush1.bf16.msra.mxu0 0
      %2694 = vmatprep.mubr.bf16.mxu0 0
      %2695 = vmatmul.mubr.bf16.gmra.mrb[0].mxu0 %v519
      %v2696 = vpop.f32.mrb[0].mxu0
      %v2697 = vadd.f32 0.0, %v2696
      %v2698 = vpop.f32.mrb[0].mxu0
      %v2699 = vpop.f32.mrb[0].mxu0
      %v2700 = vadd.f32 0.0, %v2699
      %v2701 = vpop.f32.mrb[0].mxu0
      %2702 = vmatprep.mubr.bf16.mxu0 0
      %2703 = vmatmul.mubr.bf16.gmra.mrb[0].mxu0 %v528
      %v2704 = vpop.f32.mrb[0].mxu0
      %v2705 = vadd.f32 0.0, %v2704
      %v2706 = vpop.f32.mrb[0].mxu0
      %v2707 = vpop.f32.mrb[0].mxu0
      %v2708 = vadd.f32 0.0, %v2707
      %v2709 = vpop.f32.mrb[0].mxu0
      %2710 = vmatprep.mubr.bf16.mxu0 0
      %2711 = vmatmul.mubr.bf16.gmra.mrb[0].mxu0 %v537
      %v2712 = vpop.f32.mrb[0].mxu0
      %v2713 = vadd.f32 0.0, %v2712
      %v2714 = vpop.f32.mrb[0].mxu0
      %v2715 = vpop.f32.mrb[0].mxu0
      %v2716 = vadd.f32 0.0, %v2715
      %v2717 = vpop.f32.mrb[0].mxu0
      %2718 = vmatprep.mubr.bf16.mxu0 0
      %2719 = vmatmul.mubr.bf16.gmra.mrb[0].mxu0 %v546
      %v2720 = vpop.f32.mrb[0].mxu0
      %v2721 = vadd.f32 0.0, %v2720
      %v2722 = vpop.f32.mrb[0].mxu0
      %v2723 = vpop.f32.mrb[0].mxu0
      %v2724 = vadd.f32 0.0, %v2723
      %v2725 = vpop.f32.mrb[0].mxu0
      %2726 = vdwg.mxu0
      %v2727 = vld [vmem:[%s8] sm:$0x1]
      %v2729 = vlaneseq
      %v2730 = vshrl.u32 %v2729, 7
      %v2731 = vsub.s32 0, %v2730
      %v2732 = vrot.slane %v2727, %v2731
      %v2734 = vmul.f32 %v2697, %v2732
      %v2735 = vmul.f32 %v2700, %v2732
      %v2736 = vmul.f32 %v2705, %v2732
      %v2737 = vmul.f32 %v2708, %v2732
      %v2738 = vmul.f32 %v2713, %v2732
      %v2739 = vmul.f32 %v2716, %v2732
      %v2740 = vmul.f32 %v2721, %v2732
      %v2741 = vmul.f32 %v2724, %v2732
      %v2742 = vld [vmem:[%s9] sm:$0x1]
      %v2744 = vlaneseq
      %v2745 = vshrl.u32 %v2744, 7
      %v2746 = vsub.s32 0, %v2745
      %v2747 = vrot.slane %v2742, %v2746
      %v2749 = vadd.f32 %v2734, %v2747
      %v2750 = vadd.f32 %v2735, %v2747
      %v2751 = vadd.f32 %v2736, %v2747
      %v2752 = vadd.f32 %v2737, %v2747
      %v2753 = vadd.f32 %v2738, %v2747
      %v2754 = vadd.f32 %v2739, %v2747
      %v2755 = vadd.f32 %v2740, %v2747
      %v2756 = vadd.f32 %v2741, %v2747
      %v2757 = vadd.f32 %v2590, %v2749
      %v2758 = vadd.f32 %v2591, %v2750
      %v2759 = vadd.f32 %v2592, %v2751
      %v2760 = vadd.f32 %v2593, %v2752
      %v2761 = vadd.f32 %v2594, %v2753
      %v2762 = vadd.f32 %v2595, %v2754
      %v2763 = vadd.f32 %v2596, %v2755
      %v2764 = vadd.f32 %v2597, %v2756
      %v2765 = vmax.f32 %v2757, 0.0
      %v2766 = vmax.f32 %v2758, 0.0
      %v2767 = vmax.f32 %v2759, 0.0
      %v2768 = vmax.f32 %v2760, 0.0
      %v2769 = vmax.f32 %v2761, 0.0
      %v2770 = vmax.f32 %v2762, 0.0
      %v2771 = vmax.f32 %v2763, 0.0
      %v2772 = vmax.f32 %v2764, 0.0
      %2773 = vst [vmem:[%s359] sm:$0xff] %v2765
      %2774 = vst [vmem:[%s359 + $0x8] sm:$0xff] %v2766
      %2775 = vst [vmem:[%s359 + $0x10] sm:$0xff] %v2767
      %2776 = vst [vmem:[%s359 + $0x18] sm:$0xff] %v2768
      %2777 = vst [vmem:[%s359 + $0x20] sm:$0xff] %v2769
      %2778 = vst [vmem:[%s359 + $0x28] sm:$0xff] %v2770
      %2779 = vst [vmem:[%s359 + $0x30] sm:$0xff] %v2771
      %2780 = vst [vmem:[%s359 + $0x38] sm:$0xff] %v2772
      %p2781 = scmp.lt.s32.totalorder %s21, 1
      %s2782 = scalar_select %p2781, %s21, 1
      %s2783 = smul.addr %s2782, 8
      %s2784 = smul.addr %s2783, 8
      %s2785 = scalar_lea.vmem %s10, %s2784
      // Predicated region
      $region61: #{res_stage_basetransform_forward.2} parent=59 // pred_check
        %p2786 = pneg %p254
      $region62: #{res_stage_basetransform_forward.2} parent=59 // pred_check_branch
        %2788 = sbr.rel (%p2786) target = $region64
      $region63: #{res_stage_basetransform_forward.2} parent=59 // pred_region
        _
      $region64: #{res_stage_basetransform_forward.2} parent=59 // pred_fallthru
        _
    $region60: #{res_stage_basetransform_forward.2} parent=5 // pred_fallthru
      _
    %p2789 = scmp.le.s32.totalorder 2, %s16
    // Predicated region
    $region65: #{res_stage_basetransform_forward.2} parent=5 // pred_check
      %p2790 = pneg %p2789
    $region66: #{res_stage_basetransform_forward.2} parent=5 // pred_check_branch
      %2792 = sbr.rel (%p2790) target = $region68
    $region67: #{res_stage_basetransform_forward.2} parent=5 // pred_region
      %s2793 = ssub.s32 %s16, 2
      // Predicated region
      $region69: #{res_stage_basetransform_forward.2} parent=67 // pred_check
        %p2794 = pneg %p260
      $region70: #{res_stage_basetransform_forward.2} parent=67 // pred_check_branch
        %2796 = sbr.rel (%p2794) target = $region72
      $region71: #{res_stage_basetransform_forward.2} parent=67 // pred_region
        %p2797 = scmp.lt.s32.totalorder %s22, 1
        %s2798 = scalar_select %p2797, %s22, 1
        %s2799 = smul.addr %s2798, 8
        %s2800 = smul.addr %s2799, 8
        %s2801 = scalar_lea.vmem %s10, %s2800
      $region72: #{res_stage_basetransform_forward.2} parent=67 // pred_fallthru
        _
    $region68: #{res_stage_basetransform_forward.2} parent=5 // pred_fallthru
      _
  $region6: #{res_stage_basetransform_forward.2} parent=0 // loop_footer
    %s20 = sadd.s32 1, %s16
  $region7: #{res_stage_basetransform_forward.2} parent=0 // loop_footer_branch
    %15 = sbr.rel target = $region3
  $region8: #{res_stage_basetransform_forward.2} parent=0 // loop_exit
    _

</llo_original>
